<compile_context>
chip_gen: v7x
topology: tpu7x:2x2x1
jax: 0.10.0
libtpu: 0.0.40
codegen_flags: <defaults>
</compile_context>

<pallas_src>
import functools

import jax
import jax.numpy as jnp
from jax import lax
from jax.experimental import pallas as pl
from jax.experimental.pallas import tpu as pltpu

LN_EPS = 1e-5
BN_EPS = 1e-5
_BF16 = jnp.bfloat16


# ------------- shared math helpers (used by kernel AND pure-JAX reference) ---
def _mm(a, b):
    # bf16 inputs, f32 accumulation (MXU-native rate).
    return jnp.dot(a.astype(_BF16), b.astype(_BF16),
                   preferred_element_type=jnp.float32)


def _mm_nt(a, b):
    # a @ b.T without materializing the transpose ('nt' matmul form).
    return lax.dot_general(a.astype(_BF16), b.astype(_BF16),
                           (((1,), (1,)), ((), ())),
                           preferred_element_type=jnp.float32)


def _erf(x):
    # Abramowitz & Stegun 7.1.26 rational approximation (|err| < 1.5e-7),
    # built only from exp/mul/add so it lowers cleanly in Mosaic.
    a1, a2, a3, a4, a5 = (0.254829592, -0.284496736, 1.421413741,
                          -1.453152027, 1.061405429)
    p = 0.3275911
    s = jnp.where(x >= 0, 1.0, -1.0)
    ax = jnp.abs(x)
    t = 1.0 / (1.0 + p * ax)
    poly = ((((a5 * t + a4) * t + a3) * t + a2) * t + a1) * t
    return s * (1.0 - poly * jnp.exp(-ax * ax))


def _gelu(x):
    return 0.5 * x * (1.0 + _erf(x * 0.7071067811865476))


def _sigmoid(x):
    return 1.0 / (1.0 + jnp.exp(-x))


def _layernorm(x, ln):              # x: (N, D); ln: (2, D) = [gamma, beta]
    mu = jnp.mean(x, axis=-1, keepdims=True)
    var = jnp.mean(jnp.square(x - mu), axis=-1, keepdims=True)
    return (x - mu) * lax.rsqrt(var + LN_EPS) * ln[0:1] + ln[1:2]


def _dwconv3(x, w, b, masks, roll_mode):
    # Depthwise conv, k=3, pad=1 over the sequence (sublane) axis.
    # masks = (keep_prev, keep_next) f32 edge masks, precomputed on host.
    n = x.shape[0]
    if roll_mode in ("jnp", "reverse"):
        prev_s, next_s = (1, n - 1) if roll_mode == "jnp" else (n - 1, 1)
        x_prev = pltpu.roll(x, prev_s, 0) * masks[0]
        x_next = pltpu.roll(x, next_s, 0) * masks[1]
    else:                           # fallback: shifted copies via concatenate
        z = jnp.zeros((1, x.shape[-1]), x.dtype)
        x_prev = jnp.concatenate([z, x[:-1, :]], axis=0)
        x_next = jnp.concatenate([x[1:, :], z], axis=0)
    return x_prev * w[0:1] + x * w[1:2] + x_next * w[2:3] + b


# ------------- per-layer bodies (run inside the kernel) ----------------------
def _attn_body(x, ln, se1w, se1b, se2w, se2b, qkvw, outw, outb, ov_sc,
               *, heads, dim_head):
    # PreNorm(GlobalAttention) + residual; x: (N, D).
    # scale is already folded into the q columns of qkvw.
    xn = _layernorm(x, ln)
    xn16 = xn.astype(_BF16)                            # cast once, reuse
    h = _gelu(_mm(xn16, se1w) + se1b)
    gate = _sigmoid(_mm(h, se2w) + se2b)
    xs16 = (xn * gate).astype(_BF16)                   # x = x * se(x)
    inner = heads * dim_head
    qkv = _mm(xs16, qkvw)                              # (N, 3*inner)
    for hh in range(heads):                            # static unroll
        q = qkv[:, hh * dim_head:(hh + 1) * dim_head]
        k = qkv[:, inner + hh * dim_head: inner + (hh + 1) * dim_head]
        v = qkv[:, 2 * inner + hh * dim_head: 2 * inner + (hh + 1) * dim_head]
        s = _mm_nt(q, k)                               # (N, N)
        s = s - jnp.max(s, axis=-1, keepdims=True)
        e = jnp.exp(s)
        p = e * pl.reciprocal(jnp.sum(e, axis=-1, keepdims=True), approx=True)
        ov_sc[:, hh * dim_head:(hh + 1) * dim_head] = _mm(p, v)
    # ONE out-projection matmul with K = inner (well-fed MXU), then residual.
    return _mm(ov_sc[...], outw) + outb + x


def _local_body(x, ln, w1, b1, dww, dwb, w3, b3, masks, *, roll_mode):
    # PreNorm(LocalConvModule) + residual; BN already folded into dww/dwb.
    d = x.shape[-1]
    xn = _layernorm(x, ln)
    h = _mm(xn, w1) + b1                               # 1x1 conv -> (N, 2D)
    h = h[:, :d] * _sigmoid(h[:, d:])                  # GLU over channels
    h = _dwconv3(h, dww, dwb, masks, roll_mode)        # depthwise k=3 (+BN)
    h = h * _sigmoid(h)                                # Swish
    return _mm(h, w3) + b3 + x                         # 1x1 conv + residual


def _ff_body(x, ln, w1, b1, aff1, dww, dwb, aff2, w2, b2, aff3, masks,
             *, roll_mode):
    # PreNorm(GlobalLocal) + residual; eval-BNs precomputed to (scale, shift).
    xn = _layernorm(x, ln)
    h = _gelu(_mm(xn, w1) + b1)
    h = h * aff1[0:1] + aff1[1:2]                      # net1 BN (affine)
    k = _gelu(_dwconv3(h, dww, dwb, masks, roll_mode))
    k = k * aff2[0:1] + aff2[1:2]                      # kernels BN (affine)
    h = h + k
    y = _mm(h, w2) + b2
    y = y * aff3[0:1] + aff3[1:2]                      # net2 BN (affine)
    return y + x


# ------------- streamed Transformer kernel (grid = (B, depth)) ---------------
LAYER_KEYS = (
    "attn_ln", "se1_w", "se1_b", "se2_w", "se2_b", "qkv_w", "out_w", "out_b",
    "lm_ln", "lm_w1", "lm_b1", "lm_dw_w", "lm_dw_b", "lm_w3", "lm_b3",
    "ff_ln", "ff_w1", "ff_b1", "ff_aff1", "ff_dw_w", "ff_dw_b", "ff_aff2",
    "ff_w2", "ff_b2", "ff_aff3",
)


def _transformer_kernel(x_ref, dmask_ref, hmask_ref, *refs,
                        heads, dim_head, roll_mode):
    nw = len(LAYER_KEYS)
    assert len(refs) == nw + 4
    w = dict(zip(LAYER_KEYS, refs[:nw]))               # one layer's weights
    red_ref = refs[nw]
    out_ref = refs[nw + 1]
    x_sc = refs[nw + 2]                                # (N, D)  f32 carry
    ov_sc = refs[nw + 3]                               # (N, inner) f32 scratch

    l = pl.program_id(1)
    depth = pl.num_programs(1)

    @pl.when(l == 0)
    def _():                                           # load activation once
        x_sc[...] = x_ref[0]

    x = x_sc[...]
    dmasks = (dmask_ref[0], dmask_ref[1])              # width D edge masks
    hmasks = (hmask_ref[0], hmask_ref[1])              # width mlp_dim masks

    x = _attn_body(x, w["attn_ln"][0], w["se1_w"][0], w["se1_b"][0],
                   w["se2_w"][0], w["se2_b"][0], w["qkv_w"][0],
                   w["out_w"][0], w["out_b"][0], ov_sc,
                   heads=heads, dim_head=dim_head)
    x = _local_body(x, w["lm_ln"][0], w["lm_w1"][0], w["lm_b1"][0],
                    w["lm_dw_w"][0], w["lm_dw_b"][0],
                    w["lm_w3"][0], w["lm_b3"][0], dmasks, roll_mode=roll_mode)
    x = _ff_body(x, w["ff_ln"][0], w["ff_w1"][0], w["ff_b1"][0],
                 w["ff_aff1"][0], w["ff_dw_w"][0], w["ff_dw_b"][0],
                 w["ff_aff2"][0], w["ff_w2"][0], w["ff_b2"][0],
                 w["ff_aff3"][0], hmasks, roll_mode=roll_mode)
    # l == 0: position_embedding is nn.Identity (peg=False) -> no-op

    x_sc[...] = x                                      # carry to next layer

    # Fused dim_reduce: when this layer's output is a residual, reduce it NOW
    # and write it lane-dense into its slot of the (1, 4, N, dh) output block.
    @pl.when((l < 2) | (l >= depth - 2))
    def _():
        red_val = _mm(x, red_ref[...])                 # (N, dh)

        @pl.when(l == 0)
        def _(): out_ref[0, 0] = red_val

        @pl.when(l == 1)
        def _(): out_ref[0, 1] = red_val

        @pl.when(l == depth - 2)
        def _(): out_ref[0, 2] = red_val

        @pl.when(l == depth - 1)
        def _(): out_ref[0, 3] = red_val


def _layer_spec(arr):
    # Stream one layer's slice of a depth-stacked weight per grid step.
    n_rest = arr.ndim - 1
    return pl.BlockSpec((1,) + arr.shape[1:],
                        lambda b, l, _n=n_rest: (l,) + (0,) * _n)


def _host_edge_masks(n, c):
    row = jnp.arange(n, dtype=jnp.int32)[:, None]
    keep_prev = jnp.broadcast_to(row != 0, (n, c)).astype(jnp.float32)
    keep_next = jnp.broadcast_to(row != n - 1, (n, c)).astype(jnp.float32)
    return jnp.stack([keep_prev, keep_next])           # (2, n, c)


def transformer_forward(x, prepared, heads, dim_head, roll_mode="jnp"):
    B, N, D = x.shape
    depth = prepared["qkv_w"].shape[0]
    # Matches torch: res[0..3] requires >= 4 residual layers (depth < 4 would
    # IndexError in the reference module too).
    assert depth >= 4, "Transformer.dim_reduce assumes depth >= 4"
    dh = prepared["red_w"].shape[-1]
    mlp_dim = prepared["ff_w1"].shape[-1]
    inner = heads * dim_head

    dmask = _host_edge_masks(N, D)
    hmask = _host_edge_masks(N, mlp_dim)
    layer_ws = [prepared[k] for k in LAYER_KEYS]

    kernel = functools.partial(_transformer_kernel, heads=heads,
                               dim_head=dim_head, roll_mode=roll_mode)

    out = pl.pallas_call(
        kernel,
        out_shape=jax.ShapeDtypeStruct((B, 4, N, dh), jnp.float32),
        grid=(B, depth),
        in_specs=[pl.BlockSpec((1, N, D), lambda b, l: (b, 0, 0)),
                  pl.BlockSpec(dmask.shape, lambda b, l: (0, 0, 0)),
                  pl.BlockSpec(hmask.shape, lambda b, l: (0, 0, 0))]
                 + [_layer_spec(wt) for wt in layer_ws]
                 + [pl.BlockSpec(prepared["red_w"].shape, lambda b, l: (0, 0))],
        out_specs=pl.BlockSpec((1, 4, N, dh), lambda b, l: (b, 0, 0, 0)),
        scratch_shapes=[pltpu.VMEM((N, D), jnp.float32),
                        pltpu.VMEM((N, inner), jnp.float32)],
        compiler_params=pltpu.CompilerParams(
            dimension_semantics=("parallel", "arbitrary"),
            vmem_limit_bytes=48 * 1024 * 1024),
    )(x, dmask, hmask, *layer_ws, prepared["red_w"])

    # Lane-dense kernel layout (B, 4, N, dh) -> torch concat layout (B, N, 4*dh).
    return out.transpose(0, 2, 1, 3).reshape(B, N, 4 * dh)


# ------------- roll-convention probe (safe use of pltpu.roll) ----------------
def _roll_probe_kernel(x_ref, o_ref):
    o_ref[...] = pltpu.roll(x_ref[...], 1, 0)


def detect_roll_mode(shapes=((8, 32), (8, 64))):
    """Check pltpu.roll's sublane-shift convention; concat only if it fails."""
    modes = set()
    try:
        for n, d in shapes:
            xp = jnp.arange(n * d, dtype=jnp.float32).reshape(n, d)
            got = jax.block_until_ready(pl.pallas_call(
                _roll_probe_kernel,
                out_shape=jax.ShapeDtypeStruct((n, d), jnp.float32))(xp))
            if bool(jnp.array_equal(got, jnp.roll(xp, 1, axis=0))):
                modes.add("jnp")
            elif bool(jnp.array_equal(got, jnp.roll(xp, -1, axis=0))):
                modes.add("reverse")
            else:
                modes.add("concat")
    except Exception:
        return "concat"
    if len(modes) == 1 and "concat" not in modes:
        return modes.pop()
    return "concat"


# ------------- parameter prep: fold eval-BN + scale, stack over depth --------
def _bn_scale_shift(p):             # p: (4, C) = [gamma, beta, mean, var]
    scale = p[0] / jnp.sqrt(p[3] + BN_EPS)
    return scale, p[1] - p[2] * scale


def prepare_params(layers, red_w, heads, dim_head):
    depth = len(layers)
    inner = heads * dim_head

    def stack(group, key, dtype=None):
        a = jnp.stack([layers[i][group][key] for i in range(depth)])
        return a.astype(dtype) if dtype is not None else a

    # Fold the attention scale into the q columns of qkv_w.
    qkv = stack(0, "qkv_w")
    qkv = qkv.at[:, :, :inner].multiply(dim_head ** -0.5)

    prep = {
        "attn_ln": stack(0, "ln"),
        "se1_w": stack(0, "se1_w", _BF16), "se1_b": stack(0, "se1_b"),
        "se2_w": stack(0, "se2_w", _BF16), "se2_b": stack(0, "se2_b"),
        "qkv_w": qkv.astype(_BF16),
        "out_w": stack(0, "out_w", _BF16), "out_b": stack(0, "out_b"),
        "lm_ln": stack(1, "ln"),
        "lm_w1": stack(1, "w1", _BF16), "lm_b1": stack(1, "b1"),
        "lm_w3": stack(1, "w3", _BF16), "lm_b3": stack(1, "b3"),
        "ff_ln": stack(2, "ln"),
        "ff_w1": stack(2, "w1", _BF16), "ff_b1": stack(2, "b1"),
        "ff_dw_w": stack(2, "dw_w"), "ff_dw_b": stack(2, "dw_b"),
        "ff_w2": stack(2, "w2", _BF16), "ff_b2": stack(2, "b2"),
    }
    lm_dw_w, lm_dw_b, aff1, aff2, aff3 = [], [], [], [], []
    for _attn_p, lm_p, ff_p in layers:
        s, t = _bn_scale_shift(lm_p["bn"])             # fold BN into dw conv
        lm_dw_w.append(lm_p["dw_w"] * s[None, :])
        lm_dw_b.append(lm_p["dw_b"] * s[None, :] + t[None, :])
        aff1.append(jnp.stack(_bn_scale_shift(ff_p["bn1"])))
        aff2.append(jnp.stack(_bn_scale_shift(ff_p["bn2"])))
        aff3.append(jnp.stack(_bn_scale_shift(ff_p["bn3"])))
    prep["lm_dw_w"] = jnp.stack(lm_dw_w)
    prep["lm_dw_b"] = jnp.stack(lm_dw_b)
    prep["ff_aff1"] = jnp.stack(aff1)
    prep["ff_aff2"] = jnp.stack(aff2)
    prep["ff_aff3"] = jnp.stack(aff3)
    prep["red_w"] = red_w.astype(_BF16)
    return prep


# ------------- pure-JAX reference (raw params, textbook math) ----------------
def _ref_forward(x, layers, red_w, heads, dim_head):
    depth = len(layers)
    inner = heads * dim_head

    def bn(h, p):
        return (h - p[2]) / jnp.sqrt(p[3] + BN_EPS) * p[0] + p[1]

    def attn_block(xb, p):
        xn = _layernorm(xb, p["ln"])
        h = _gelu(_mm(xn, p["se1_w"]) + p["se1_b"])
        gate = _sigmoid(_mm(h, p["se2_w"]) + p["se2_b"])
        xs = xn * gate
        qkv = _mm(xs, p["qkv_w"])
        n = xb.shape[0]
        q = qkv[:, :inner].reshape(n, heads, dim_head).transpose(1, 0, 2)
        k = qkv[:, inner:2 * inner].reshape(n, heads, dim_head).transpose(1, 0, 2)
        v = qkv[:, 2 * inner:].reshape(n, heads, dim_head).transpose(1, 0, 2)
        dots = jnp.einsum("hnd,hmd->hnm", q.astype(_BF16), k.astype(_BF16),
                          preferred_element_type=jnp.float32) * dim_head ** -0.5
        attn = jax.nn.softmax(dots, axis=-1)
        o = jnp.einsum("hnm,hmd->hnd", attn.astype(_BF16), v.astype(_BF16),
                       preferred_element_type=jnp.float32)
        o = o.transpose(1, 0, 2).reshape(n, inner)
        return _mm(o, p["out_w"]) + p["out_b"] + xb

    def local_block(xb, p):
        d = xb.shape[-1]
        xn = _layernorm(xb, p["ln"])
        h = _mm(xn, p["w1"]) + p["b1"]
        h = h[:, :d] * _sigmoid(h[:, d:])
        h = _dwconv3(h, p["dw_w"], p["dw_b"], None, "concat")
        h = bn(h, p["bn"])
        h = h * _sigmoid(h)
        return _mm(h, p["w3"]) + p["b3"] + xb

    def ff_block(xb, p):
        xn = _layernorm(xb, p["ln"])
        h = _gelu(_mm(xn, p["w1"]) + p["b1"])
        h = bn(h, p["bn1"])
        k = _gelu(_dwconv3(h, p["dw_w"], p["dw_b"], None, "concat"))
        k = bn(k, p["bn2"])
        h = h + k
        y = bn(_mm(h, p["w2"]) + p["b2"], p["bn3"])
        return y + xb

    res = []
    for idx, (ap, lp, fp) in enumerate(layers):
        x = jax.vmap(lambda xb: attn_block(xb, ap))(x)
        x = jax.vmap(lambda xb: local_block(xb, lp))(x)
        x = jax.vmap(lambda xb: ff_block(xb, fp))(x)
        if idx < 2 or depth - idx <= 2:
            res.append(x)
    return jnp.concatenate([_mm(res[i], red_w) for i in range(4)], axis=-1)


# ------------- deterministic parameter init ----------------------------------
def init_params(key, dim, depth, heads, dim_head, mlp_dim):
    d16 = dim // 16
    inner = heads * dim_head

    def nrm(k, shape, scl=0.08):
        return (scl * jax.random.normal(k, shape)).astype(jnp.float32)

    def bn_params(k, c):
        k1, k2, k3, k4 = jax.random.split(k, 4)
        gamma = 1.0 + 0.1 * jax.random.normal(k1, (c,))
        beta = 0.1 * jax.random.normal(k2, (c,))
        mean = 0.1 * jax.random.normal(k3, (c,))
        var = 1.0 + 0.2 * jax.random.uniform(k4, (c,))
        return jnp.stack([gamma, beta, mean, var]).astype(jnp.float32)

    def ln_params(c):
        return jnp.stack([jnp.ones((c,)), jnp.zeros((c,))]).astype(jnp.float32)

    layers = []
    for i in range(depth):
        ks = jax.random.split(jax.random.fold_in(key, i), 24)
        attn = dict(ln=ln_params(dim),
                    se1_w=nrm(ks[0], (dim, d16)), se1_b=nrm(ks[1], (1, d16)),
                    se2_w=nrm(ks[2], (d16, dim)), se2_b=nrm(ks[3], (1, dim)),
                    qkv_w=nrm(ks[4], (dim, 3 * inner)),
                    out_w=nrm(ks[5], (inner, dim)), out_b=nrm(ks[6], (1, dim)))
        lm = dict(ln=ln_params(dim),
                  w1=nrm(ks[7], (dim, 2 * dim)), b1=nrm(ks[8], (1, 2 * dim)),
                  dw_w=nrm(ks[9], (3, dim)), dw_b=nrm(ks[10], (1, dim)),
                  bn=bn_params(ks[11], dim),
                  w3=nrm(ks[12], (dim, dim)), b3=nrm(ks[13], (1, dim)))
        ff = dict(ln=ln_params(dim),
                  w1=nrm(ks[14], (dim, mlp_dim)), b1=nrm(ks[15], (1, mlp_dim)),
                  bn1=bn_params(ks[16], mlp_dim),
                  dw_w=nrm(ks[17], (3, mlp_dim)), dw_b=nrm(ks[18], (1, mlp_dim)),
                  bn2=bn_params(ks[19], mlp_dim),
                  w2=nrm(ks[20], (mlp_dim, dim)), b2=nrm(ks[21], (1, dim)),
                  bn3=bn_params(ks[22], dim))
        layers.append((attn, lm, ff))
    red_w = nrm(jax.random.fold_in(key, 10_000), (dim, dim // 2))
    return layers, red_w


if __name__ == "__main__":
    B, N = 2, 8
    DIM, DEPTH, HEADS, DIM_HEAD, MLP_DIM = 32, 4, 4, 16, 64  # depth=4 -> 4 residuals

    key = jax.random.PRNGKey(0)
    pkey, xkey = jax.random.split(key)
    layers, red_w = init_params(pkey, DIM, DEPTH, HEADS, DIM_HEAD, MLP_DIM)
    prepared = prepare_params(layers, red_w, HEADS, DIM_HEAD)
    x = jax.random.normal(xkey, (B, N, DIM), dtype=jnp.float32)

    roll_mode = detect_roll_mode()

    out = transformer_forward(x, prepared, HEADS, DIM_HEAD, roll_mode)
    out = jax.block_until_ready(out)
    assert out.shape == (B, N, 4 * (DIM // 2)), out.shape

    ref = jax.block_until_ready(_ref_forward(x, layers, red_w, HEADS, DIM_HEAD))
    max_err = float(jnp.max(jnp.abs(out - ref)))
    assert jnp.allclose(out, ref, atol=1e-2, rtol=1e-2), max_err

    print("KERNEL_OK")
</pallas_src>

<mosaic_0001>
module attributes {stable_mosaic.version = 11 : i64} {
  func.func @_roll_probe_kernel(%arg0: memref<8x32xf32, #tpu.memory_space<vmem>>, %arg1: memref<8x32xf32, #tpu.memory_space<vmem>>) attributes {dimension_semantics = [], scalar_prefetch = 0 : i64, scratch_operands = 0 : i64, tpu.core_type = #tpu.core_type<tc>} {
    %c0 = arith.constant 0 : index
    %c0_0 = arith.constant 0 : index
    %0 = vector.load %arg0[%c0, %c0_0] : memref<8x32xf32, #tpu.memory_space<vmem>>, vector<8x32xf32>
    %c1_i32 = arith.constant 1 : i32
    %1 = tpu.dynamic_rotate %0 by %c1_i32 dim 0 : vector<8x32xf32>, i32 -> vector<8x32xf32>
    %c0_1 = arith.constant 0 : index
    %c0_2 = arith.constant 0 : index
    %2 = vector.load %arg1[%c0_1, %c0_2] : memref<8x32xf32, #tpu.memory_space<vmem>>, vector<8x32xf32>
    tpu.vector_store %arg1[%c0_1, %c0_2], %1 {strides = array<i32>} : memref<8x32xf32, #tpu.memory_space<vmem>>, vector<8x32xf32>,
    return
  }
}

module attributes {stable_mosaic.version = 11 : i64} {
  func.func @_transformer_kernel(%arg0: i32, %arg1: i32, %arg2: memref<1x8x32xf32, #tpu.memory_space<vmem>>, %arg3: memref<2x8x32xf32, #tpu.memory_space<vmem>>, %arg4: memref<2x8x64xf32, #tpu.memory_space<vmem>>, %arg5: memref<1x2x32xf32, #tpu.memory_space<vmem>>, %arg6: memref<1x32x2xbf16, #tpu.memory_space<vmem>>, %arg7: memref<1x1x2xf32, #tpu.memory_space<vmem>>, %arg8: memref<1x2x32xbf16, #tpu.memory_space<vmem>>, %arg9: memref<1x1x32xf32, #tpu.memory_space<vmem>>, %arg10: memref<1x32x192xbf16, #tpu.memory_space<vmem>>, %arg11: memref<1x64x32xbf16, #tpu.memory_space<vmem>>, %arg12: memref<1x1x32xf32, #tpu.memory_space<vmem>>, %arg13: memref<1x2x32xf32, #tpu.memory_space<vmem>>, %arg14: memref<1x32x64xbf16, #tpu.memory_space<vmem>>, %arg15: memref<1x1x64xf32, #tpu.memory_space<vmem>>, %arg16: memref<1x3x32xf32, #tpu.memory_space<vmem>>, %arg17: memref<1x1x32xf32, #tpu.memory_space<vmem>>, %arg18: memref<1x32x32xbf16, #tpu.memory_space<vmem>>, %arg19: memref<1x1x32xf32, #tpu.memory_space<vmem>>, %arg20: memref<1x2x32xf32, #tpu.memory_space<vmem>>, %arg21: memref<1x32x64xbf16, #tpu.memory_space<vmem>>, %arg22: memref<1x1x64xf32, #tpu.memory_space<vmem>>, %arg23: memref<1x2x64xf32, #tpu.memory_space<vmem>>, %arg24: memref<1x3x64xf32, #tpu.memory_space<vmem>>, %arg25: memref<1x1x64xf32, #tpu.memory_space<vmem>>, %arg26: memref<1x2x64xf32, #tpu.memory_space<vmem>>, %arg27: memref<1x64x32xbf16, #tpu.memory_space<vmem>>, %arg28: memref<1x1x32xf32, #tpu.memory_space<vmem>>, %arg29: memref<1x2x32xf32, #tpu.memory_space<vmem>>, %arg30: memref<32x16xbf16, #tpu.memory_space<vmem>>, %arg31: memref<1x4x8x16xf32, #tpu.memory_space<vmem>>, %arg32: memref<8x32xf32, #tpu.memory_space<vmem>>, %arg33: memref<8x64xf32, #tpu.memory_space<vmem>>) attributes {dimension_semantics = [#tpu.dimension_semantics<parallel>, #tpu.dimension_semantics<arbitrary>], iteration_bounds = array<i64: 2, 4>, scalar_prefetch = 0 : i64, scratch_operands = 2 : i64, tpu.core_type = #tpu.core_type<tc>, window_params = [{transform_indices = @transform_0, window_bounds = array<i64: 1, 8, 32>}, {pipeline_mode = #tpu.pipeline_mode<synchronous>, transform_indices = @transform_1, window_bounds = array<i64: 2, 8, 32>}, {pipeline_mode = #tpu.pipeline_mode<synchronous>, transform_indices = @transform_2, window_bounds = array<i64: 2, 8, 64>}, {transform_indices = @transform_3, window_bounds = array<i64: 1, 2, 32>}, {transform_indices = @transform_4, window_bounds = array<i64: 1, 32, 2>}, {transform_indices = @transform_5, window_bounds = array<i64: 1, 1, 2>}, {transform_indices = @transform_6, window_bounds = array<i64: 1, 2, 32>}, {transform_indices = @transform_7, window_bounds = array<i64: 1, 1, 32>}, {transform_indices = @transform_8, window_bounds = array<i64: 1, 32, 192>}, {transform_indices = @transform_9, window_bounds = array<i64: 1, 64, 32>}, {transform_indices = @transform_10, window_bounds = array<i64: 1, 1, 32>}, {transform_indices = @transform_11, window_bounds = array<i64: 1, 2, 32>}, {transform_indices = @transform_12, window_bounds = array<i64: 1, 32, 64>}, {transform_indices = @transform_13, window_bounds = array<i64: 1, 1, 64>}, {transform_indices = @transform_14, window_bounds = array<i64: 1, 3, 32>}, {transform_indices = @transform_15, window_bounds = array<i64: 1, 1, 32>}, {transform_indices = @transform_16, window_bounds = array<i64: 1, 32, 32>}, {transform_indices = @transform_17, window_bounds = array<i64: 1, 1, 32>}, {transform_indices = @transform_18, window_bounds = array<i64: 1, 2, 32>}, {transform_indices = @transform_19, window_bounds = array<i64: 1, 32, 64>}, {transform_indices = @transform_20, window_bounds = array<i64: 1, 1, 64>}, {transform_indices = @transform_21, window_bounds = array<i64: 1, 2, 64>}, {transform_indices = @transform_22, window_bounds = array<i64: 1, 3, 64>}, {transform_indices = @transform_23, window_bounds = array<i64: 1, 1, 64>}, {transform_indices = @transform_24, window_bounds = array<i64: 1, 2, 64>}, {transform_indices = @transform_25, window_bounds = array<i64: 1, 64, 32>}, {transform_indices = @transform_26, window_bounds = array<i64: 1, 1, 32>}, {transform_indices = @transform_27, window_bounds = array<i64: 1, 2, 32>}, {pipeline_mode = #tpu.pipeline_mode<synchronous>, transform_indices = @transform_28, window_bounds = array<i64: 32, 16>}, {transform_indices = @transform_29, window_bounds = array<i64: 1, 4, 8, 16>}]} {
    %c0_i32 = arith.constant 0 : i32
    %0 = arith.cmpi eq, %arg1, %c0_i32 : i32
    %1 = arith.extui %0 : i1 to i32
    %c0_i32_0 = arith.constant 0 : i32
    %2 = arith.cmpi ne, %1, %c0_i32_0 : i32
    scf.if %2 {
      %c0_185 = arith.constant 0 : index
      %c0_186 = arith.constant 0 : index
      %c0_187 = arith.constant 0 : index
      %450 = vector.load %arg2[%c0_185, %c0_186, %c0_187] : memref<1x8x32xf32, #tpu.memory_space<vmem>>, vector<1x8x32xf32>
      %451 = vector.shape_cast %450 : vector<1x8x32xf32> to vector<8x32xf32>
      %c0_188 = arith.constant 0 : index
      %c0_189 = arith.constant 0 : index
      %452 = vector.load %arg32[%c0_188, %c0_189] : memref<8x32xf32, #tpu.memory_space<vmem>>, vector<8x32xf32>
      tpu.vector_store %arg32[%c0_188, %c0_189], %451 {strides = array<i32>} : memref<8x32xf32, #tpu.memory_space<vmem>>, vector<8x32xf32>,
    } else {
    }
    %c0 = arith.constant 0 : index
    %c0_1 = arith.constant 0 : index
    %3 = vector.load %arg32[%c0, %c0_1] : memref<8x32xf32, #tpu.memory_space<vmem>>, vector<8x32xf32>
    %c0_2 = arith.constant 0 : index
    %c0_3 = arith.constant 0 : index
    %c0_4 = arith.constant 0 : index
    %4 = vector.load %arg5[%c0_2, %c0_3, %c0_4] : memref<1x2x32xf32, #tpu.memory_space<vmem>>, vector<1x2x32xf32>
    %5 = vector.shape_cast %4 : vector<1x2x32xf32> to vector<2x32xf32>
    %c0_5 = arith.constant 0 : index
    %c0_6 = arith.constant 0 : index
    %c0_7 = arith.constant 0 : index
    %6 = vector.load %arg6[%c0_5, %c0_6, %c0_7] : memref<1x32x2xbf16, #tpu.memory_space<vmem>>, vector<1x32x2xbf16>
    %7 = vector.shape_cast %6 : vector<1x32x2xbf16> to vector<32x2xbf16>
    %c0_8 = arith.constant 0 : index
    %c0_9 = arith.constant 0 : index
    %c0_10 = arith.constant 0 : index
    %8 = vector.load %arg7[%c0_8, %c0_9, %c0_10] : memref<1x1x2xf32, #tpu.memory_space<vmem>>, vector<1x1x2xf32>
    %9 = vector.shape_cast %8 : vector<1x1x2xf32> to vector<1x2xf32>
    %c0_11 = arith.constant 0 : index
    %c0_12 = arith.constant 0 : index
    %c0_13 = arith.constant 0 : index
    %10 = vector.load %arg8[%c0_11, %c0_12, %c0_13] : memref<1x2x32xbf16, #tpu.memory_space<vmem>>, vector<1x2x32xbf16>
    %11 = vector.shape_cast %10 : vector<1x2x32xbf16> to vector<2x32xbf16>
    %c0_14 = arith.constant 0 : index
    %c0_15 = arith.constant 0 : index
    %c0_16 = arith.constant 0 : index
    %12 = vector.load %arg9[%c0_14, %c0_15, %c0_16] : memref<1x1x32xf32, #tpu.memory_space<vmem>>, vector<1x1x32xf32>
    %13 = vector.shape_cast %12 : vector<1x1x32xf32> to vector<1x32xf32>
    %c0_17 = arith.constant 0 : index
    %c0_18 = arith.constant 0 : index
    %c0_19 = arith.constant 0 : index
    %14 = vector.load %arg10[%c0_17, %c0_18, %c0_19] : memref<1x32x192xbf16, #tpu.memory_space<vmem>>, vector<1x32x192xbf16>
    %15 = vector.shape_cast %14 : vector<1x32x192xbf16> to vector<32x192xbf16>
    %c0_20 = arith.constant 0 : index
    %c0_21 = arith.constant 0 : index
    %c0_22 = arith.constant 0 : index
    %16 = vector.load %arg11[%c0_20, %c0_21, %c0_22] : memref<1x64x32xbf16, #tpu.memory_space<vmem>>, vector<1x64x32xbf16>
    %17 = vector.shape_cast %16 : vector<1x64x32xbf16> to vector<64x32xbf16>
    %c0_23 = arith.constant 0 : index
    %c0_24 = arith.constant 0 : index
    %c0_25 = arith.constant 0 : index
    %18 = vector.load %arg12[%c0_23, %c0_24, %c0_25] : memref<1x1x32xf32, #tpu.memory_space<vmem>>, vector<1x1x32xf32>
    %19 = vector.shape_cast %18 : vector<1x1x32xf32> to vector<1x32xf32>
    %cst = arith.constant dense<0.000000e+00> : vector<8xf32>
    %20 = vector.multi_reduction <add>, %3, %cst [1] : vector<8x32xf32> to vector<8xf32>
    %21 = vector.shape_cast %20 : vector<8xf32> to vector<8x1xf32>
    %cst_26 = arith.constant 3.200000e+01 : f32
    %22 = vector.broadcast %cst_26 : f32 to vector<8x1xf32>
    %23 = arith.divf %21, %22 : vector<8x1xf32>
    %24 = vector.broadcast %23 : vector<8x1xf32> to vector<8x32xf32>
    %25 = arith.subf %3, %24 : vector<8x32xf32>
    %26 = arith.mulf %25, %25 : vector<8x32xf32>
    %cst_27 = arith.constant dense<0.000000e+00> : vector<8xf32>
    %27 = vector.multi_reduction <add>, %26, %cst_27 [1] : vector<8x32xf32> to vector<8xf32>
    %28 = vector.shape_cast %27 : vector<8xf32> to vector<8x1xf32>
    %cst_28 = arith.constant 3.200000e+01 : f32
    %29 = vector.broadcast %cst_28 : f32 to vector<8x1xf32>
    %30 = arith.divf %28, %29 : vector<8x1xf32>
    %31 = vector.broadcast %23 : vector<8x1xf32> to vector<8x32xf32>
    %32 = arith.subf %3, %31 : vector<8x32xf32>
    %cst_29 = arith.constant 9.99999974E-6 : f32
    %33 = vector.broadcast %cst_29 : f32 to vector<8x1xf32>
    %34 = arith.addf %30, %33 : vector<8x1xf32>
    %35 = math.rsqrt %34 : vector<8x1xf32>
    %36 = vector.broadcast %35 : vector<8x1xf32> to vector<8x32xf32>
    %37 = arith.mulf %32, %36 : vector<8x32xf32>
    %38 = vector.extract_strided_slice %5 {offsets = [0, 0], sizes = [1, 32], strides = [1, 1]} : vector<2x32xf32> to vector<1x32xf32>
    %39 = vector.broadcast %38 : vector<1x32xf32> to vector<8x32xf32>
    %40 = arith.mulf %37, %39 : vector<8x32xf32>
    %41 = vector.extract_strided_slice %5 {offsets = [1, 0], sizes = [1, 32], strides = [1, 1]} : vector<2x32xf32> to vector<1x32xf32>
    %42 = vector.broadcast %41 : vector<1x32xf32> to vector<8x32xf32>
    %43 = arith.addf %40, %42 : vector<8x32xf32>
    %44 = arith.truncf %43 : vector<8x32xf32> to vector<8x32xbf16>
    %cst_30 = arith.constant dense<0.000000e+00> : vector<8x2xf32>
    %45 = tpu.matmul %44, %7, %cst_30 {dimension_numbers = #tpu.dot_dimension_numbers<[1], [0], [0], [1], [0, 0, 1, 1], [], []>} : vector<8x32xbf16>, vector<32x2xbf16>, vector<8x2xf32> -> vector<8x2xf32>
    %46 = vector.broadcast %9 : vector<1x2xf32> to vector<8x2xf32>
    %47 = arith.addf %45, %46 : vector<8x2xf32>
    %cst_31 = arith.constant 5.000000e-01 : f32
    %48 = vector.broadcast %cst_31 : f32 to vector<8x2xf32>
    %49 = arith.mulf %48, %47 : vector<8x2xf32>
    %cst_32 = arith.constant 0.707106769 : f32
    %50 = vector.broadcast %cst_32 : f32 to vector<8x2xf32>
    %51 = arith.mulf %47, %50 : vector<8x2xf32>
    %cst_33 = arith.constant 0.000000e+00 : f32
    %52 = vector.broadcast %cst_33 : f32 to vector<8x2xf32>
    %53 = arith.cmpf oge, %51, %52 : vector<8x2xf32>
    %cst_34 = arith.constant 1.000000e+00 : f32
    %cst_35 = arith.constant -1.000000e+00 : f32
    %54 = vector.broadcast %cst_34 : f32 to vector<8x2xf32>
    %55 = vector.broadcast %cst_35 : f32 to vector<8x2xf32>
    %56 = arith.select %53, %54, %55 : vector<8x2xi1>, vector<8x2xf32>
    %57 = math.absf %51 : vector<8x2xf32>
    %cst_36 = arith.constant 0.327591091 : f32
    %58 = vector.broadcast %cst_36 : f32 to vector<8x2xf32>
    %59 = arith.mulf %58, %57 : vector<8x2xf32>
    %cst_37 = arith.constant 1.000000e+00 : f32
    %60 = vector.broadcast %cst_37 : f32 to vector<8x2xf32>
    %61 = arith.addf %60, %59 : vector<8x2xf32>
    %cst_38 = arith.constant 1.000000e+00 : f32
    %62 = vector.broadcast %cst_38 : f32 to vector<8x2xf32>
    %63 = arith.divf %62, %61 : vector<8x2xf32>
    %cst_39 = arith.constant 1.06140542 : f32
    %64 = vector.broadcast %cst_39 : f32 to vector<8x2xf32>
    %65 = arith.mulf %64, %63 : vector<8x2xf32>
    %cst_40 = arith.constant -1.45315206 : f32
    %66 = vector.broadcast %cst_40 : f32 to vector<8x2xf32>
    %67 = arith.addf %65, %66 : vector<8x2xf32>
    %68 = arith.mulf %67, %63 : vector<8x2xf32>
    %cst_41 = arith.constant 1.42141378 : f32
    %69 = vector.broadcast %cst_41 : f32 to vector<8x2xf32>
    %70 = arith.addf %68, %69 : vector<8x2xf32>
    %71 = arith.mulf %70, %63 : vector<8x2xf32>
    %cst_42 = arith.constant -0.284496725 : f32
    %72 = vector.broadcast %cst_42 : f32 to vector<8x2xf32>
    %73 = arith.addf %71, %72 : vector<8x2xf32>
    %74 = arith.mulf %73, %63 : vector<8x2xf32>
    %cst_43 = arith.constant 0.254829586 : f32
    %75 = vector.broadcast %cst_43 : f32 to vector<8x2xf32>
    %76 = arith.addf %74, %75 : vector<8x2xf32>
    %77 = arith.mulf %76, %63 : vector<8x2xf32>
    %cst_44 = arith.constant 0.000000e+00 : f32
    %78 = vector.broadcast %cst_44 : f32 to vector<8x2xf32>
    %79 = arith.subf %78, %57 : vector<8x2xf32>
    %80 = arith.mulf %79, %57 : vector<8x2xf32>
    %81 = math.exp %80 : vector<8x2xf32>
    %82 = arith.mulf %77, %81 : vector<8x2xf32>
    %cst_45 = arith.constant 1.000000e+00 : f32
    %83 = vector.broadcast %cst_45 : f32 to vector<8x2xf32>
    %84 = arith.subf %83, %82 : vector<8x2xf32>
    %85 = arith.mulf %56, %84 : vector<8x2xf32>
    %cst_46 = arith.constant 1.000000e+00 : f32
    %86 = vector.broadcast %cst_46 : f32 to vector<8x2xf32>
    %87 = arith.addf %86, %85 : vector<8x2xf32>
    %88 = arith.mulf %49, %87 : vector<8x2xf32>
    %89 = arith.truncf %88 : vector<8x2xf32> to vector<8x2xbf16>
    %cst_47 = arith.constant dense<0.000000e+00> : vector<8x32xf32>
    %90 = tpu.matmul %89, %11, %cst_47 {dimension_numbers = #tpu.dot_dimension_numbers<[1], [0], [0], [1], [0, 0, 1, 1], [], []>} : vector<8x2xbf16>, vector<2x32xbf16>, vector<8x32xf32> -> vector<8x32xf32>
    %91 = vector.broadcast %13 : vector<1x32xf32> to vector<8x32xf32>
    %92 = arith.addf %90, %91 : vector<8x32xf32>
    %cst_48 = arith.constant 0.000000e+00 : f32
    %93 = vector.broadcast %cst_48 : f32 to vector<8x32xf32>
    %94 = arith.subf %93, %92 : vector<8x32xf32>
    %95 = math.exp %94 : vector<8x32xf32>
    %cst_49 = arith.constant 1.000000e+00 : f32
    %96 = vector.broadcast %cst_49 : f32 to vector<8x32xf32>
    %97 = arith.addf %96, %95 : vector<8x32xf32>
    %cst_50 = arith.constant 1.000000e+00 : f32
    %98 = vector.broadcast %cst_50 : f32 to vector<8x32xf32>
    %99 = arith.divf %98, %97 : vector<8x32xf32>
    %100 = arith.mulf %43, %99 : vector<8x32xf32>
    %101 = arith.truncf %100 : vector<8x32xf32> to vector<8x32xbf16>
    %cst_51 = arith.constant dense<0.000000e+00> : vector<8x192xf32>
    %102 = tpu.matmul %101, %15, %cst_51 {dimension_numbers = #tpu.dot_dimension_numbers<[1], [0], [0], [1], [0, 0, 1, 1], [], []>} : vector<8x32xbf16>, vector<32x192xbf16>, vector<8x192xf32> -> vector<8x192xf32>
    %103 = vector.extract_strided_slice %102 {offsets = [0, 0], sizes = [8, 16], strides = [1, 1]} : vector<8x192xf32> to vector<8x16xf32>
    %104 = vector.extract_strided_slice %102 {offsets = [0, 64], sizes = [8, 16], strides = [1, 1]} : vector<8x192xf32> to vector<8x16xf32>
    %105 = vector.extract_strided_slice %102 {offsets = [0, 128], sizes = [8, 16], strides = [1, 1]} : vector<8x192xf32> to vector<8x16xf32>
    %106 = arith.truncf %103 : vector<8x16xf32> to vector<8x16xbf16>
    %107 = arith.truncf %104 : vector<8x16xf32> to vector<8x16xbf16>
    %cst_52 = arith.constant dense<0.000000e+00> : vector<8x8xf32>
    %108 = tpu.matmul %106, %107, %cst_52 {dimension_numbers = #tpu.dot_dimension_numbers<[1], [1], [0], [0], [0, 0, 1, 0], [], []>} : vector<8x16xbf16>, vector<8x16xbf16>, vector<8x8xf32> -> vector<8x8xf32>
    %cst_53 = arith.constant dense<0xFF800000> : vector<8xf32>
    %109 = vector.multi_reduction <maximumf>, %108, %cst_53 [1] : vector<8x8xf32> to vector<8xf32>
    %110 = vector.shape_cast %109 : vector<8xf32> to vector<8x1xf32>
    %111 = vector.broadcast %110 : vector<8x1xf32> to vector<8x8xf32>
    %112 = arith.subf %108, %111 : vector<8x8xf32>
    %113 = math.exp %112 : vector<8x8xf32>
    %cst_54 = arith.constant dense<0.000000e+00> : vector<8xf32>
    %114 = vector.multi_reduction <add>, %113, %cst_54 [1] : vector<8x8xf32> to vector<8xf32>
    %115 = vector.shape_cast %114 : vector<8xf32> to vector<8x1xf32>
    %116 = tpu.reciprocal %115 {approx = true} : vector<8x1xf32> -> vector<8x1xf32>
    %117 = vector.broadcast %116 : vector<8x1xf32> to vector<8x8xf32>
    %118 = arith.mulf %113, %117 : vector<8x8xf32>
    %119 = arith.truncf %118 : vector<8x8xf32> to vector<8x8xbf16>
    %120 = arith.truncf %105 : vector<8x16xf32> to vector<8x16xbf16>
    %cst_55 = arith.constant dense<0.000000e+00> : vector<8x16xf32>
    %121 = tpu.matmul %119, %120, %cst_55 {dimension_numbers = #tpu.dot_dimension_numbers<[1], [0], [0], [1], [0, 0, 1, 1], [], []>} : vector<8x8xbf16>, vector<8x16xbf16>, vector<8x16xf32> -> vector<8x16xf32>
    %c0_56 = arith.constant 0 : index
    %c0_57 = arith.constant 0 : index
    %122 = vector.load %arg33[%c0_56, %c0_57] : memref<8x64xf32, #tpu.memory_space<vmem>>, vector<8x16xf32>
    tpu.vector_store %arg33[%c0_56, %c0_57], %121 {strides = array<i32>} : memref<8x64xf32, #tpu.memory_space<vmem>>, vector<8x16xf32>,
    %123 = vector.extract_strided_slice %102 {offsets = [0, 16], sizes = [8, 16], strides = [1, 1]} : vector<8x192xf32> to vector<8x16xf32>
    %124 = vector.extract_strided_slice %102 {offsets = [0, 80], sizes = [8, 16], strides = [1, 1]} : vector<8x192xf32> to vector<8x16xf32>
    %125 = vector.extract_strided_slice %102 {offsets = [0, 144], sizes = [8, 16], strides = [1, 1]} : vector<8x192xf32> to vector<8x16xf32>
    %126 = arith.truncf %123 : vector<8x16xf32> to vector<8x16xbf16>
    %127 = arith.truncf %124 : vector<8x16xf32> to vector<8x16xbf16>
    %cst_58 = arith.constant dense<0.000000e+00> : vector<8x8xf32>
    %128 = tpu.matmul %126, %127, %cst_58 {dimension_numbers = #tpu.dot_dimension_numbers<[1], [1], [0], [0], [0, 0, 1, 0], [], []>} : vector<8x16xbf16>, vector<8x16xbf16>, vector<8x8xf32> -> vector<8x8xf32>
    %cst_59 = arith.constant dense<0xFF800000> : vector<8xf32>
    %129 = vector.multi_reduction <maximumf>, %128, %cst_59 [1] : vector<8x8xf32> to vector<8xf32>
    %130 = vector.shape_cast %129 : vector<8xf32> to vector<8x1xf32>
    %131 = vector.broadcast %130 : vector<8x1xf32> to vector<8x8xf32>
    %132 = arith.subf %128, %131 : vector<8x8xf32>
    %133 = math.exp %132 : vector<8x8xf32>
    %cst_60 = arith.constant dense<0.000000e+00> : vector<8xf32>
    %134 = vector.multi_reduction <add>, %133, %cst_60 [1] : vector<8x8xf32> to vector<8xf32>
    %135 = vector.shape_cast %134 : vector<8xf32> to vector<8x1xf32>
    %136 = tpu.reciprocal %135 {approx = true} : vector<8x1xf32> -> vector<8x1xf32>
    %137 = vector.broadcast %136 : vector<8x1xf32> to vector<8x8xf32>
    %138 = arith.mulf %133, %137 : vector<8x8xf32>
    %139 = arith.truncf %138 : vector<8x8xf32> to vector<8x8xbf16>
    %140 = arith.truncf %125 : vector<8x16xf32> to vector<8x16xbf16>
    %cst_61 = arith.constant dense<0.000000e+00> : vector<8x16xf32>
    %141 = tpu.matmul %139, %140, %cst_61 {dimension_numbers = #tpu.dot_dimension_numbers<[1], [0], [0], [1], [0, 0, 1, 1], [], []>} : vector<8x8xbf16>, vector<8x16xbf16>, vector<8x16xf32> -> vector<8x16xf32>
    %c0_62 = arith.constant 0 : index
    %c16 = arith.constant 16 : index
    %142 = vector.load %arg33[%c0_62, %c16] : memref<8x64xf32, #tpu.memory_space<vmem>>, vector<8x16xf32>
    tpu.vector_store %arg33[%c0_62, %c16], %141 {strides = array<i32>} : memref<8x64xf32, #tpu.memory_space<vmem>>, vector<8x16xf32>,
    %143 = vector.extract_strided_slice %102 {offsets = [0, 32], sizes = [8, 16], strides = [1, 1]} : vector<8x192xf32> to vector<8x16xf32>
    %144 = vector.extract_strided_slice %102 {offsets = [0, 96], sizes = [8, 16], strides = [1, 1]} : vector<8x192xf32> to vector<8x16xf32>
    %145 = vector.extract_strided_slice %102 {offsets = [0, 160], sizes = [8, 16], strides = [1, 1]} : vector<8x192xf32> to vector<8x16xf32>
    %146 = arith.truncf %143 : vector<8x16xf32> to vector<8x16xbf16>
    %147 = arith.truncf %144 : vector<8x16xf32> to vector<8x16xbf16>
    %cst_63 = arith.constant dense<0.000000e+00> : vector<8x8xf32>
    %148 = tpu.matmul %146, %147, %cst_63 {dimension_numbers = #tpu.dot_dimension_numbers<[1], [1], [0], [0], [0, 0, 1, 0], [], []>} : vector<8x16xbf16>, vector<8x16xbf16>, vector<8x8xf32> -> vector<8x8xf32>
    %cst_64 = arith.constant dense<0xFF800000> : vector<8xf32>
    %149 = vector.multi_reduction <maximumf>, %148, %cst_64 [1] : vector<8x8xf32> to vector<8xf32>
    %150 = vector.shape_cast %149 : vector<8xf32> to vector<8x1xf32>
    %151 = vector.broadcast %150 : vector<8x1xf32> to vector<8x8xf32>
    %152 = arith.subf %148, %151 : vector<8x8xf32>
    %153 = math.exp %152 : vector<8x8xf32>
    %cst_65 = arith.constant dense<0.000000e+00> : vector<8xf32>
    %154 = vector.multi_reduction <add>, %153, %cst_65 [1] : vector<8x8xf32> to vector<8xf32>
    %155 = vector.shape_cast %154 : vector<8xf32> to vector<8x1xf32>
    %156 = tpu.reciprocal %155 {approx = true} : vector<8x1xf32> -> vector<8x1xf32>
    %157 = vector.broadcast %156 : vector<8x1xf32> to vector<8x8xf32>
    %158 = arith.mulf %153, %157 : vector<8x8xf32>
    %159 = arith.truncf %158 : vector<8x8xf32> to vector<8x8xbf16>
    %160 = arith.truncf %145 : vector<8x16xf32> to vector<8x16xbf16>
    %cst_66 = arith.constant dense<0.000000e+00> : vector<8x16xf32>
    %161 = tpu.matmul %159, %160, %cst_66 {dimension_numbers = #tpu.dot_dimension_numbers<[1], [0], [0], [1], [0, 0, 1, 1], [], []>} : vector<8x8xbf16>, vector<8x16xbf16>, vector<8x16xf32> -> vector<8x16xf32>
    %c0_67 = arith.constant 0 : index
    %c32 = arith.constant 32 : index
    %162 = vector.load %arg33[%c0_67, %c32] : memref<8x64xf32, #tpu.memory_space<vmem>>, vector<8x16xf32>
    tpu.vector_store %arg33[%c0_67, %c32], %161 {strides = array<i32>} : memref<8x64xf32, #tpu.memory_space<vmem>>, vector<8x16xf32>,
    %163 = vector.extract_strided_slice %102 {offsets = [0, 48], sizes = [8, 16], strides = [1, 1]} : vector<8x192xf32> to vector<8x16xf32>
    %164 = vector.extract_strided_slice %102 {offsets = [0, 112], sizes = [8, 16], strides = [1, 1]} : vector<8x192xf32> to vector<8x16xf32>
    %165 = vector.extract_strided_slice %102 {offsets = [0, 176], sizes = [8, 16], strides = [1, 1]} : vector<8x192xf32> to vector<8x16xf32>
    %166 = arith.truncf %163 : vector<8x16xf32> to vector<8x16xbf16>
    %167 = arith.truncf %164 : vector<8x16xf32> to vector<8x16xbf16>
    %cst_68 = arith.constant dense<0.000000e+00> : vector<8x8xf32>
    %168 = tpu.matmul %166, %167, %cst_68 {dimension_numbers = #tpu.dot_dimension_numbers<[1], [1], [0], [0], [0, 0, 1, 0], [], []>} : vector<8x16xbf16>, vector<8x16xbf16>, vector<8x8xf32> -> vector<8x8xf32>
    %cst_69 = arith.constant dense<0xFF800000> : vector<8xf32>
    %169 = vector.multi_reduction <maximumf>, %168, %cst_69 [1] : vector<8x8xf32> to vector<8xf32>
    %170 = vector.shape_cast %169 : vector<8xf32> to vector<8x1xf32>
    %171 = vector.broadcast %170 : vector<8x1xf32> to vector<8x8xf32>
    %172 = arith.subf %168, %171 : vector<8x8xf32>
    %173 = math.exp %172 : vector<8x8xf32>
    %cst_70 = arith.constant dense<0.000000e+00> : vector<8xf32>
    %174 = vector.multi_reduction <add>, %173, %cst_70 [1] : vector<8x8xf32> to vector<8xf32>
    %175 = vector.shape_cast %174 : vector<8xf32> to vector<8x1xf32>
    %176 = tpu.reciprocal %175 {approx = true} : vector<8x1xf32> -> vector<8x1xf32>
    %177 = vector.broadcast %176 : vector<8x1xf32> to vector<8x8xf32>
    %178 = arith.mulf %173, %177 : vector<8x8xf32>
    %179 = arith.truncf %178 : vector<8x8xf32> to vector<8x8xbf16>
    %180 = arith.truncf %165 : vector<8x16xf32> to vector<8x16xbf16>
    %cst_71 = arith.constant dense<0.000000e+00> : vector<8x16xf32>
    %181 = tpu.matmul %179, %180, %cst_71 {dimension_numbers = #tpu.dot_dimension_numbers<[1], [0], [0], [1], [0, 0, 1, 1], [], []>} : vector<8x8xbf16>, vector<8x16xbf16>, vector<8x16xf32> -> vector<8x16xf32>
    %c0_72 = arith.constant 0 : index
    %c48 = arith.constant 48 : index
    %182 = vector.load %arg33[%c0_72, %c48] : memref<8x64xf32, #tpu.memory_space<vmem>>, vector<8x16xf32>
    tpu.vector_store %arg33[%c0_72, %c48], %181 {strides = array<i32>} : memref<8x64xf32, #tpu.memory_space<vmem>>, vector<8x16xf32>,
    %c0_73 = arith.constant 0 : index
    %c0_74 = arith.constant 0 : index
    %183 = vector.load %arg33[%c0_73, %c0_74] : memref<8x64xf32, #tpu.memory_space<vmem>>, vector<8x64xf32>
    %184 = arith.truncf %183 : vector<8x64xf32> to vector<8x64xbf16>
    %cst_75 = arith.constant dense<0.000000e+00> : vector<8x32xf32>
    %185 = tpu.matmul %184, %17, %cst_75 {dimension_numbers = #tpu.dot_dimension_numbers<[1], [0], [0], [1], [0, 0, 1, 1], [], []>} : vector<8x64xbf16>, vector<64x32xbf16>, vector<8x32xf32> -> vector<8x32xf32>
    %186 = vector.broadcast %19 : vector<1x32xf32> to vector<8x32xf32>
    %187 = arith.addf %185, %186 : vector<8x32xf32>
    %188 = arith.addf %187, %3 : vector<8x32xf32>
    %c0_76 = arith.constant 0 : index
    %c0_77 = arith.constant 0 : index
    %c0_78 = arith.constant 0 : index
    %189 = vector.load %arg13[%c0_76, %c0_77, %c0_78] : memref<1x2x32xf32, #tpu.memory_space<vmem>>, vector<1x2x32xf32>
    %190 = vector.shape_cast %189 : vector<1x2x32xf32> to vector<2x32xf32>
    %c0_79 = arith.constant 0 : index
    %c0_80 = arith.constant 0 : index
    %c0_81 = arith.constant 0 : index
    %191 = vector.load %arg14[%c0_79, %c0_80, %c0_81] : memref<1x32x64xbf16, #tpu.memory_space<vmem>>, vector<1x32x64xbf16>
    %192 = vector.shape_cast %191 : vector<1x32x64xbf16> to vector<32x64xbf16>
    %c0_82 = arith.constant 0 : index
    %c0_83 = arith.constant 0 : index
    %c0_84 = arith.constant 0 : index
    %193 = vector.load %arg15[%c0_82, %c0_83, %c0_84] : memref<1x1x64xf32, #tpu.memory_space<vmem>>, vector<1x1x64xf32>
    %194 = vector.shape_cast %193 : vector<1x1x64xf32> to vector<1x64xf32>
    %c0_85 = arith.constant 0 : index
    %c0_86 = arith.constant 0 : index
    %c0_87 = arith.constant 0 : index
    %195 = vector.load %arg16[%c0_85, %c0_86, %c0_87] : memref<1x3x32xf32, #tpu.memory_space<vmem>>, vector<1x3x32xf32>
    %196 = vector.shape_cast %195 : vector<1x3x32xf32> to vector<3x32xf32>
    %c0_88 = arith.constant 0 : index
    %c0_89 = arith.constant 0 : index
    %c0_90 = arith.constant 0 : index
    %197 = vector.load %arg17[%c0_88, %c0_89, %c0_90] : memref<1x1x32xf32, #tpu.memory_space<vmem>>, vector<1x1x32xf32>
    %198 = vector.shape_cast %197 : vector<1x1x32xf32> to vector<1x32xf32>
    %c0_91 = arith.constant 0 : index
    %c0_92 = arith.constant 0 : index
    %c0_93 = arith.constant 0 : index
    %199 = vector.load %arg18[%c0_91, %c0_92, %c0_93] : memref<1x32x32xbf16, #tpu.memory_space<vmem>>, vector<1x32x32xbf16>
    %200 = vector.shape_cast %199 : vector<1x32x32xbf16> to vector<32x32xbf16>
    %c0_94 = arith.constant 0 : index
    %c0_95 = arith.constant 0 : index
    %c0_96 = arith.constant 0 : index
    %201 = vector.load %arg19[%c0_94, %c0_95, %c0_96] : memref<1x1x32xf32, #tpu.memory_space<vmem>>, vector<1x1x32xf32>
    %202 = vector.shape_cast %201 : vector<1x1x32xf32> to vector<1x32xf32>
    %cst_97 = arith.constant dense<0.000000e+00> : vector<8xf32>
    %203 = vector.multi_reduction <add>, %188, %cst_97 [1] : vector<8x32xf32> to vector<8xf32>
    %204 = vector.shape_cast %203 : vector<8xf32> to vector<8x1xf32>
    %cst_98 = arith.constant 3.200000e+01 : f32
    %205 = vector.broadcast %cst_98 : f32 to vector<8x1xf32>
    %206 = arith.divf %204, %205 : vector<8x1xf32>
    %207 = vector.broadcast %206 : vector<8x1xf32> to vector<8x32xf32>
    %208 = arith.subf %188, %207 : vector<8x32xf32>
    %209 = arith.mulf %208, %208 : vector<8x32xf32>
    %cst_99 = arith.constant dense<0.000000e+00> : vector<8xf32>
    %210 = vector.multi_reduction <add>, %209, %cst_99 [1] : vector<8x32xf32> to vector<8xf32>
    %211 = vector.shape_cast %210 : vector<8xf32> to vector<8x1xf32>
    %cst_100 = arith.constant 3.200000e+01 : f32
    %212 = vector.broadcast %cst_100 : f32 to vector<8x1xf32>
    %213 = arith.divf %211, %212 : vector<8x1xf32>
    %214 = vector.broadcast %206 : vector<8x1xf32> to vector<8x32xf32>
    %215 = arith.subf %188, %214 : vector<8x32xf32>
    %cst_101 = arith.constant 9.99999974E-6 : f32
    %216 = vector.broadcast %cst_101 : f32 to vector<8x1xf32>
    %217 = arith.addf %213, %216 : vector<8x1xf32>
    %218 = math.rsqrt %217 : vector<8x1xf32>
    %219 = vector.broadcast %218 : vector<8x1xf32> to vector<8x32xf32>
    %220 = arith.mulf %215, %219 : vector<8x32xf32>
    %221 = vector.extract_strided_slice %190 {offsets = [0, 0], sizes = [1, 32], strides = [1, 1]} : vector<2x32xf32> to vector<1x32xf32>
    %222 = vector.broadcast %221 : vector<1x32xf32> to vector<8x32xf32>
    %223 = arith.mulf %220, %222 : vector<8x32xf32>
    %224 = vector.extract_strided_slice %190 {offsets = [1, 0], sizes = [1, 32], strides = [1, 1]} : vector<2x32xf32> to vector<1x32xf32>
    %225 = vector.broadcast %224 : vector<1x32xf32> to vector<8x32xf32>
    %226 = arith.addf %223, %225 : vector<8x32xf32>
    %227 = arith.truncf %226 : vector<8x32xf32> to vector<8x32xbf16>
    %cst_102 = arith.constant dense<0.000000e+00> : vector<8x64xf32>
    %228 = tpu.matmul %227, %192, %cst_102 {dimension_numbers = #tpu.dot_dimension_numbers<[1], [0], [0], [1], [0, 0, 1, 1], [], []>} : vector<8x32xbf16>, vector<32x64xbf16>, vector<8x64xf32> -> vector<8x64xf32>
    %229 = vector.broadcast %194 : vector<1x64xf32> to vector<8x64xf32>
    %230 = arith.addf %228, %229 : vector<8x64xf32>
    %231 = vector.extract_strided_slice %230 {offsets = [0, 0], sizes = [8, 32], strides = [1, 1]} : vector<8x64xf32> to vector<8x32xf32>
    %232 = vector.extract_strided_slice %230 {offsets = [0, 32], sizes = [8, 32], strides = [1, 1]} : vector<8x64xf32> to vector<8x32xf32>
    %cst_103 = arith.constant 0.000000e+00 : f32
    %233 = vector.broadcast %cst_103 : f32 to vector<8x32xf32>
    %234 = arith.subf %233, %232 : vector<8x32xf32>
    %235 = math.exp %234 : vector<8x32xf32>
    %cst_104 = arith.constant 1.000000e+00 : f32
    %236 = vector.broadcast %cst_104 : f32 to vector<8x32xf32>
    %237 = arith.addf %236, %235 : vector<8x32xf32>
    %cst_105 = arith.constant 1.000000e+00 : f32
    %238 = vector.broadcast %cst_105 : f32 to vector<8x32xf32>
    %239 = arith.divf %238, %237 : vector<8x32xf32>
    %240 = arith.mulf %231, %239 : vector<8x32xf32>
    %cst_106 = arith.constant 0.000000e+00 : f32
    %241 = vector.broadcast %cst_106 : f32 to vector<1x32xf32>
    %242 = vector.extract_strided_slice %240 {offsets = [0, 0], sizes = [7, 32], strides = [1, 1]} : vector<8x32xf32> to vector<7x32xf32>
    %243 = tpu.concatenate %241, %242 in 0 : vector<1x32xf32>, vector<7x32xf32> -> vector<8x32xf32>
    %244 = vector.extract_strided_slice %240 {offsets = [1, 0], sizes = [7, 32], strides = [1, 1]} : vector<8x32xf32> to vector<7x32xf32>
    %245 = tpu.concatenate %244, %241 in 0 : vector<7x32xf32>, vector<1x32xf32> -> vector<8x32xf32>
    %246 = vector.extract_strided_slice %196 {offsets = [0, 0], sizes = [1, 32], strides = [1, 1]} : vector<3x32xf32> to vector<1x32xf32>
    %247 = vector.broadcast %246 : vector<1x32xf32> to vector<8x32xf32>
    %248 = arith.mulf %243, %247 : vector<8x32xf32>
    %249 = vector.extract_strided_slice %196 {offsets = [1, 0], sizes = [1, 32], strides = [1, 1]} : vector<3x32xf32> to vector<1x32xf32>
    %250 = vector.broadcast %249 : vector<1x32xf32> to vector<8x32xf32>
    %251 = arith.mulf %240, %250 : vector<8x32xf32>
    %252 = arith.addf %248, %251 : vector<8x32xf32>
    %253 = vector.extract_strided_slice %196 {offsets = [2, 0], sizes = [1, 32], strides = [1, 1]} : vector<3x32xf32> to vector<1x32xf32>
    %254 = vector.broadcast %253 : vector<1x32xf32> to vector<8x32xf32>
    %255 = arith.mulf %245, %254 : vector<8x32xf32>
    %256 = arith.addf %252, %255 : vector<8x32xf32>
    %257 = vector.broadcast %198 : vector<1x32xf32> to vector<8x32xf32>
    %258 = arith.addf %256, %257 : vector<8x32xf32>
    %cst_107 = arith.constant 0.000000e+00 : f32
    %259 = vector.broadcast %cst_107 : f32 to vector<8x32xf32>
    %260 = arith.subf %259, %258 : vector<8x32xf32>
    %261 = math.exp %260 : vector<8x32xf32>
    %cst_108 = arith.constant 1.000000e+00 : f32
    %262 = vector.broadcast %cst_108 : f32 to vector<8x32xf32>
    %263 = arith.addf %262, %261 : vector<8x32xf32>
    %cst_109 = arith.constant 1.000000e+00 : f32
    %264 = vector.broadcast %cst_109 : f32 to vector<8x32xf32>
    %265 = arith.divf %264, %263 : vector<8x32xf32>
    %266 = arith.mulf %258, %265 : vector<8x32xf32>
    %267 = arith.truncf %266 : vector<8x32xf32> to vector<8x32xbf16>
    %cst_110 = arith.constant dense<0.000000e+00> : vector<8x32xf32>
    %268 = tpu.matmul %267, %200, %cst_110 {dimension_numbers = #tpu.dot_dimension_numbers<[1], [0], [0], [1], [0, 0, 1, 1], [], []>} : vector<8x32xbf16>, vector<32x32xbf16>, vector<8x32xf32> -> vector<8x32xf32>
    %269 = vector.broadcast %202 : vector<1x32xf32> to vector<8x32xf32>
    %270 = arith.addf %268, %269 : vector<8x32xf32>
    %271 = arith.addf %270, %188 : vector<8x32xf32>
    %c0_111 = arith.constant 0 : index
    %c0_112 = arith.constant 0 : index
    %c0_113 = arith.constant 0 : index
    %272 = vector.load %arg20[%c0_111, %c0_112, %c0_113] : memref<1x2x32xf32, #tpu.memory_space<vmem>>, vector<1x2x32xf32>
    %273 = vector.shape_cast %272 : vector<1x2x32xf32> to vector<2x32xf32>
    %c0_114 = arith.constant 0 : index
    %c0_115 = arith.constant 0 : index
    %c0_116 = arith.constant 0 : index
    %274 = vector.load %arg21[%c0_114, %c0_115, %c0_116] : memref<1x32x64xbf16, #tpu.memory_space<vmem>>, vector<1x32x64xbf16>
    %275 = vector.shape_cast %274 : vector<1x32x64xbf16> to vector<32x64xbf16>
    %c0_117 = arith.constant 0 : index
    %c0_118 = arith.constant 0 : index
    %c0_119 = arith.constant 0 : index
    %276 = vector.load %arg22[%c0_117, %c0_118, %c0_119] : memref<1x1x64xf32, #tpu.memory_space<vmem>>, vector<1x1x64xf32>
    %277 = vector.shape_cast %276 : vector<1x1x64xf32> to vector<1x64xf32>
    %c0_120 = arith.constant 0 : index
    %c0_121 = arith.constant 0 : index
    %c0_122 = arith.constant 0 : index
    %278 = vector.load %arg23[%c0_120, %c0_121, %c0_122] : memref<1x2x64xf32, #tpu.memory_space<vmem>>, vector<1x2x64xf32>
    %279 = vector.shape_cast %278 : vector<1x2x64xf32> to vector<2x64xf32>
    %c0_123 = arith.constant 0 : index
    %c0_124 = arith.constant 0 : index
    %c0_125 = arith.constant 0 : index
    %280 = vector.load %arg24[%c0_123, %c0_124, %c0_125] : memref<1x3x64xf32, #tpu.memory_space<vmem>>, vector<1x3x64xf32>
    %281 = vector.shape_cast %280 : vector<1x3x64xf32> to vector<3x64xf32>
    %c0_126 = arith.constant 0 : index
    %c0_127 = arith.constant 0 : index
    %c0_128 = arith.constant 0 : index
    %282 = vector.load %arg25[%c0_126, %c0_127, %c0_128] : memref<1x1x64xf32, #tpu.memory_space<vmem>>, vector<1x1x64xf32>
    %283 = vector.shape_cast %282 : vector<1x1x64xf32> to vector<1x64xf32>
    %c0_129 = arith.constant 0 : index
    %c0_130 = arith.constant 0 : index
    %c0_131 = arith.constant 0 : index
    %284 = vector.load %arg26[%c0_129, %c0_130, %c0_131] : memref<1x2x64xf32, #tpu.memory_space<vmem>>, vector<1x2x64xf32>
    %285 = vector.shape_cast %284 : vector<1x2x64xf32> to vector<2x64xf32>
    %c0_132 = arith.constant 0 : index
    %c0_133 = arith.constant 0 : index
    %c0_134 = arith.constant 0 : index
    %286 = vector.load %arg27[%c0_132, %c0_133, %c0_134] : memref<1x64x32xbf16, #tpu.memory_space<vmem>>, vector<1x64x32xbf16>
    %287 = vector.shape_cast %286 : vector<1x64x32xbf16> to vector<64x32xbf16>
    %c0_135 = arith.constant 0 : index
    %c0_136 = arith.constant 0 : index
    %c0_137 = arith.constant 0 : index
    %288 = vector.load %arg28[%c0_135, %c0_136, %c0_137] : memref<1x1x32xf32, #tpu.memory_space<vmem>>, vector<1x1x32xf32>
    %289 = vector.shape_cast %288 : vector<1x1x32xf32> to vector<1x32xf32>
    %c0_138 = arith.constant 0 : index
    %c0_139 = arith.constant 0 : index
    %c0_140 = arith.constant 0 : index
    %290 = vector.load %arg29[%c0_138, %c0_139, %c0_140] : memref<1x2x32xf32, #tpu.memory_space<vmem>>, vector<1x2x32xf32>
    %291 = vector.shape_cast %290 : vector<1x2x32xf32> to vector<2x32xf32>
    %cst_141 = arith.constant dense<0.000000e+00> : vector<8xf32>
    %292 = vector.multi_reduction <add>, %271, %cst_141 [1] : vector<8x32xf32> to vector<8xf32>
    %293 = vector.shape_cast %292 : vector<8xf32> to vector<8x1xf32>
    %cst_142 = arith.constant 3.200000e+01 : f32
    %294 = vector.broadcast %cst_142 : f32 to vector<8x1xf32>
    %295 = arith.divf %293, %294 : vector<8x1xf32>
    %296 = vector.broadcast %295 : vector<8x1xf32> to vector<8x32xf32>
    %297 = arith.subf %271, %296 : vector<8x32xf32>
    %298 = arith.mulf %297, %297 : vector<8x32xf32>
    %cst_143 = arith.constant dense<0.000000e+00> : vector<8xf32>
    %299 = vector.multi_reduction <add>, %298, %cst_143 [1] : vector<8x32xf32> to vector<8xf32>
    %300 = vector.shape_cast %299 : vector<8xf32> to vector<8x1xf32>
    %cst_144 = arith.constant 3.200000e+01 : f32
    %301 = vector.broadcast %cst_144 : f32 to vector<8x1xf32>
    %302 = arith.divf %300, %301 : vector<8x1xf32>
    %303 = vector.broadcast %295 : vector<8x1xf32> to vector<8x32xf32>
    %304 = arith.subf %271, %303 : vector<8x32xf32>
    %cst_145 = arith.constant 9.99999974E-6 : f32
    %305 = vector.broadcast %cst_145 : f32 to vector<8x1xf32>
    %306 = arith.addf %302, %305 : vector<8x1xf32>
    %307 = math.rsqrt %306 : vector<8x1xf32>
    %308 = vector.broadcast %307 : vector<8x1xf32> to vector<8x32xf32>
    %309 = arith.mulf %304, %308 : vector<8x32xf32>
    %310 = vector.extract_strided_slice %273 {offsets = [0, 0], sizes = [1, 32], strides = [1, 1]} : vector<2x32xf32> to vector<1x32xf32>
    %311 = vector.broadcast %310 : vector<1x32xf32> to vector<8x32xf32>
    %312 = arith.mulf %309, %311 : vector<8x32xf32>
    %313 = vector.extract_strided_slice %273 {offsets = [1, 0], sizes = [1, 32], strides = [1, 1]} : vector<2x32xf32> to vector<1x32xf32>
    %314 = vector.broadcast %313 : vector<1x32xf32> to vector<8x32xf32>
    %315 = arith.addf %312, %314 : vector<8x32xf32>
    %316 = arith.truncf %315 : vector<8x32xf32> to vector<8x32xbf16>
    %cst_146 = arith.constant dense<0.000000e+00> : vector<8x64xf32>
    %317 = tpu.matmul %316, %275, %cst_146 {dimension_numbers = #tpu.dot_dimension_numbers<[1], [0], [0], [1], [0, 0, 1, 1], [], []>} : vector<8x32xbf16>, vector<32x64xbf16>, vector<8x64xf32> -> vector<8x64xf32>
    %318 = vector.broadcast %277 : vector<1x64xf32> to vector<8x64xf32>
    %319 = arith.addf %317, %318 : vector<8x64xf32>
    %cst_147 = arith.constant 5.000000e-01 : f32
    %320 = vector.broadcast %cst_147 : f32 to vector<8x64xf32>
    %321 = arith.mulf %320, %319 : vector<8x64xf32>
    %cst_148 = arith.constant 0.707106769 : f32
    %322 = vector.broadcast %cst_148 : f32 to vector<8x64xf32>
    %323 = arith.mulf %319, %322 : vector<8x64xf32>
    %cst_149 = arith.constant 0.000000e+00 : f32
    %324 = vector.broadcast %cst_149 : f32 to vector<8x64xf32>
    %325 = arith.cmpf oge, %323, %324 : vector<8x64xf32>
    %cst_150 = arith.constant 1.000000e+00 : f32
    %cst_151 = arith.constant -1.000000e+00 : f32
    %326 = vector.broadcast %cst_150 : f32 to vector<8x64xf32>
    %327 = vector.broadcast %cst_151 : f32 to vector<8x64xf32>
    %328 = arith.select %325, %326, %327 : vector<8x64xi1>, vector<8x64xf32>
    %329 = math.absf %323 : vector<8x64xf32>
    %cst_152 = arith.constant 0.327591091 : f32
    %330 = vector.broadcast %cst_152 : f32 to vector<8x64xf32>
    %331 = arith.mulf %330, %329 : vector<8x64xf32>
    %cst_153 = arith.constant 1.000000e+00 : f32
    %332 = vector.broadcast %cst_153 : f32 to vector<8x64xf32>
    %333 = arith.addf %332, %331 : vector<8x64xf32>
    %cst_154 = arith.constant 1.000000e+00 : f32
    %334 = vector.broadcast %cst_154 : f32 to vector<8x64xf32>
    %335 = arith.divf %334, %333 : vector<8x64xf32>
    %cst_155 = arith.constant 1.06140542 : f32
    %336 = vector.broadcast %cst_155 : f32 to vector<8x64xf32>
    %337 = arith.mulf %336, %335 : vector<8x64xf32>
    %cst_156 = arith.constant -1.45315206 : f32
    %338 = vector.broadcast %cst_156 : f32 to vector<8x64xf32>
    %339 = arith.addf %337, %338 : vector<8x64xf32>
    %340 = arith.mulf %339, %335 : vector<8x64xf32>
    %cst_157 = arith.constant 1.42141378 : f32
    %341 = vector.broadcast %cst_157 : f32 to vector<8x64xf32>
    %342 = arith.addf %340, %341 : vector<8x64xf32>
    %343 = arith.mulf %342, %335 : vector<8x64xf32>
    %cst_158 = arith.constant -0.284496725 : f32
    %344 = vector.broadcast %cst_158 : f32 to vector<8x64xf32>
    %345 = arith.addf %343, %344 : vector<8x64xf32>
    %346 = arith.mulf %345, %335 : vector<8x64xf32>
    %cst_159 = arith.constant 0.254829586 : f32
    %347 = vector.broadcast %cst_159 : f32 to vector<8x64xf32>
    %348 = arith.addf %346, %347 : vector<8x64xf32>
    %349 = arith.mulf %348, %335 : vector<8x64xf32>
    %cst_160 = arith.constant 0.000000e+00 : f32
    %350 = vector.broadcast %cst_160 : f32 to vector<8x64xf32>
    %351 = arith.subf %350, %329 : vector<8x64xf32>
    %352 = arith.mulf %351, %329 : vector<8x64xf32>
    %353 = math.exp %352 : vector<8x64xf32>
    %354 = arith.mulf %349, %353 : vector<8x64xf32>
    %cst_161 = arith.constant 1.000000e+00 : f32
    %355 = vector.broadcast %cst_161 : f32 to vector<8x64xf32>
    %356 = arith.subf %355, %354 : vector<8x64xf32>
    %357 = arith.mulf %328, %356 : vector<8x64xf32>
    %cst_162 = arith.constant 1.000000e+00 : f32
    %358 = vector.broadcast %cst_162 : f32 to vector<8x64xf32>
    %359 = arith.addf %358, %357 : vector<8x64xf32>
    %360 = arith.mulf %321, %359 : vector<8x64xf32>
    %361 = vector.extract_strided_slice %279 {offsets = [0, 0], sizes = [1, 64], strides = [1, 1]} : vector<2x64xf32> to vector<1x64xf32>
    %362 = vector.broadcast %361 : vector<1x64xf32> to vector<8x64xf32>
    %363 = arith.mulf %360, %362 : vector<8x64xf32>
    %364 = vector.extract_strided_slice %279 {offsets = [1, 0], sizes = [1, 64], strides = [1, 1]} : vector<2x64xf32> to vector<1x64xf32>
    %365 = vector.broadcast %364 : vector<1x64xf32> to vector<8x64xf32>
    %366 = arith.addf %363, %365 : vector<8x64xf32>
    %cst_163 = arith.constant 0.000000e+00 : f32
    %367 = vector.broadcast %cst_163 : f32 to vector<1x64xf32>
    %368 = vector.extract_strided_slice %366 {offsets = [0, 0], sizes = [7, 64], strides = [1, 1]} : vector<8x64xf32> to vector<7x64xf32>
    %369 = tpu.concatenate %367, %368 in 0 : vector<1x64xf32>, vector<7x64xf32> -> vector<8x64xf32>
    %370 = vector.extract_strided_slice %366 {offsets = [1, 0], sizes = [7, 64], strides = [1, 1]} : vector<8x64xf32> to vector<7x64xf32>
    %371 = tpu.concatenate %370, %367 in 0 : vector<7x64xf32>, vector<1x64xf32> -> vector<8x64xf32>
    %372 = vector.extract_strided_slice %281 {offsets = [0, 0], sizes = [1, 64], strides = [1, 1]} : vector<3x64xf32> to vector<1x64xf32>
    %373 = vector.broadcast %372 : vector<1x64xf32> to vector<8x64xf32>
    %374 = arith.mulf %369, %373 : vector<8x64xf32>
    %375 = vector.extract_strided_slice %281 {offsets = [1, 0], sizes = [1, 64], strides = [1, 1]} : vector<3x64xf32> to vector<1x64xf32>
    %376 = vector.broadcast %375 : vector<1x64xf32> to vector<8x64xf32>
    %377 = arith.mulf %366, %376 : vector<8x64xf32>
    %378 = arith.addf %374, %377 : vector<8x64xf32>
    %379 = vector.extract_strided_slice %281 {offsets = [2, 0], sizes = [1, 64], strides = [1, 1]} : vector<3x64xf32> to vector<1x64xf32>
    %380 = vector.broadcast %379 : vector<1x64xf32> to vector<8x64xf32>
    %381 = arith.mulf %371, %380 : vector<8x64xf32>
    %382 = arith.addf %378, %381 : vector<8x64xf32>
    %383 = vector.broadcast %283 : vector<1x64xf32> to vector<8x64xf32>
    %384 = arith.addf %382, %383 : vector<8x64xf32>
    %cst_164 = arith.constant 5.000000e-01 : f32
    %385 = vector.broadcast %cst_164 : f32 to vector<8x64xf32>
    %386 = arith.mulf %385, %384 : vector<8x64xf32>
    %cst_165 = arith.constant 0.707106769 : f32
    %387 = vector.broadcast %cst_165 : f32 to vector<8x64xf32>
    %388 = arith.mulf %384, %387 : vector<8x64xf32>
    %cst_166 = arith.constant 0.000000e+00 : f32
    %389 = vector.broadcast %cst_166 : f32 to vector<8x64xf32>
    %390 = arith.cmpf oge, %388, %389 : vector<8x64xf32>
    %cst_167 = arith.constant 1.000000e+00 : f32
    %cst_168 = arith.constant -1.000000e+00 : f32
    %391 = vector.broadcast %cst_167 : f32 to vector<8x64xf32>
    %392 = vector.broadcast %cst_168 : f32 to vector<8x64xf32>
    %393 = arith.select %390, %391, %392 : vector<8x64xi1>, vector<8x64xf32>
    %394 = math.absf %388 : vector<8x64xf32>
    %cst_169 = arith.constant 0.327591091 : f32
    %395 = vector.broadcast %cst_169 : f32 to vector<8x64xf32>
    %396 = arith.mulf %395, %394 : vector<8x64xf32>
    %cst_170 = arith.constant 1.000000e+00 : f32
    %397 = vector.broadcast %cst_170 : f32 to vector<8x64xf32>
    %398 = arith.addf %397, %396 : vector<8x64xf32>
    %cst_171 = arith.constant 1.000000e+00 : f32
    %399 = vector.broadcast %cst_171 : f32 to vector<8x64xf32>
    %400 = arith.divf %399, %398 : vector<8x64xf32>
    %cst_172 = arith.constant 1.06140542 : f32
    %401 = vector.broadcast %cst_172 : f32 to vector<8x64xf32>
    %402 = arith.mulf %401, %400 : vector<8x64xf32>
    %cst_173 = arith.constant -1.45315206 : f32
    %403 = vector.broadcast %cst_173 : f32 to vector<8x64xf32>
    %404 = arith.addf %402, %403 : vector<8x64xf32>
    %405 = arith.mulf %404, %400 : vector<8x64xf32>
    %cst_174 = arith.constant 1.42141378 : f32
    %406 = vector.broadcast %cst_174 : f32 to vector<8x64xf32>
    %407 = arith.addf %405, %406 : vector<8x64xf32>
    %408 = arith.mulf %407, %400 : vector<8x64xf32>
    %cst_175 = arith.constant -0.284496725 : f32
    %409 = vector.broadcast %cst_175 : f32 to vector<8x64xf32>
    %410 = arith.addf %408, %409 : vector<8x64xf32>
    %411 = arith.mulf %410, %400 : vector<8x64xf32>
    %cst_176 = arith.constant 0.254829586 : f32
    %412 = vector.broadcast %cst_176 : f32 to vector<8x64xf32>
    %413 = arith.addf %411, %412 : vector<8x64xf32>
    %414 = arith.mulf %413, %400 : vector<8x64xf32>
    %cst_177 = arith.constant 0.000000e+00 : f32
    %415 = vector.broadcast %cst_177 : f32 to vector<8x64xf32>
    %416 = arith.subf %415, %394 : vector<8x64xf32>
    %417 = arith.mulf %416, %394 : vector<8x64xf32>
    %418 = math.exp %417 : vector<8x64xf32>
    %419 = arith.mulf %414, %418 : vector<8x64xf32>
    %cst_178 = arith.constant 1.000000e+00 : f32
    %420 = vector.broadcast %cst_178 : f32 to vector<8x64xf32>
    %421 = arith.subf %420, %419 : vector<8x64xf32>
    %422 = arith.mulf %393, %421 : vector<8x64xf32>
    %cst_179 = arith.constant 1.000000e+00 : f32
    %423 = vector.broadcast %cst_179 : f32 to vector<8x64xf32>
    %424 = arith.addf %423, %422 : vector<8x64xf32>
    %425 = arith.mulf %386, %424 : vector<8x64xf32>
    %426 = vector.extract_strided_slice %285 {offsets = [0, 0], sizes = [1, 64], strides = [1, 1]} : vector<2x64xf32> to vector<1x64xf32>
    %427 = vector.broadcast %426 : vector<1x64xf32> to vector<8x64xf32>
    %428 = arith.mulf %425, %427 : vector<8x64xf32>
    %429 = vector.extract_strided_slice %285 {offsets = [1, 0], sizes = [1, 64], strides = [1, 1]} : vector<2x64xf32> to vector<1x64xf32>
    %430 = vector.broadcast %429 : vector<1x64xf32> to vector<8x64xf32>
    %431 = arith.addf %428, %430 : vector<8x64xf32>
    %432 = arith.addf %366, %431 : vector<8x64xf32>
    %433 = arith.truncf %432 : vector<8x64xf32> to vector<8x64xbf16>
    %cst_180 = arith.constant dense<0.000000e+00> : vector<8x32xf32>
    %434 = tpu.matmul %433, %287, %cst_180 {dimension_numbers = #tpu.dot_dimension_numbers<[1], [0], [0], [1], [0, 0, 1, 1], [], []>} : vector<8x64xbf16>, vector<64x32xbf16>, vector<8x32xf32> -> vector<8x32xf32>
    %435 = vector.broadcast %289 : vector<1x32xf32> to vector<8x32xf32>
    %436 = arith.addf %434, %435 : vector<8x32xf32>
    %437 = vector.extract_strided_slice %291 {offsets = [0, 0], sizes = [1, 32], strides = [1, 1]} : vector<2x32xf32> to vector<1x32xf32>
    %438 = vector.broadcast %437 : vector<1x32xf32> to vector<8x32xf32>
    %439 = arith.mulf %436, %438 : vector<8x32xf32>
    %440 = vector.extract_strided_slice %291 {offsets = [1, 0], sizes = [1, 32], strides = [1, 1]} : vector<2x32xf32> to vector<1x32xf32>
    %441 = vector.broadcast %440 : vector<1x32xf32> to vector<8x32xf32>
    %442 = arith.addf %439, %441 : vector<8x32xf32>
    %443 = arith.addf %442, %271 : vector<8x32xf32>
    %c0_181 = arith.constant 0 : index
    %c0_182 = arith.constant 0 : index
    %444 = vector.load %arg32[%c0_181, %c0_182] : memref<8x32xf32, #tpu.memory_space<vmem>>, vector<8x32xf32>
    tpu.vector_store %arg32[%c0_181, %c0_182], %443 {strides = array<i32>} : memref<8x32xf32, #tpu.memory_space<vmem>>, vector<8x32xf32>,
    %c2_i32 = arith.constant 2 : i32
    %445 = arith.cmpi slt, %arg1, %c2_i32 : i32
    %c2_i32_183 = arith.constant 2 : i32
    %446 = arith.cmpi sge, %arg1, %c2_i32_183 : i32
    %447 = arith.ori %445, %446 : i1
    %448 = arith.extui %447 : i1 to i32
    %c0_i32_184 = arith.constant 0 : i32
    %449 = arith.cmpi ne, %448, %c0_i32_184 : i32
    scf.if %449 {
      %c0_185 = arith.constant 0 : index
      %c0_186 = arith.constant 0 : index
      %450 = vector.load %arg30[%c0_185, %c0_186] : memref<32x16xbf16, #tpu.memory_space<vmem>>, vector<32x16xbf16>
      %451 = arith.truncf %443 : vector<8x32xf32> to vector<8x32xbf16>
      %cst_187 = arith.constant dense<0.000000e+00> : vector<8x16xf32>
      %452 = tpu.matmul %451, %450, %cst_187 {dimension_numbers = #tpu.dot_dimension_numbers<[1], [0], [0], [1], [0, 0, 1, 1], [], []>} : vector<8x32xbf16>, vector<32x16xbf16>, vector<8x16xf32> -> vector<8x16xf32>
      %c0_i32_188 = arith.constant 0 : i32
      %453 = arith.cmpi eq, %arg1, %c0_i32_188 : i32
      %454 = arith.extui %453 : i1 to i32
      %c0_i32_189 = arith.constant 0 : i32
      %455 = arith.cmpi ne, %454, %c0_i32_189 : i32
      scf.if %455 {
        %c0_194 = arith.constant 0 : index
        %c0_195 = arith.constant 0 : index
        %c0_196 = arith.constant 0 : index
        %c0_197 = arith.constant 0 : index
        %465 = vector.load %arg31[%c0_194, %c0_195, %c0_196, %c0_197] : memref<1x4x8x16xf32, #tpu.memory_space<vmem>>, vector<1x1x8x16xf32>
        %466 = vector.shape_cast %465 : vector<1x1x8x16xf32> to vector<8x16xf32>
        %467 = vector.shape_cast %452 : vector<8x16xf32> to vector<1x1x8x16xf32>
        tpu.vector_store %arg31[%c0_194, %c0_195, %c0_196, %c0_197], %467 {strides = array<i32>} : memref<1x4x8x16xf32, #tpu.memory_space<vmem>>, vector<1x1x8x16xf32>,
      } else {
      }
      %c1_i32 = arith.constant 1 : i32
      %456 = arith.cmpi eq, %arg1, %c1_i32 : i32
      %457 = arith.extui %456 : i1 to i32
      %c0_i32_190 = arith.constant 0 : i32
      %458 = arith.cmpi ne, %457, %c0_i32_190 : i32
      scf.if %458 {
        %c0_194 = arith.constant 0 : index
        %c1 = arith.constant 1 : index
        %c0_195 = arith.constant 0 : index
        %c0_196 = arith.constant 0 : index
        %465 = vector.load %arg31[%c0_194, %c1, %c0_195, %c0_196] : memref<1x4x8x16xf32, #tpu.memory_space<vmem>>, vector<1x1x8x16xf32>
        %466 = vector.shape_cast %465 : vector<1x1x8x16xf32> to vector<8x16xf32>
        %467 = vector.shape_cast %452 : vector<8x16xf32> to vector<1x1x8x16xf32>
        tpu.vector_store %arg31[%c0_194, %c1, %c0_195, %c0_196], %467 {strides = array<i32>} : memref<1x4x8x16xf32, #tpu.memory_space<vmem>>, vector<1x1x8x16xf32>,
      } else {
      }
      %c2_i32_191 = arith.constant 2 : i32
      %459 = arith.cmpi eq, %arg1, %c2_i32_191 : i32
      %460 = arith.extui %459 : i1 to i32
      %c0_i32_192 = arith.constant 0 : i32
      %461 = arith.cmpi ne, %460, %c0_i32_192 : i32
      scf.if %461 {
        %c0_194 = arith.constant 0 : index
        %c2 = arith.constant 2 : index
        %c0_195 = arith.constant 0 : index
        %c0_196 = arith.constant 0 : index
        %465 = vector.load %arg31[%c0_194, %c2, %c0_195, %c0_196] : memref<1x4x8x16xf32, #tpu.memory_space<vmem>>, vector<1x1x8x16xf32>
        %466 = vector.shape_cast %465 : vector<1x1x8x16xf32> to vector<8x16xf32>
        %467 = vector.shape_cast %452 : vector<8x16xf32> to vector<1x1x8x16xf32>
        tpu.vector_store %arg31[%c0_194, %c2, %c0_195, %c0_196], %467 {strides = array<i32>} : memref<1x4x8x16xf32, #tpu.memory_space<vmem>>, vector<1x1x8x16xf32>,
      } else {
      }
      %c3_i32 = arith.constant 3 : i32
      %462 = arith.cmpi eq, %arg1, %c3_i32 : i32
      %463 = arith.extui %462 : i1 to i32
      %c0_i32_193 = arith.constant 0 : i32
      %464 = arith.cmpi ne, %463, %c0_i32_193 : i32
      scf.if %464 {
        %c0_194 = arith.constant 0 : index
        %c3 = arith.constant 3 : index
        %c0_195 = arith.constant 0 : index
        %c0_196 = arith.constant 0 : index
        %465 = vector.load %arg31[%c0_194, %c3, %c0_195, %c0_196] : memref<1x4x8x16xf32, #tpu.memory_space<vmem>>, vector<1x1x8x16xf32>
        %466 = vector.shape_cast %465 : vector<1x1x8x16xf32> to vector<8x16xf32>
        %467 = vector.shape_cast %452 : vector<8x16xf32> to vector<1x1x8x16xf32>
        tpu.vector_store %arg31[%c0_194, %c3, %c0_195, %c0_196], %467 {strides = array<i32>} : memref<1x4x8x16xf32, #tpu.memory_space<vmem>>, vector<1x1x8x16xf32>,
      } else {
      }
    } else {
    }
    return
  }
  func.func @transform_0(%arg0: i32, %arg1: i32) -> (i32, i32, i32) {
    %c0_i32 = arith.constant 0 : i32
    %c0_i32_0 = arith.constant 0 : i32
    %c0_i32_1 = arith.constant 0 : i32
    return %arg0, %c0_i32, %c0_i32_0 : i32, i32, i32
  }
  func.func @transform_1(%arg0: i32, %arg1: i32) -> (i32, i32, i32) {
    %c0_i32 = arith.constant 0 : i32
    %c0_i32_0 = arith.constant 0 : i32
    %c0_i32_1 = arith.constant 0 : i32
    %c0_i32_2 = arith.constant 0 : i32
    return %c0_i32, %c0_i32_0, %c0_i32_1 : i32, i32, i32
  }
  func.func @transform_2(%arg0: i32, %arg1: i32) -> (i32, i32, i32) {
    %c0_i32 = arith.constant 0 : i32
    %c0_i32_0 = arith.constant 0 : i32
    %c0_i32_1 = arith.constant 0 : i32
    %c0_i32_2 = arith.constant 0 : i32
    return %c0_i32, %c0_i32_0, %c0_i32_1 : i32, i32, i32
  }
  func.func @transform_3(%arg0: i32, %arg1: i32) -> (i32, i32, i32) {
    %c0_i32 = arith.constant 0 : i32
    %c0_i32_0 = arith.constant 0 : i32
    %c0_i32_1 = arith.constant 0 : i32
    return %arg1, %c0_i32, %c0_i32_0 : i32, i32, i32
  }
  func.func @transform_4(%arg0: i32, %arg1: i32) -> (i32, i32, i32) {
    %c0_i32 = arith.constant 0 : i32
    %c0_i32_0 = arith.constant 0 : i32
    %c0_i32_1 = arith.constant 0 : i32
    return %arg1, %c0_i32, %c0_i32_0 : i32, i32, i32
  }
  func.func @transform_5(%arg0: i32, %arg1: i32) -> (i32, i32, i32) {
    %c0_i32 = arith.constant 0 : i32
    %c0_i32_0 = arith.constant 0 : i32
    %c0_i32_1 = arith.constant 0 : i32
    return %arg1, %c0_i32, %c0_i32_0 : i32, i32, i32
  }
  func.func @transform_6(%arg0: i32, %arg1: i32) -> (i32, i32, i32) {
    %c0_i32 = arith.constant 0 : i32
    %c0_i32_0 = arith.constant 0 : i32
    %c0_i32_1 = arith.constant 0 : i32
    return %arg1, %c0_i32, %c0_i32_0 : i32, i32, i32
  }
  func.func @transform_7(%arg0: i32, %arg1: i32) -> (i32, i32, i32) {
    %c0_i32 = arith.constant 0 : i32
    %c0_i32_0 = arith.constant 0 : i32
    %c0_i32_1 = arith.constant 0 : i32
    return %arg1, %c0_i32, %c0_i32_0 : i32, i32, i32
  }
  func.func @transform_8(%arg0: i32, %arg1: i32) -> (i32, i32, i32) {
    %c0_i32 = arith.constant 0 : i32
    %c0_i32_0 = arith.constant 0 : i32
    %c0_i32_1 = arith.constant 0 : i32
    return %arg1, %c0_i32, %c0_i32_0 : i32, i32, i32
  }
  func.func @transform_9(%arg0: i32, %arg1: i32) -> (i32, i32, i32) {
    %c0_i32 = arith.constant 0 : i32
    %c0_i32_0 = arith.constant 0 : i32
    %c0_i32_1 = arith.constant 0 : i32
    return %arg1, %c0_i32, %c0_i32_0 : i32, i32, i32
  }
  func.func @transform_10(%arg0: i32, %arg1: i32) -> (i32, i32, i32) {
    %c0_i32 = arith.constant 0 : i32
    %c0_i32_0 = arith.constant 0 : i32
    %c0_i32_1 = arith.constant 0 : i32
    return %arg1, %c0_i32, %c0_i32_0 : i32, i32, i32
  }
  func.func @transform_11(%arg0: i32, %arg1: i32) -> (i32, i32, i32) {
    %c0_i32 = arith.constant 0 : i32
    %c0_i32_0 = arith.constant 0 : i32
    %c0_i32_1 = arith.constant 0 : i32
    return %arg1, %c0_i32, %c0_i32_0 : i32, i32, i32
  }
  func.func @transform_12(%arg0: i32, %arg1: i32) -> (i32, i32, i32) {
    %c0_i32 = arith.constant 0 : i32
    %c0_i32_0 = arith.constant 0 : i32
    %c0_i32_1 = arith.constant 0 : i32
    return %arg1, %c0_i32, %c0_i32_0 : i32, i32, i32
  }
  func.func @transform_13(%arg0: i32, %arg1: i32) -> (i32, i32, i32) {
    %c0_i32 = arith.constant 0 : i32
    %c0_i32_0 = arith.constant 0 : i32
    %c0_i32_1 = arith.constant 0 : i32
    return %arg1, %c0_i32, %c0_i32_0 : i32, i32, i32
  }
  func.func @transform_14(%arg0: i32, %arg1: i32) -> (i32, i32, i32) {
    %c0_i32 = arith.constant 0 : i32
    %c0_i32_0 = arith.constant 0 : i32
    %c0_i32_1 = arith.constant 0 : i32
    return %arg1, %c0_i32, %c0_i32_0 : i32, i32, i32
  }
  func.func @transform_15(%arg0: i32, %arg1: i32) -> (i32, i32, i32) {
    %c0_i32 = arith.constant 0 : i32
    %c0_i32_0 = arith.constant 0 : i32
    %c0_i32_1 = arith.constant 0 : i32
    return %arg1, %c0_i32, %c0_i32_0 : i32, i32, i32
  }
  func.func @transform_16(%arg0: i32, %arg1: i32) -> (i32, i32, i32) {
    %c0_i32 = arith.constant 0 : i32
    %c0_i32_0 = arith.constant 0 : i32
    %c0_i32_1 = arith.constant 0 : i32
    return %arg1, %c0_i32, %c0_i32_0 : i32, i32, i32
  }
  func.func @transform_17(%arg0: i32, %arg1: i32) -> (i32, i32, i32) {
    %c0_i32 = arith.constant 0 : i32
    %c0_i32_0 = arith.constant 0 : i32
    %c0_i32_1 = arith.constant 0 : i32
    return %arg1, %c0_i32, %c0_i32_0 : i32, i32, i32
  }
  func.func @transform_18(%arg0: i32, %arg1: i32) -> (i32, i32, i32) {
    %c0_i32 = arith.constant 0 : i32
    %c0_i32_0 = arith.constant 0 : i32
    %c0_i32_1 = arith.constant 0 : i32
    return %arg1, %c0_i32, %c0_i32_0 : i32, i32, i32
  }
  func.func @transform_19(%arg0: i32, %arg1: i32) -> (i32, i32, i32) {
    %c0_i32 = arith.constant 0 : i32
    %c0_i32_0 = arith.constant 0 : i32
    %c0_i32_1 = arith.constant 0 : i32
    return %arg1, %c0_i32, %c0_i32_0 : i32, i32, i32
  }
  func.func @transform_20(%arg0: i32, %arg1: i32) -> (i32, i32, i32) {
    %c0_i32 = arith.constant 0 : i32
    %c0_i32_0 = arith.constant 0 : i32
    %c0_i32_1 = arith.constant 0 : i32
    return %arg1, %c0_i32, %c0_i32_0 : i32, i32, i32
  }
  func.func @transform_21(%arg0: i32, %arg1: i32) -> (i32, i32, i32) {
    %c0_i32 = arith.constant 0 : i32
    %c0_i32_0 = arith.constant 0 : i32
    %c0_i32_1 = arith.constant 0 : i32
    return %arg1, %c0_i32, %c0_i32_0 : i32, i32, i32
  }
  func.func @transform_22(%arg0: i32, %arg1: i32) -> (i32, i32, i32) {
    %c0_i32 = arith.constant 0 : i32
    %c0_i32_0 = arith.constant 0 : i32
    %c0_i32_1 = arith.constant 0 : i32
    return %arg1, %c0_i32, %c0_i32_0 : i32, i32, i32
  }
  func.func @transform_23(%arg0: i32, %arg1: i32) -> (i32, i32, i32) {
    %c0_i32 = arith.constant 0 : i32
    %c0_i32_0 = arith.constant 0 : i32
    %c0_i32_1 = arith.constant 0 : i32
    return %arg1, %c0_i32, %c0_i32_0 : i32, i32, i32
  }
  func.func @transform_24(%arg0: i32, %arg1: i32) -> (i32, i32, i32) {
    %c0_i32 = arith.constant 0 : i32
    %c0_i32_0 = arith.constant 0 : i32
    %c0_i32_1 = arith.constant 0 : i32
    return %arg1, %c0_i32, %c0_i32_0 : i32, i32, i32
  }
  func.func @transform_25(%arg0: i32, %arg1: i32) -> (i32, i32, i32) {
    %c0_i32 = arith.constant 0 : i32
    %c0_i32_0 = arith.constant 0 : i32
    %c0_i32_1 = arith.constant 0 : i32
    return %arg1, %c0_i32, %c0_i32_0 : i32, i32, i32
  }
  func.func @transform_26(%arg0: i32, %arg1: i32) -> (i32, i32, i32) {
    %c0_i32 = arith.constant 0 : i32
    %c0_i32_0 = arith.constant 0 : i32
    %c0_i32_1 = arith.constant 0 : i32
    return %arg1, %c0_i32, %c0_i32_0 : i32, i32, i32
  }
  func.func @transform_27(%arg0: i32, %arg1: i32) -> (i32, i32, i32) {
    %c0_i32 = arith.constant 0 : i32
    %c0_i32_0 = arith.constant 0 : i32
    %c0_i32_1 = arith.constant 0 : i32
    return %arg1, %c0_i32, %c0_i32_0 : i32, i32, i32
  }
  func.func @transform_28(%arg0: i32, %arg1: i32) -> (i32, i32) {
    %c0_i32 = arith.constant 0 : i32
    %c0_i32_0 = arith.constant 0 : i32
    %c0_i32_1 = arith.constant 0 : i32
    return %c0_i32, %c0_i32_0 : i32, i32
  }
  func.func @transform_29(%arg0: i32, %arg1: i32) -> (i32, i32, i32, i32) {
    %c0_i32 = arith.constant 0 : i32
    %c0_i32_0 = arith.constant 0 : i32
    %c0_i32_1 = arith.constant 0 : i32
    %c0_i32_2 = arith.constant 0 : i32
    return %arg0, %c0_i32, %c0_i32_0, %c0_i32_1 : i32, i32, i32, i32
  }
}

</mosaic_0001>

<llo_original>
// kernel: tpu_custom_call.1
$region0: #{tpu_custom_call.1}
  #allocation0 [shape = 'u32[]', space=smem, size = 0x4, offset = 0x4, fixed_abs, tag = 'smem constant byte address 0x4 - core index']
  #allocation1 [shape = 'u32[144,128]{1,0:T(1,128)}', space=vmem, size = 0x12000, scoped, tag = 'internal scratch']
  %s0 = inlined_call_operand.hbm [shape: f32[8,32], index: 0, kind: input, shape index: {}]
  %s1 = inlined_call_operand.hbm [shape: f32[8,32], index: 1, kind: output, shape index: {}]
  %s2 = sld [smem:[#allocation0]]
  $region18: #{tpu_custom_call.1} parent=0
    _
  %s4 = ssub.s32 1, %s2
  %s5 = scalar_select 0, %s4, %s2
  $region1: #{tpu_custom_call.1} parent=0
    #allocation2 [shape = 'u8[4096]{0}', space=vmem, size = 0x1000, scoped, tag = 'input window, operand 0, single buffered']
    #allocation3 [shape = 's32[1]{0}', space=sflag, size = 0x4, scoped, tag = 'scoped memory for tpu_custom_call.1']
    #allocation4 [shape = 's32[1]{0}', space=sflag, size = 0x4, scoped, tag = 'scoped memory for tpu_custom_call.1']
    #allocation5 [shape = 'u8[4096]{0}', space=vmem, size = 0x1000, scoped, tag = 'output window, operand 0, single buffered']
    %6 = vsyncpa [#allocation3], 0
    %7 = vsyncpa [#allocation4], 0
    // Predicated region
    $region2: #{tpu_custom_call.1} parent=1 // pred_check
      _
    $region3: #{tpu_custom_call.1} parent=1 // pred_check_branch
      %9 = sbr.rel (0) target = $region5
    $region4: #{tpu_custom_call.1} parent=1 // pred_region
      %s11 = ssub.s32 128, 128
      %12 = vsyncadd [#allocation3], %s11
      %s14 = sshll.u32 [#allocation2], 4
      %s15 = int_to_ptr.vmem [resolvable:$true] %s14
      %17 = dma.hbm_to_vmem [thread:$0]  %s0, 128, %s15, [#allocation3]
    $region5: #{tpu_custom_call.1} parent=1 // pred_fallthru
      _
    // Predicated region
    $region6: #{tpu_custom_call.1} parent=1 // pred_check
      _
    $region7: #{tpu_custom_call.1} parent=1 // pred_check_branch
      %19 = sbr.rel (0) target = $region9
    $region8: #{tpu_custom_call.1} parent=1 // pred_region
      %20 = dma.done [#allocation3], 128
    $region9: #{tpu_custom_call.1} parent=1 // pred_fallthru
      _
    %v21 = vld [vmem:[#allocation2] sm:$0xff]
    %v22 = vrot.slane %v21, 7
    %vm23 = vcmask 261120
    %24 = vst.msk [vmem:[#allocation5] sm:$0xff] %vm23, %v22
    // Predicated region
    $region10: #{tpu_custom_call.1} parent=1 // pred_check
      _
    $region11: #{tpu_custom_call.1} parent=1 // pred_check_branch
      %26 = sbr.rel (0) target = $region13
    $region12: #{tpu_custom_call.1} parent=1 // pred_region
      %s28 = ssub.s32 128, 128
      %29 = vsyncadd [#allocation4], %s28
      %s31 = sshll.u32 [#allocation5], 4
      %s32 = int_to_ptr.vmem [resolvable:$true] %s31
      %34 = dma.vmem_to_hbm [thread:$0]  %s32, 128, %s1, [#allocation4]
    $region13: #{tpu_custom_call.1} parent=1 // pred_fallthru
      _
    // Predicated region
    $region14: #{tpu_custom_call.1} parent=1 // pred_check
      _
    $region15: #{tpu_custom_call.1} parent=1 // pred_check_branch
      %36 = sbr.rel (0) target = $region17
    $region16: #{tpu_custom_call.1} parent=1 // pred_region
      %37 = dma.done [#allocation4], 128
    $region17: #{tpu_custom_call.1} parent=1 // pred_fallthru
      _
    %38 = vsyncpa [#allocation3], 1
    %39 = vsyncpa [#allocation4], 1

// kernel: tpu_custom_call.1
$region0: #{tpu_custom_call.1}
  #allocation0 [shape = 'u32[]', space=smem, size = 0x4, offset = 0x4, fixed_abs, tag = 'smem constant byte address 0x4 - core index']
  #allocation1 [shape = 'u32[144,128]{1,0:T(1,128)}', space=vmem, size = 0x12000, scoped, tag = 'internal scratch']
  #allocation2 [shape = 'f32[8,32]{1,0:T(8,128)}', space=vmem, size = 0x1000, scoped, tag = 'scratch operand']
  #allocation3 [shape = 'f32[8,64]{1,0:T(8,128)}', space=vmem, size = 0x1000, scoped, tag = 'scratch operand']
  %s0 = inlined_call_operand.smem [shape: u32[30], index: -1, kind: input, shape index: {}]
  %s1 = sld [smem:[%s0]]
  %s2 = scalar_lea.smem %s0, 1
  %s3 = sld [smem:[%s2]]
  %s4 = scalar_lea.smem %s0, 2
  %s5 = sld [smem:[%s4]]
  %s6 = scalar_lea.smem %s0, 3
  %s7 = sld [smem:[%s6]]
  %s8 = scalar_lea.smem %s0, 4
  %s9 = sld [smem:[%s8]]
  %s10 = scalar_lea.smem %s0, 5
  %s11 = sld [smem:[%s10]]
  %s12 = scalar_lea.smem %s0, 6
  %s13 = sld [smem:[%s12]]
  %s14 = scalar_lea.smem %s0, 7
  %s15 = sld [smem:[%s14]]
  %s16 = scalar_lea.smem %s0, 8
  %s17 = sld [smem:[%s16]]
  %s18 = scalar_lea.smem %s0, 9
  %s19 = sld [smem:[%s18]]
  %s20 = scalar_lea.smem %s0, 10
  %s21 = sld [smem:[%s20]]
  %s22 = scalar_lea.smem %s0, 11
  %s23 = sld [smem:[%s22]]
  %s24 = scalar_lea.smem %s0, 12
  %s25 = sld [smem:[%s24]]
  %s26 = scalar_lea.smem %s0, 13
  %s27 = sld [smem:[%s26]]
  %s28 = scalar_lea.smem %s0, 14
  %s29 = sld [smem:[%s28]]
  %s30 = scalar_lea.smem %s0, 15
  %s31 = sld [smem:[%s30]]
  %s32 = scalar_lea.smem %s0, 16
  %s33 = sld [smem:[%s32]]
  %s34 = scalar_lea.smem %s0, 17
  %s35 = sld [smem:[%s34]]
  %s36 = scalar_lea.smem %s0, 18
  %s37 = sld [smem:[%s36]]
  %s38 = scalar_lea.smem %s0, 19
  %s39 = sld [smem:[%s38]]
  %s40 = scalar_lea.smem %s0, 20
  %s41 = sld [smem:[%s40]]
  %s42 = scalar_lea.smem %s0, 21
  %s43 = sld [smem:[%s42]]
  %s44 = scalar_lea.smem %s0, 22
  %s45 = sld [smem:[%s44]]
  %s46 = scalar_lea.smem %s0, 23
  %s47 = sld [smem:[%s46]]
  %s48 = scalar_lea.smem %s0, 24
  %s49 = sld [smem:[%s48]]
  %s50 = scalar_lea.smem %s0, 25
  %s51 = sld [smem:[%s50]]
  %s52 = scalar_lea.smem %s0, 26
  %s53 = sld [smem:[%s52]]
  %s54 = scalar_lea.smem %s0, 27
  %s55 = sld [smem:[%s54]]
  %s56 = scalar_lea.smem %s0, 28
  %s57 = sld [smem:[%s56]]
  %s58 = scalar_lea.smem %s0, 29
  %s59 = sld [smem:[%s58]]
  %s60 = sld [smem:[#allocation0]]
  $region185: #{tpu_custom_call.1} parent=0
    _
  %s62 = ssub.s32 1, %s60
  %s63 = scalar_select 0, %s62, %s60
  $region1: #{tpu_custom_call.1} parent=0
    #allocation4 [shape = 'u8[1024]{0}', space=vmem, size = 0x400, scoped, tag = 'input window, operand 6']
    #allocation5 [shape = 's32[2]{0}', space=sflag, size = 0x8, scoped, tag = 'scoped memory for tpu_custom_call.1']
    #allocation6 [shape = 's32[2]{0}', space=sflag, size = 0x8, scoped, tag = 'scoped memory for tpu_custom_call.1']
    #allocation7 [shape = 'u8[1024]{0}', space=vmem, size = 0x400, scoped, tag = 'input window, operand 7']
    #allocation8 [shape = 's32[2]{0}', space=sflag, size = 0x8, scoped, tag = 'scoped memory for tpu_custom_call.1']
    #allocation9 [shape = 'u8[1024]{0}', space=vmem, size = 0x400, scoped, tag = 'input window, operand 10']
    #allocation10 [shape = 'u8[32768]{0}', space=vmem, size = 0x8000, scoped, tag = 'output window, operand 0']
    %64 = vsyncpa [#allocation5], 0
    %s65 = scalar_lea.sflag [#allocation5], 1
    %66 = vsyncpa %s65, 0
    %67 = vsyncpa [#allocation8], 0
    %s68 = scalar_lea.sflag [#allocation8], 1
    %69 = vsyncpa %s68, 0
    %70 = vsyncpa [#allocation6], 0
    %s71 = scalar_lea.sflag [#allocation6], 1
    %72 = vsyncpa %s71, 0
    loop: start=0, step=1, limit=10
    $region2: #{tpu_custom_call.1} parent=1 // loop_pre_header
      _
    $region3: #{tpu_custom_call.1} parent=1 // loop_header
      %s74 = sphi 0, %s78
      %p75 = scmp.ge.s32.totalorder %s74, 10
      %s81 = sphi 0, %s93
      %s82 = sphi 0, %s89
      %s83 = sphi 0, %s81
      %s84 = sphi 0, %s82
      %s85 = sphi 0, %s83
      %s86 = sphi 0, %s84
      %s96 = sphi 0, %s98
      %s99 = sphi 0, %s96
      %s100 = sphi 0, %s99
      %s116 = sphi 0, %s100
      %s120 = sphi 0, %s120
      %s122 = sphi 0, %s120
      %s123 = sphi 0, %s122
      %s137 = sphi 0, %s123
      %s141 = sphi 0, %s141
      %s143 = sphi 0, %s141
      %s144 = sphi 0, %s143
      %s158 = sphi 0, %s144
      %s164 = sphi 0, %s166
      %s167 = sphi 0, %s164
      %s168 = sphi 0, %s167
      %s184 = sphi 0, %s168
      %s190 = sphi 0, %s192
      %s193 = sphi 0, %s190
      %s194 = sphi 0, %s193
      %s210 = sphi 0, %s194
      %s216 = sphi 0, %s218
      %s219 = sphi 0, %s216
      %s220 = sphi 0, %s219
      %s236 = sphi 0, %s220
      %s242 = sphi 0, %s244
      %s245 = sphi 0, %s242
      %s246 = sphi 0, %s245
      %s262 = sphi 0, %s246
      %s268 = sphi 0, %s270
      %s271 = sphi 0, %s268
      %s272 = sphi 0, %s271
      %s288 = sphi 0, %s272
      %s294 = sphi 0, %s296
      %s297 = sphi 0, %s294
      %s298 = sphi 0, %s297
      %s314 = sphi 0, %s298
      %s320 = sphi 0, %s322
      %s323 = sphi 0, %s320
      %s324 = sphi 0, %s323
      %s340 = sphi 0, %s324
      %s346 = sphi 0, %s348
      %s349 = sphi 0, %s346
      %s350 = sphi 0, %s349
      %s366 = sphi 0, %s350
      %s372 = sphi 0, %s374
      %s375 = sphi 0, %s372
      %s376 = sphi 0, %s375
      %s392 = sphi 0, %s376
      %s398 = sphi 0, %s400
      %s401 = sphi 0, %s398
      %s402 = sphi 0, %s401
      %s418 = sphi 0, %s402
      %s424 = sphi 0, %s426
      %s427 = sphi 0, %s424
      %s428 = sphi 0, %s427
      %s444 = sphi 0, %s428
      %s450 = sphi 0, %s452
      %s453 = sphi 0, %s450
      %s454 = sphi 0, %s453
      %s470 = sphi 0, %s454
      %s476 = sphi 0, %s478
      %s479 = sphi 0, %s476
      %s480 = sphi 0, %s479
      %s496 = sphi 0, %s480
      %s502 = sphi 0, %s504
      %s505 = sphi 0, %s502
      %s506 = sphi 0, %s505
      %s522 = sphi 0, %s506
      %s528 = sphi 0, %s530
      %s531 = sphi 0, %s528
      %s532 = sphi 0, %s531
      %s548 = sphi 0, %s532
      %s554 = sphi 0, %s556
      %s557 = sphi 0, %s554
      %s558 = sphi 0, %s557
      %s574 = sphi 0, %s558
      %s580 = sphi 0, %s582
      %s583 = sphi 0, %s580
      %s584 = sphi 0, %s583
      %s600 = sphi 0, %s584
      %s606 = sphi 0, %s608
      %s609 = sphi 0, %s606
      %s610 = sphi 0, %s609
      %s626 = sphi 0, %s610
      %s632 = sphi 0, %s634
      %s635 = sphi 0, %s632
      %s636 = sphi 0, %s635
      %s652 = sphi 0, %s636
      %s658 = sphi 0, %s660
      %s661 = sphi 0, %s658
      %s662 = sphi 0, %s661
      %s678 = sphi 0, %s662
      %s684 = sphi 0, %s686
      %s687 = sphi 0, %s684
      %s688 = sphi 0, %s687
      %s704 = sphi 0, %s688
      %s710 = sphi 0, %s712
      %s713 = sphi 0, %s710
      %s714 = sphi 0, %s713
      %s730 = sphi 0, %s714
      %s736 = sphi 0, %s738
      %s739 = sphi 0, %s736
      %s740 = sphi 0, %s739
      %s756 = sphi 0, %s740
      %s762 = sphi 0, %s764
      %s765 = sphi 0, %s762
      %s766 = sphi 0, %s765
      %s782 = sphi 0, %s766
      %s788 = sphi 0, %s790
      %s791 = sphi 0, %s788
      %s792 = sphi 0, %s791
      %s808 = sphi 0, %s792
      %s812 = sphi 0, %s812
      %s814 = sphi 0, %s812
      %s815 = sphi 0, %s814
      %s829 = sphi 0, %s815
      %s835 = sphi 0, %s837
      %s838 = sphi 0, %s835
      %s839 = sphi 0, %s838
      %s855 = sphi 0, %s839
    $region4: #{tpu_custom_call.1} parent=1 // loop_header_branch
      %77 = sbr.rel (%p75) target = $region8
    $region5: #{tpu_custom_call.1} parent=1 // loop_body
      %s79 = ssub.s32 %s74, 1
      %s80 = ssub.s32 %s74, 2
      %s87 = sadd.s32 1, %s82
      %p88 = scmp.ge.s32.totalorder %s87, 4
      %s89 = scalar_select %p88, 0, %s87
      %s90 = sadd.s32 1, %s81
      %s91 = scalar_select %p88, %s90, %s81
      %p92 = scmp.ge.s32.totalorder %s91, 2
      %s93 = scalar_select %p92, 0, %s91
      %s94 = ssub.s32 %s81, %s93
      %p95 = scmp.eq.s32.totalorder %s94, 0
      %s97 = sadd.s32 %s96, 1
      %s98 = scalar_select %p95, %s96, %s97
      %p101 = pneg %p95
      %p102 = scmp.eq.s32.totalorder %s74, 7
      %p103 = por %p101, %p102
      %p104 = scmp.ne.s32.totalorder %s96, %s99
      %p105 = scmp.eq.s32.totalorder %s74, 0
      %p106 = por %p104, %p105
      %p107 = scmp.ne.s32.totalorder %s96, %s99
      %p108 = scmp.eq.s32.totalorder %s79, 7
      %p109 = por %p107, %p108
      %p110 = scmp.ne.s32.totalorder %s99, %s100
      %p111 = scmp.eq.s32.totalorder %s79, 0
      %p112 = por %p110, %p111
      %p113 = scmp.ne.s32.totalorder %s99, %s100
      %p114 = scmp.eq.s32.totalorder %s80, 7
      %p115 = por %p113, %p114
      %p117 = scmp.ne.s32.totalorder %s100, %s116
      %p118 = scmp.eq.s32.totalorder %s80, 0
      %p119 = por %p117, %p118
      %s121 = sadd.s32 %s120, 1
      %p124 = scmp.eq.s32.totalorder %s74, 7
      %p125 = scmp.ne.s32.totalorder %s120, %s122
      %p126 = scmp.eq.s32.totalorder %s74, 0
      %p127 = por %p125, %p126
      %p128 = scmp.ne.s32.totalorder %s120, %s122
      %p129 = scmp.eq.s32.totalorder %s79, 7
      %p130 = por %p128, %p129
      %p131 = scmp.ne.s32.totalorder %s122, %s123
      %p132 = scmp.eq.s32.totalorder %s79, 0
      %p133 = por %p131, %p132
      %p134 = scmp.ne.s32.totalorder %s122, %s123
      %p135 = scmp.eq.s32.totalorder %s80, 7
      %p136 = por %p134, %p135
      %p138 = scmp.ne.s32.totalorder %s123, %s137
      %p139 = scmp.eq.s32.totalorder %s80, 0
      %p140 = por %p138, %p139
      %s142 = sadd.s32 %s141, 1
      %p145 = scmp.eq.s32.totalorder %s74, 7
      %p146 = scmp.ne.s32.totalorder %s141, %s143
      %p147 = scmp.eq.s32.totalorder %s74, 0
      %p148 = por %p146, %p147
      %p149 = scmp.ne.s32.totalorder %s141, %s143
      %p150 = scmp.eq.s32.totalorder %s79, 7
      %p151 = por %p149, %p150
      %p152 = scmp.ne.s32.totalorder %s143, %s144
      %p153 = scmp.eq.s32.totalorder %s79, 0
      %p154 = por %p152, %p153
      %p155 = scmp.ne.s32.totalorder %s143, %s144
      %p156 = scmp.eq.s32.totalorder %s80, 7
      %p157 = por %p155, %p156
      %p159 = scmp.ne.s32.totalorder %s144, %s158
      %p160 = scmp.eq.s32.totalorder %s80, 0
      %p161 = por %p159, %p160
      %s162 = ssub.s32 %s82, %s89
      %p163 = scmp.eq.s32.totalorder %s162, 0
      %s165 = sadd.s32 %s164, 1
      %s166 = scalar_select %p163, %s164, %s165
      %p169 = pneg %p163
      %p170 = scmp.eq.s32.totalorder %s74, 7
      %p171 = por %p169, %p170
      %p172 = scmp.ne.s32.totalorder %s164, %s167
      %p173 = scmp.eq.s32.totalorder %s74, 0
      %p174 = por %p172, %p173
      %p175 = scmp.ne.s32.totalorder %s164, %s167
      %p176 = scmp.eq.s32.totalorder %s79, 7
      %p177 = por %p175, %p176
      %p178 = scmp.ne.s32.totalorder %s167, %s168
      %p179 = scmp.eq.s32.totalorder %s79, 0
      %p180 = por %p178, %p179
      %p181 = scmp.ne.s32.totalorder %s167, %s168
      %p182 = scmp.eq.s32.totalorder %s80, 7
      %p183 = por %p181, %p182
      %p185 = scmp.ne.s32.totalorder %s168, %s184
      %p186 = scmp.eq.s32.totalorder %s80, 0
      %p187 = por %p185, %p186
      %s188 = ssub.s32 %s82, %s89
      %p189 = scmp.eq.s32.totalorder %s188, 0
      %s191 = sadd.s32 %s190, 1
      %s192 = scalar_select %p189, %s190, %s191
      %p195 = pneg %p189
      %p196 = scmp.eq.s32.totalorder %s74, 7
      %p197 = por %p195, %p196
      %p198 = scmp.ne.s32.totalorder %s190, %s193
      %p199 = scmp.eq.s32.totalorder %s74, 0
      %p200 = por %p198, %p199
      %p201 = scmp.ne.s32.totalorder %s190, %s193
      %p202 = scmp.eq.s32.totalorder %s79, 7
      %p203 = por %p201, %p202
      %p204 = scmp.ne.s32.totalorder %s193, %s194
      %p205 = scmp.eq.s32.totalorder %s79, 0
      %p206 = por %p204, %p205
      %p207 = scmp.ne.s32.totalorder %s193, %s194
      %p208 = scmp.eq.s32.totalorder %s80, 7
      %p209 = por %p207, %p208
      %p211 = scmp.ne.s32.totalorder %s194, %s210
      %p212 = scmp.eq.s32.totalorder %s80, 0
      %p213 = por %p211, %p212
      %s214 = ssub.s32 %s82, %s89
      %p215 = scmp.eq.s32.totalorder %s214, 0
      %s217 = sadd.s32 %s216, 1
      %s218 = scalar_select %p215, %s216, %s217
      %p221 = pneg %p215
      %p222 = scmp.eq.s32.totalorder %s74, 7
      %p223 = por %p221, %p222
      %p224 = scmp.ne.s32.totalorder %s216, %s219
      %p225 = scmp.eq.s32.totalorder %s74, 0
      %p226 = por %p224, %p225
      %p227 = scmp.ne.s32.totalorder %s216, %s219
      %p228 = scmp.eq.s32.totalorder %s79, 7
      %p229 = por %p227, %p228
      %p230 = scmp.ne.s32.totalorder %s219, %s220
      %p231 = scmp.eq.s32.totalorder %s79, 0
      %p232 = por %p230, %p231
      %p233 = scmp.ne.s32.totalorder %s219, %s220
      %p234 = scmp.eq.s32.totalorder %s80, 7
      %p235 = por %p233, %p234
      %p237 = scmp.ne.s32.totalorder %s220, %s236
      %p238 = scmp.eq.s32.totalorder %s80, 0
      %p239 = por %p237, %p238
      %s240 = ssub.s32 %s82, %s89
      %p241 = scmp.eq.s32.totalorder %s240, 0
      %s243 = sadd.s32 %s242, 1
      %s244 = scalar_select %p241, %s242, %s243
      %p247 = pneg %p241
      %p248 = scmp.eq.s32.totalorder %s74, 7
      %p249 = por %p247, %p248
      %p250 = scmp.ne.s32.totalorder %s242, %s245
      %p251 = scmp.eq.s32.totalorder %s74, 0
      %p252 = por %p250, %p251
      %p253 = scmp.ne.s32.totalorder %s242, %s245
      %p254 = scmp.eq.s32.totalorder %s79, 7
      %p255 = por %p253, %p254
      %p256 = scmp.ne.s32.totalorder %s245, %s246
      %p257 = scmp.eq.s32.totalorder %s79, 0
      %p258 = por %p256, %p257
      %p259 = scmp.ne.s32.totalorder %s245, %s246
      %p260 = scmp.eq.s32.totalorder %s80, 7
      %p261 = por %p259, %p260
      %p263 = scmp.ne.s32.totalorder %s246, %s262
      %p264 = scmp.eq.s32.totalorder %s80, 0
      %p265 = por %p263, %p264
      %s266 = ssub.s32 %s82, %s89
      %p267 = scmp.eq.s32.totalorder %s266, 0
      %s269 = sadd.s32 %s268, 1
      %s270 = scalar_select %p267, %s268, %s269
      %p273 = pneg %p267
      %p274 = scmp.eq.s32.totalorder %s74, 7
      %p275 = por %p273, %p274
      %p276 = scmp.ne.s32.totalorder %s268, %s271
      %p277 = scmp.eq.s32.totalorder %s74, 0
      %p278 = por %p276, %p277
      %p279 = scmp.ne.s32.totalorder %s268, %s271
      %p280 = scmp.eq.s32.totalorder %s79, 7
      %p281 = por %p279, %p280
      %p282 = scmp.ne.s32.totalorder %s271, %s272
      %p283 = scmp.eq.s32.totalorder %s79, 0
      %p284 = por %p282, %p283
      %p285 = scmp.ne.s32.totalorder %s271, %s272
      %p286 = scmp.eq.s32.totalorder %s80, 7
      %p287 = por %p285, %p286
      %p289 = scmp.ne.s32.totalorder %s272, %s288
      %p290 = scmp.eq.s32.totalorder %s80, 0
      %p291 = por %p289, %p290
      %s292 = ssub.s32 %s82, %s89
      %p293 = scmp.eq.s32.totalorder %s292, 0
      %s295 = sadd.s32 %s294, 1
      %s296 = scalar_select %p293, %s294, %s295
      %p299 = pneg %p293
      %p300 = scmp.eq.s32.totalorder %s74, 7
      %p301 = por %p299, %p300
      %p302 = scmp.ne.s32.totalorder %s294, %s297
      %p303 = scmp.eq.s32.totalorder %s74, 0
      %p304 = por %p302, %p303
      %p305 = scmp.ne.s32.totalorder %s294, %s297
      %p306 = scmp.eq.s32.totalorder %s79, 7
      %p307 = por %p305, %p306
      %p308 = scmp.ne.s32.totalorder %s297, %s298
      %p309 = scmp.eq.s32.totalorder %s79, 0
      %p310 = por %p308, %p309
      %p311 = scmp.ne.s32.totalorder %s297, %s298
      %p312 = scmp.eq.s32.totalorder %s80, 7
      %p313 = por %p311, %p312
      %p315 = scmp.ne.s32.totalorder %s298, %s314
      %p316 = scmp.eq.s32.totalorder %s80, 0
      %p317 = por %p315, %p316
      %s318 = ssub.s32 %s82, %s89
      %p319 = scmp.eq.s32.totalorder %s318, 0
      %s321 = sadd.s32 %s320, 1
      %s322 = scalar_select %p319, %s320, %s321
      %p325 = pneg %p319
      %p326 = scmp.eq.s32.totalorder %s74, 7
      %p327 = por %p325, %p326
      %p328 = scmp.ne.s32.totalorder %s320, %s323
      %p329 = scmp.eq.s32.totalorder %s74, 0
      %p330 = por %p328, %p329
      %p331 = scmp.ne.s32.totalorder %s320, %s323
      %p332 = scmp.eq.s32.totalorder %s79, 7
      %p333 = por %p331, %p332
      %p334 = scmp.ne.s32.totalorder %s323, %s324
      %p335 = scmp.eq.s32.totalorder %s79, 0
      %p336 = por %p334, %p335
      %p337 = scmp.ne.s32.totalorder %s323, %s324
      %p338 = scmp.eq.s32.totalorder %s80, 7
      %p339 = por %p337, %p338
      %p341 = scmp.ne.s32.totalorder %s324, %s340
      %p342 = scmp.eq.s32.totalorder %s80, 0
      %p343 = por %p341, %p342
      %s344 = ssub.s32 %s82, %s89
      %p345 = scmp.eq.s32.totalorder %s344, 0
      %s347 = sadd.s32 %s346, 1
      %s348 = scalar_select %p345, %s346, %s347
      %p351 = pneg %p345
      %p352 = scmp.eq.s32.totalorder %s74, 7
      %p353 = por %p351, %p352
      %p354 = scmp.ne.s32.totalorder %s346, %s349
      %p355 = scmp.eq.s32.totalorder %s74, 0
      %p356 = por %p354, %p355
      %p357 = scmp.ne.s32.totalorder %s346, %s349
      %p358 = scmp.eq.s32.totalorder %s79, 7
      %p359 = por %p357, %p358
      %p360 = scmp.ne.s32.totalorder %s349, %s350
      %p361 = scmp.eq.s32.totalorder %s79, 0
      %p362 = por %p360, %p361
      %p363 = scmp.ne.s32.totalorder %s349, %s350
      %p364 = scmp.eq.s32.totalorder %s80, 7
      %p365 = por %p363, %p364
      %p367 = scmp.ne.s32.totalorder %s350, %s366
      %p368 = scmp.eq.s32.totalorder %s80, 0
      %p369 = por %p367, %p368
      %s370 = ssub.s32 %s82, %s89
      %p371 = scmp.eq.s32.totalorder %s370, 0
      %s373 = sadd.s32 %s372, 1
      %s374 = scalar_select %p371, %s372, %s373
      %p377 = pneg %p371
      %p378 = scmp.eq.s32.totalorder %s74, 7
      %p379 = por %p377, %p378
      %p380 = scmp.ne.s32.totalorder %s372, %s375
      %p381 = scmp.eq.s32.totalorder %s74, 0
      %p382 = por %p380, %p381
      %p383 = scmp.ne.s32.totalorder %s372, %s375
      %p384 = scmp.eq.s32.totalorder %s79, 7
      %p385 = por %p383, %p384
      %p386 = scmp.ne.s32.totalorder %s375, %s376
      %p387 = scmp.eq.s32.totalorder %s79, 0
      %p388 = por %p386, %p387
      %p389 = scmp.ne.s32.totalorder %s375, %s376
      %p390 = scmp.eq.s32.totalorder %s80, 7
      %p391 = por %p389, %p390
      %p393 = scmp.ne.s32.totalorder %s376, %s392
      %p394 = scmp.eq.s32.totalorder %s80, 0
      %p395 = por %p393, %p394
      %s396 = ssub.s32 %s82, %s89
      %p397 = scmp.eq.s32.totalorder %s396, 0
      %s399 = sadd.s32 %s398, 1
      %s400 = scalar_select %p397, %s398, %s399
      %p403 = pneg %p397
      %p404 = scmp.eq.s32.totalorder %s74, 7
      %p405 = por %p403, %p404
      %p406 = scmp.ne.s32.totalorder %s398, %s401
      %p407 = scmp.eq.s32.totalorder %s74, 0
      %p408 = por %p406, %p407
      %p409 = scmp.ne.s32.totalorder %s398, %s401
      %p410 = scmp.eq.s32.totalorder %s79, 7
      %p411 = por %p409, %p410
      %p412 = scmp.ne.s32.totalorder %s401, %s402
      %p413 = scmp.eq.s32.totalorder %s79, 0
      %p414 = por %p412, %p413
      %p415 = scmp.ne.s32.totalorder %s401, %s402
      %p416 = scmp.eq.s32.totalorder %s80, 7
      %p417 = por %p415, %p416
      %p419 = scmp.ne.s32.totalorder %s402, %s418
      %p420 = scmp.eq.s32.totalorder %s80, 0
      %p421 = por %p419, %p420
      %s422 = ssub.s32 %s82, %s89
      %p423 = scmp.eq.s32.totalorder %s422, 0
      %s425 = sadd.s32 %s424, 1
      %s426 = scalar_select %p423, %s424, %s425
      %p429 = pneg %p423
      %p430 = scmp.eq.s32.totalorder %s74, 7
      %p431 = por %p429, %p430
      %p432 = scmp.ne.s32.totalorder %s424, %s427
      %p433 = scmp.eq.s32.totalorder %s74, 0
      %p434 = por %p432, %p433
      %p435 = scmp.ne.s32.totalorder %s424, %s427
      %p436 = scmp.eq.s32.totalorder %s79, 7
      %p437 = por %p435, %p436
      %p438 = scmp.ne.s32.totalorder %s427, %s428
      %p439 = scmp.eq.s32.totalorder %s79, 0
      %p440 = por %p438, %p439
      %p441 = scmp.ne.s32.totalorder %s427, %s428
      %p442 = scmp.eq.s32.totalorder %s80, 7
      %p443 = por %p441, %p442
      %p445 = scmp.ne.s32.totalorder %s428, %s444
      %p446 = scmp.eq.s32.totalorder %s80, 0
      %p447 = por %p445, %p446
      %s448 = ssub.s32 %s82, %s89
      %p449 = scmp.eq.s32.totalorder %s448, 0
      %s451 = sadd.s32 %s450, 1
      %s452 = scalar_select %p449, %s450, %s451
      %p455 = pneg %p449
      %p456 = scmp.eq.s32.totalorder %s74, 7
      %p457 = por %p455, %p456
      %p458 = scmp.ne.s32.totalorder %s450, %s453
      %p459 = scmp.eq.s32.totalorder %s74, 0
      %p460 = por %p458, %p459
      %p461 = scmp.ne.s32.totalorder %s450, %s453
      %p462 = scmp.eq.s32.totalorder %s79, 7
      %p463 = por %p461, %p462
      %p464 = scmp.ne.s32.totalorder %s453, %s454
      %p465 = scmp.eq.s32.totalorder %s79, 0
      %p466 = por %p464, %p465
      %p467 = scmp.ne.s32.totalorder %s453, %s454
      %p468 = scmp.eq.s32.totalorder %s80, 7
      %p469 = por %p467, %p468
      %p471 = scmp.ne.s32.totalorder %s454, %s470
      %p472 = scmp.eq.s32.totalorder %s80, 0
      %p473 = por %p471, %p472
      %s474 = ssub.s32 %s82, %s89
      %p475 = scmp.eq.s32.totalorder %s474, 0
      %s477 = sadd.s32 %s476, 1
      %s478 = scalar_select %p475, %s476, %s477
      %p481 = pneg %p475
      %p482 = scmp.eq.s32.totalorder %s74, 7
      %p483 = por %p481, %p482
      %p484 = scmp.ne.s32.totalorder %s476, %s479
      %p485 = scmp.eq.s32.totalorder %s74, 0
      %p486 = por %p484, %p485
      %p487 = scmp.ne.s32.totalorder %s476, %s479
      %p488 = scmp.eq.s32.totalorder %s79, 7
      %p489 = por %p487, %p488
      %p490 = scmp.ne.s32.totalorder %s479, %s480
      %p491 = scmp.eq.s32.totalorder %s79, 0
      %p492 = por %p490, %p491
      %p493 = scmp.ne.s32.totalorder %s479, %s480
      %p494 = scmp.eq.s32.totalorder %s80, 7
      %p495 = por %p493, %p494
      %p497 = scmp.ne.s32.totalorder %s480, %s496
      %p498 = scmp.eq.s32.totalorder %s80, 0
      %p499 = por %p497, %p498
      %s500 = ssub.s32 %s82, %s89
      %p501 = scmp.eq.s32.totalorder %s500, 0
      %s503 = sadd.s32 %s502, 1
      %s504 = scalar_select %p501, %s502, %s503
      %p507 = pneg %p501
      %p508 = scmp.eq.s32.totalorder %s74, 7
      %p509 = por %p507, %p508
      %p510 = scmp.ne.s32.totalorder %s502, %s505
      %p511 = scmp.eq.s32.totalorder %s74, 0
      %p512 = por %p510, %p511
      %p513 = scmp.ne.s32.totalorder %s502, %s505
      %p514 = scmp.eq.s32.totalorder %s79, 7
      %p515 = por %p513, %p514
      %p516 = scmp.ne.s32.totalorder %s505, %s506
      %p517 = scmp.eq.s32.totalorder %s79, 0
      %p518 = por %p516, %p517
      %p519 = scmp.ne.s32.totalorder %s505, %s506
      %p520 = scmp.eq.s32.totalorder %s80, 7
      %p521 = por %p519, %p520
      %p523 = scmp.ne.s32.totalorder %s506, %s522
      %p524 = scmp.eq.s32.totalorder %s80, 0
      %p525 = por %p523, %p524
      %s526 = ssub.s32 %s82, %s89
      %p527 = scmp.eq.s32.totalorder %s526, 0
      %s529 = sadd.s32 %s528, 1
      %s530 = scalar_select %p527, %s528, %s529
      %p533 = pneg %p527
      %p534 = scmp.eq.s32.totalorder %s74, 7
      %p535 = por %p533, %p534
      %p536 = scmp.ne.s32.totalorder %s528, %s531
      %p537 = scmp.eq.s32.totalorder %s74, 0
      %p538 = por %p536, %p537
      %p539 = scmp.ne.s32.totalorder %s528, %s531
      %p540 = scmp.eq.s32.totalorder %s79, 7
      %p541 = por %p539, %p540
      %p542 = scmp.ne.s32.totalorder %s531, %s532
      %p543 = scmp.eq.s32.totalorder %s79, 0
      %p544 = por %p542, %p543
      %p545 = scmp.ne.s32.totalorder %s531, %s532
      %p546 = scmp.eq.s32.totalorder %s80, 7
      %p547 = por %p545, %p546
      %p549 = scmp.ne.s32.totalorder %s532, %s548
      %p550 = scmp.eq.s32.totalorder %s80, 0
      %p551 = por %p549, %p550
      %s552 = ssub.s32 %s82, %s89
      %p553 = scmp.eq.s32.totalorder %s552, 0
      %s555 = sadd.s32 %s554, 1
      %s556 = scalar_select %p553, %s554, %s555
      %p559 = pneg %p553
      %p560 = scmp.eq.s32.totalorder %s74, 7
      %p561 = por %p559, %p560
      %p562 = scmp.ne.s32.totalorder %s554, %s557
      %p563 = scmp.eq.s32.totalorder %s74, 0
      %p564 = por %p562, %p563
      %p565 = scmp.ne.s32.totalorder %s554, %s557
      %p566 = scmp.eq.s32.totalorder %s79, 7
      %p567 = por %p565, %p566
      %p568 = scmp.ne.s32.totalorder %s557, %s558
      %p569 = scmp.eq.s32.totalorder %s79, 0
      %p570 = por %p568, %p569
      %p571 = scmp.ne.s32.totalorder %s557, %s558
      %p572 = scmp.eq.s32.totalorder %s80, 7
      %p573 = por %p571, %p572
      %p575 = scmp.ne.s32.totalorder %s558, %s574
      %p576 = scmp.eq.s32.totalorder %s80, 0
      %p577 = por %p575, %p576
      %s578 = ssub.s32 %s82, %s89
      %p579 = scmp.eq.s32.totalorder %s578, 0
      %s581 = sadd.s32 %s580, 1
      %s582 = scalar_select %p579, %s580, %s581
      %p585 = pneg %p579
      %p586 = scmp.eq.s32.totalorder %s74, 7
      %p587 = por %p585, %p586
      %p588 = scmp.ne.s32.totalorder %s580, %s583
      %p589 = scmp.eq.s32.totalorder %s74, 0
      %p590 = por %p588, %p589
      %p591 = scmp.ne.s32.totalorder %s580, %s583
      %p592 = scmp.eq.s32.totalorder %s79, 7
      %p593 = por %p591, %p592
      %p594 = scmp.ne.s32.totalorder %s583, %s584
      %p595 = scmp.eq.s32.totalorder %s79, 0
      %p596 = por %p594, %p595
      %p597 = scmp.ne.s32.totalorder %s583, %s584
      %p598 = scmp.eq.s32.totalorder %s80, 7
      %p599 = por %p597, %p598
      %p601 = scmp.ne.s32.totalorder %s584, %s600
      %p602 = scmp.eq.s32.totalorder %s80, 0
      %p603 = por %p601, %p602
      %s604 = ssub.s32 %s82, %s89
      %p605 = scmp.eq.s32.totalorder %s604, 0
      %s607 = sadd.s32 %s606, 1
      %s608 = scalar_select %p605, %s606, %s607
      %p611 = pneg %p605
      %p612 = scmp.eq.s32.totalorder %s74, 7
      %p613 = por %p611, %p612
      %p614 = scmp.ne.s32.totalorder %s606, %s609
      %p615 = scmp.eq.s32.totalorder %s74, 0
      %p616 = por %p614, %p615
      %p617 = scmp.ne.s32.totalorder %s606, %s609
      %p618 = scmp.eq.s32.totalorder %s79, 7
      %p619 = por %p617, %p618
      %p620 = scmp.ne.s32.totalorder %s609, %s610
      %p621 = scmp.eq.s32.totalorder %s79, 0
      %p622 = por %p620, %p621
      %p623 = scmp.ne.s32.totalorder %s609, %s610
      %p624 = scmp.eq.s32.totalorder %s80, 7
      %p625 = por %p623, %p624
      %p627 = scmp.ne.s32.totalorder %s610, %s626
      %p628 = scmp.eq.s32.totalorder %s80, 0
      %p629 = por %p627, %p628
      %s630 = ssub.s32 %s82, %s89
      %p631 = scmp.eq.s32.totalorder %s630, 0
      %s633 = sadd.s32 %s632, 1
      %s634 = scalar_select %p631, %s632, %s633
      %p637 = pneg %p631
      %p638 = scmp.eq.s32.totalorder %s74, 7
      %p639 = por %p637, %p638
      %p640 = scmp.ne.s32.totalorder %s632, %s635
      %p641 = scmp.eq.s32.totalorder %s74, 0
      %p642 = por %p640, %p641
      %p643 = scmp.ne.s32.totalorder %s632, %s635
      %p644 = scmp.eq.s32.totalorder %s79, 7
      %p645 = por %p643, %p644
      %p646 = scmp.ne.s32.totalorder %s635, %s636
      %p647 = scmp.eq.s32.totalorder %s79, 0
      %p648 = por %p646, %p647
      %p649 = scmp.ne.s32.totalorder %s635, %s636
      %p650 = scmp.eq.s32.totalorder %s80, 7
      %p651 = por %p649, %p650
      %p653 = scmp.ne.s32.totalorder %s636, %s652
      %p654 = scmp.eq.s32.totalorder %s80, 0
      %p655 = por %p653, %p654
      %s656 = ssub.s32 %s82, %s89
      %p657 = scmp.eq.s32.totalorder %s656, 0
      %s659 = sadd.s32 %s658, 1
      %s660 = scalar_select %p657, %s658, %s659
      %p663 = pneg %p657
      %p664 = scmp.eq.s32.totalorder %s74, 7
      %p665 = por %p663, %p664
      %p666 = scmp.ne.s32.totalorder %s658, %s661
      %p667 = scmp.eq.s32.totalorder %s74, 0
      %p668 = por %p666, %p667
      %p669 = scmp.ne.s32.totalorder %s658, %s661
      %p670 = scmp.eq.s32.totalorder %s79, 7
      %p671 = por %p669, %p670
      %p672 = scmp.ne.s32.totalorder %s661, %s662
      %p673 = scmp.eq.s32.totalorder %s79, 0
      %p674 = por %p672, %p673
      %p675 = scmp.ne.s32.totalorder %s661, %s662
      %p676 = scmp.eq.s32.totalorder %s80, 7
      %p677 = por %p675, %p676
      %p679 = scmp.ne.s32.totalorder %s662, %s678
      %p680 = scmp.eq.s32.totalorder %s80, 0
      %p681 = por %p679, %p680
      %s682 = ssub.s32 %s82, %s89
      %p683 = scmp.eq.s32.totalorder %s682, 0
      %s685 = sadd.s32 %s684, 1
      %s686 = scalar_select %p683, %s684, %s685
      %p689 = pneg %p683
      %p690 = scmp.eq.s32.totalorder %s74, 7
      %p691 = por %p689, %p690
      %p692 = scmp.ne.s32.totalorder %s684, %s687
      %p693 = scmp.eq.s32.totalorder %s74, 0
      %p694 = por %p692, %p693
      %p695 = scmp.ne.s32.totalorder %s684, %s687
      %p696 = scmp.eq.s32.totalorder %s79, 7
      %p697 = por %p695, %p696
      %p698 = scmp.ne.s32.totalorder %s687, %s688
      %p699 = scmp.eq.s32.totalorder %s79, 0
      %p700 = por %p698, %p699
      %p701 = scmp.ne.s32.totalorder %s687, %s688
      %p702 = scmp.eq.s32.totalorder %s80, 7
      %p703 = por %p701, %p702
      %p705 = scmp.ne.s32.totalorder %s688, %s704
      %p706 = scmp.eq.s32.totalorder %s80, 0
      %p707 = por %p705, %p706
      %s708 = ssub.s32 %s82, %s89
      %p709 = scmp.eq.s32.totalorder %s708, 0
      %s711 = sadd.s32 %s710, 1
      %s712 = scalar_select %p709, %s710, %s711
      %p715 = pneg %p709
      %p716 = scmp.eq.s32.totalorder %s74, 7
      %p717 = por %p715, %p716
      %p718 = scmp.ne.s32.totalorder %s710, %s713
      %p719 = scmp.eq.s32.totalorder %s74, 0
      %p720 = por %p718, %p719
      %p721 = scmp.ne.s32.totalorder %s710, %s713
      %p722 = scmp.eq.s32.totalorder %s79, 7
      %p723 = por %p721, %p722
      %p724 = scmp.ne.s32.totalorder %s713, %s714
      %p725 = scmp.eq.s32.totalorder %s79, 0
      %p726 = por %p724, %p725
      %p727 = scmp.ne.s32.totalorder %s713, %s714
      %p728 = scmp.eq.s32.totalorder %s80, 7
      %p729 = por %p727, %p728
      %p731 = scmp.ne.s32.totalorder %s714, %s730
      %p732 = scmp.eq.s32.totalorder %s80, 0
      %p733 = por %p731, %p732
      %s734 = ssub.s32 %s82, %s89
      %p735 = scmp.eq.s32.totalorder %s734, 0
      %s737 = sadd.s32 %s736, 1
      %s738 = scalar_select %p735, %s736, %s737
      %p741 = pneg %p735
      %p742 = scmp.eq.s32.totalorder %s74, 7
      %p743 = por %p741, %p742
      %p744 = scmp.ne.s32.totalorder %s736, %s739
      %p745 = scmp.eq.s32.totalorder %s74, 0
      %p746 = por %p744, %p745
      %p747 = scmp.ne.s32.totalorder %s736, %s739
      %p748 = scmp.eq.s32.totalorder %s79, 7
      %p749 = por %p747, %p748
      %p750 = scmp.ne.s32.totalorder %s739, %s740
      %p751 = scmp.eq.s32.totalorder %s79, 0
      %p752 = por %p750, %p751
      %p753 = scmp.ne.s32.totalorder %s739, %s740
      %p754 = scmp.eq.s32.totalorder %s80, 7
      %p755 = por %p753, %p754
      %p757 = scmp.ne.s32.totalorder %s740, %s756
      %p758 = scmp.eq.s32.totalorder %s80, 0
      %p759 = por %p757, %p758
      %s760 = ssub.s32 %s82, %s89
      %p761 = scmp.eq.s32.totalorder %s760, 0
      %s763 = sadd.s32 %s762, 1
      %s764 = scalar_select %p761, %s762, %s763
      %p767 = pneg %p761
      %p768 = scmp.eq.s32.totalorder %s74, 7
      %p769 = por %p767, %p768
      %p770 = scmp.ne.s32.totalorder %s762, %s765
      %p771 = scmp.eq.s32.totalorder %s74, 0
      %p772 = por %p770, %p771
      %p773 = scmp.ne.s32.totalorder %s762, %s765
      %p774 = scmp.eq.s32.totalorder %s79, 7
      %p775 = por %p773, %p774
      %p776 = scmp.ne.s32.totalorder %s765, %s766
      %p777 = scmp.eq.s32.totalorder %s79, 0
      %p778 = por %p776, %p777
      %p779 = scmp.ne.s32.totalorder %s765, %s766
      %p780 = scmp.eq.s32.totalorder %s80, 7
      %p781 = por %p779, %p780
      %p783 = scmp.ne.s32.totalorder %s766, %s782
      %p784 = scmp.eq.s32.totalorder %s80, 0
      %p785 = por %p783, %p784
      %s786 = ssub.s32 %s82, %s89
      %p787 = scmp.eq.s32.totalorder %s786, 0
      %s789 = sadd.s32 %s788, 1
      %s790 = scalar_select %p787, %s788, %s789
      %p793 = pneg %p787
      %p794 = scmp.eq.s32.totalorder %s74, 7
      %p795 = por %p793, %p794
      %p796 = scmp.ne.s32.totalorder %s788, %s791
      %p797 = scmp.eq.s32.totalorder %s74, 0
      %p798 = por %p796, %p797
      %p799 = scmp.ne.s32.totalorder %s788, %s791
      %p800 = scmp.eq.s32.totalorder %s79, 7
      %p801 = por %p799, %p800
      %p802 = scmp.ne.s32.totalorder %s791, %s792
      %p803 = scmp.eq.s32.totalorder %s79, 0
      %p804 = por %p802, %p803
      %p805 = scmp.ne.s32.totalorder %s791, %s792
      %p806 = scmp.eq.s32.totalorder %s80, 7
      %p807 = por %p805, %p806
      %p809 = scmp.ne.s32.totalorder %s792, %s808
      %p810 = scmp.eq.s32.totalorder %s80, 0
      %p811 = por %p809, %p810
      %s813 = sadd.s32 %s812, 1
      %p816 = scmp.eq.s32.totalorder %s74, 7
      %p817 = scmp.ne.s32.totalorder %s812, %s814
      %p818 = scmp.eq.s32.totalorder %s74, 0
      %p819 = por %p817, %p818
      %p820 = scmp.ne.s32.totalorder %s812, %s814
      %p821 = scmp.eq.s32.totalorder %s79, 7
      %p822 = por %p820, %p821
      %p823 = scmp.ne.s32.totalorder %s814, %s815
      %p824 = scmp.eq.s32.totalorder %s79, 0
      %p825 = por %p823, %p824
      %p826 = scmp.ne.s32.totalorder %s814, %s815
      %p827 = scmp.eq.s32.totalorder %s80, 7
      %p828 = por %p826, %p827
      %p830 = scmp.ne.s32.totalorder %s815, %s829
      %p831 = scmp.eq.s32.totalorder %s80, 0
      %p832 = por %p830, %p831
      %s833 = ssub.s32 %s81, %s93
      %p834 = scmp.eq.s32.totalorder %s833, 0
      %s836 = sadd.s32 %s835, 1
      %s837 = scalar_select %p834, %s835, %s836
      %p840 = pneg %p834
      %p841 = scmp.eq.s32.totalorder %s74, 7
      %p842 = por %p840, %p841
      %p843 = scmp.ne.s32.totalorder %s835, %s838
      %p844 = scmp.eq.s32.totalorder %s74, 0
      %p845 = por %p843, %p844
      %p846 = scmp.ne.s32.totalorder %s835, %s838
      %p847 = scmp.eq.s32.totalorder %s79, 7
      %p848 = por %p846, %p847
      %p849 = scmp.ne.s32.totalorder %s838, %s839
      %p850 = scmp.eq.s32.totalorder %s79, 0
      %p851 = por %p849, %p850
      %p852 = scmp.ne.s32.totalorder %s838, %s839
      %p853 = scmp.eq.s32.totalorder %s80, 7
      %p854 = por %p852, %p853
      %p856 = scmp.ne.s32.totalorder %s839, %s855
      %p857 = scmp.eq.s32.totalorder %s80, 0
      %p858 = por %p856, %p857
      %p859 = scmp.le.s32.totalorder 1, %s74
      %p860 = scmp.lt.s32.totalorder %s74, 9
      %p861 = pnand %p859, %p860
      %p862 = pneg %p861
      // Predicated region
      $region9: #{tpu_custom_call.1} parent=5 // pred_check
        _
      $region10: #{tpu_custom_call.1} parent=5 // pred_check_branch
        %864 = sbr.rel (%p861) target = $region12
      $region11: #{tpu_custom_call.1} parent=5 // pred_region
        %s865 = ssub.s32 %s74, 1
        // Predicated region
        $region13: #{tpu_custom_call.1} parent=11 // pred_check
          %p866 = pneg %p133
        $region14: #{tpu_custom_call.1} parent=11 // pred_check_branch
          %868 = sbr.rel (%p866) target = $region16
        $region15: #{tpu_custom_call.1} parent=11 // pred_region
          _
        $region16: #{tpu_custom_call.1} parent=11 // pred_fallthru
          _
        // Predicated region
        $region17: #{tpu_custom_call.1} parent=11 // pred_check
          %p869 = pneg %p154
        $region18: #{tpu_custom_call.1} parent=11 // pred_check_branch
          %871 = sbr.rel (%p869) target = $region20
        $region19: #{tpu_custom_call.1} parent=11 // pred_region
          _
        $region20: #{tpu_custom_call.1} parent=11 // pred_fallthru
          _
        // Predicated region
        $region21: #{tpu_custom_call.1} parent=11 // pred_check
          %p872 = pneg %p825
        $region22: #{tpu_custom_call.1} parent=11 // pred_check_branch
          %874 = sbr.rel (%p872) target = $region24
        $region23: #{tpu_custom_call.1} parent=11 // pred_region
          _
        $region24: #{tpu_custom_call.1} parent=11 // pred_fallthru
          _
      $region12: #{tpu_custom_call.1} parent=5 // pred_fallthru
        _
      %p875 = scmp.lt.s32.totalorder %s74, 8
      // Predicated region
      $region25: #{tpu_custom_call.1} parent=5 // pred_check
        %p876 = pneg %p875
      $region26: #{tpu_custom_call.1} parent=5 // pred_check_branch
        %878 = sbr.rel (%p876) target = $region28
      $region27: #{tpu_custom_call.1} parent=5 // pred_region
        // Predicated region
        $region29: #{tpu_custom_call.1} parent=27 // pred_check
          %p879 = pneg %p106
        $region30: #{tpu_custom_call.1} parent=27 // pred_check_branch
          %881 = sbr.rel (%p879) target = $region32
        $region31: #{tpu_custom_call.1} parent=27 // pred_region
          %p882 = scmp.lt.s32.totalorder %s81, 1
          %s883 = scalar_select %p882, %s81, 1
          %s884 = smul.addr %s883, 8
          %s885 = scalar_lea.vmem %s1, %s884
        $region32: #{tpu_custom_call.1} parent=27 // pred_fallthru
          _
        // Predicated region
        $region33: #{tpu_custom_call.1} parent=27 // pred_check
          %p886 = pneg %p174
        $region34: #{tpu_custom_call.1} parent=27 // pred_check_branch
          %888 = sbr.rel (%p886) target = $region36
        $region35: #{tpu_custom_call.1} parent=27 // pred_region
          %p889 = scmp.lt.s32.totalorder %s82, 3
          %s890 = scalar_select %p889, %s82, 3
          %s891 = smul.addr %s890, 2
          %s892 = scalar_lea.vmem %s7, %s891
        $region36: #{tpu_custom_call.1} parent=27 // pred_fallthru
          _
        // Predicated region
        $region37: #{tpu_custom_call.1} parent=27 // pred_check
          %p893 = pneg %p200
        $region38: #{tpu_custom_call.1} parent=27 // pred_check_branch
          %895 = sbr.rel (%p893) target = $region40
        $region39: #{tpu_custom_call.1} parent=27 // pred_region
          %p896 = scmp.lt.s32.totalorder %s82, 3
          %s897 = scalar_select %p896, %s82, 3
          %s898 = smul.addr %s897, 4
          %s899 = smul.addr %s898, 4
          %s900 = scalar_lea.vmem %s9, %s899
        $region40: #{tpu_custom_call.1} parent=27 // pred_fallthru
          _
        // Predicated region
        $region41: #{tpu_custom_call.1} parent=27 // pred_check
          %p901 = pneg %p226
        $region42: #{tpu_custom_call.1} parent=27 // pred_check_branch
          %903 = sbr.rel (%p901) target = $region44
        $region43: #{tpu_custom_call.1} parent=27 // pred_region
          %p904 = scmp.lt.s32.totalorder %s82, 3
          %s905 = scalar_select %p904, %s82, 3
          %s906 = scalar_lea.vmem %s11, %s905
        $region44: #{tpu_custom_call.1} parent=27 // pred_fallthru
          _
        // Predicated region
        $region45: #{tpu_custom_call.1} parent=27 // pred_check
          %p907 = pneg %p252
        $region46: #{tpu_custom_call.1} parent=27 // pred_check_branch
          %909 = sbr.rel (%p907) target = $region48
        $region47: #{tpu_custom_call.1} parent=27 // pred_region
          %s910 = sand.u32 %s242, 1
          %s911 = scalar_lea.sflag [#allocation5], %s910
          %s912 = sand.u32 %s242, 1
          %s913 = scalar_lea.vmem [#allocation4], %s912
          %s915 = ssub.s32 16, 16
          %916 = vsyncadd %s911, %s915
          %s917 = smul.addr %s82, 16
          %s918 = scalar_lea.hbm %s13, %s917
          %s920 = sshll.u32 %s913, 4
          %s921 = int_to_ptr.vmem [resolvable:$true] %s920
          %923 = dma.hbm_to_vmem [thread:$0]  %s918, 16, %s921, %s911
        $region48: #{tpu_custom_call.1} parent=27 // pred_fallthru
          _
        // Predicated region
        $region49: #{tpu_custom_call.1} parent=27 // pred_check
          %p924 = pneg %p278
        $region50: #{tpu_custom_call.1} parent=27 // pred_check_branch
          %926 = sbr.rel (%p924) target = $region52
        $region51: #{tpu_custom_call.1} parent=27 // pred_region
          %s927 = sand.u32 %s74, 1
          %s928 = scalar_lea.sflag [#allocation8], %s927
          %s929 = sand.u32 %s268, 1
          %s930 = scalar_lea.vmem [#allocation7], %s929
          %s932 = ssub.s32 16, 16
          %933 = vsyncadd %s928, %s932
          %s934 = smul.addr %s82, 16
          %s935 = scalar_lea.hbm %s15, %s934
          %s937 = sshll.u32 %s930, 4
          %s938 = int_to_ptr.vmem [resolvable:$true] %s937
          %940 = dma.hbm_to_vmem [thread:$0]  %s935, 16, %s938, %s928
        $region52: #{tpu_custom_call.1} parent=27 // pred_fallthru
          _
        // Predicated region
        $region53: #{tpu_custom_call.1} parent=27 // pred_check
          %p941 = pneg %p304
        $region54: #{tpu_custom_call.1} parent=27 // pred_check_branch
          %943 = sbr.rel (%p941) target = $region56
        $region55: #{tpu_custom_call.1} parent=27 // pred_region
          %p944 = scmp.lt.s32.totalorder %s82, 3
          %s945 = scalar_select %p944, %s82, 3
          %s946 = smul.addr %s945, 8
          %s947 = smul.addr %s946, 4
          %s948 = scalar_lea.vmem %s17, %s947
        $region56: #{tpu_custom_call.1} parent=27 // pred_fallthru
          _
        // Predicated region
        $region57: #{tpu_custom_call.1} parent=27 // pred_check
          %p949 = pneg %p330
        $region58: #{tpu_custom_call.1} parent=27 // pred_check_branch
          %951 = sbr.rel (%p949) target = $region60
        $region59: #{tpu_custom_call.1} parent=27 // pred_region
          %p952 = scmp.lt.s32.totalorder %s82, 3
          %s953 = scalar_select %p952, %s82, 3
          %s954 = smul.addr %s953, 8
          %s955 = smul.addr %s954, 4
          %s956 = scalar_lea.vmem %s19, %s955
        $region60: #{tpu_custom_call.1} parent=27 // pred_fallthru
          _
        // Predicated region
        $region61: #{tpu_custom_call.1} parent=27 // pred_check
          %p957 = pneg %p356
        $region62: #{tpu_custom_call.1} parent=27 // pred_check_branch
          %959 = sbr.rel (%p957) target = $region64
        $region63: #{tpu_custom_call.1} parent=27 // pred_region
          %s960 = sand.u32 %s74, 1
          %s961 = scalar_lea.sflag [#allocation8], %s960
          %s962 = sand.u32 %s346, 1
          %s963 = scalar_lea.vmem [#allocation9], %s962
          %s965 = ssub.s32 16, 16
          %966 = vsyncadd %s961, %s965
          %s967 = smul.addr %s82, 16
          %s968 = scalar_lea.hbm %s21, %s967
          %s970 = sshll.u32 %s963, 4
          %s971 = int_to_ptr.vmem [resolvable:$true] %s970
          %973 = dma.hbm_to_vmem [thread:$0]  %s968, 16, %s971, %s961
        $region64: #{tpu_custom_call.1} parent=27 // pred_fallthru
          _
        // Predicated region
        $region65: #{tpu_custom_call.1} parent=27 // pred_check
          %p974 = pneg %p382
        $region66: #{tpu_custom_call.1} parent=27 // pred_check_branch
          %976 = sbr.rel (%p974) target = $region68
        $region67: #{tpu_custom_call.1} parent=27 // pred_region
          %p977 = scmp.lt.s32.totalorder %s82, 3
          %s978 = scalar_select %p977, %s82, 3
          %s979 = smul.addr %s978, 2
          %s980 = scalar_lea.vmem %s23, %s979
        $region68: #{tpu_custom_call.1} parent=27 // pred_fallthru
          _
        // Predicated region
        $region69: #{tpu_custom_call.1} parent=27 // pred_check
          %p981 = pneg %p408
        $region70: #{tpu_custom_call.1} parent=27 // pred_check_branch
          %983 = sbr.rel (%p981) target = $region72
        $region71: #{tpu_custom_call.1} parent=27 // pred_region
          %p984 = scmp.lt.s32.totalorder %s82, 3
          %s985 = scalar_select %p984, %s82, 3
          %s986 = smul.addr %s985, 4
          %s987 = smul.addr %s986, 4
          %s988 = scalar_lea.vmem %s25, %s987
        $region72: #{tpu_custom_call.1} parent=27 // pred_fallthru
          _
        // Predicated region
        $region73: #{tpu_custom_call.1} parent=27 // pred_check
          %p989 = pneg %p434
        $region74: #{tpu_custom_call.1} parent=27 // pred_check_branch
          %991 = sbr.rel (%p989) target = $region76
        $region75: #{tpu_custom_call.1} parent=27 // pred_region
          %p992 = scmp.lt.s32.totalorder %s82, 3
          %s993 = scalar_select %p992, %s82, 3
          %s994 = scalar_lea.vmem %s27, %s993
        $region76: #{tpu_custom_call.1} parent=27 // pred_fallthru
          _
        // Predicated region
        $region77: #{tpu_custom_call.1} parent=27 // pred_check
          %p995 = pneg %p460
        $region78: #{tpu_custom_call.1} parent=27 // pred_check_branch
          %997 = sbr.rel (%p995) target = $region80
        $region79: #{tpu_custom_call.1} parent=27 // pred_region
          %p998 = scmp.lt.s32.totalorder %s82, 3
          %s999 = scalar_select %p998, %s82, 3
          %s1000 = smul.addr %s999, 4
          %s1001 = scalar_lea.vmem %s29, %s1000
        $region80: #{tpu_custom_call.1} parent=27 // pred_fallthru
          _
        // Predicated region
        $region81: #{tpu_custom_call.1} parent=27 // pred_check
          %p1002 = pneg %p486
        $region82: #{tpu_custom_call.1} parent=27 // pred_check_branch
          %1004 = sbr.rel (%p1002) target = $region84
        $region83: #{tpu_custom_call.1} parent=27 // pred_region
          %p1005 = scmp.lt.s32.totalorder %s82, 3
          %s1006 = scalar_select %p1005, %s82, 3
          %s1007 = scalar_lea.vmem %s31, %s1006
        $region84: #{tpu_custom_call.1} parent=27 // pred_fallthru
          _
        // Predicated region
        $region85: #{tpu_custom_call.1} parent=27 // pred_check
          %p1008 = pneg %p512
        $region86: #{tpu_custom_call.1} parent=27 // pred_check_branch
          %1010 = sbr.rel (%p1008) target = $region88
        $region87: #{tpu_custom_call.1} parent=27 // pred_region
          %p1011 = scmp.lt.s32.totalorder %s82, 3
          %s1012 = scalar_select %p1011, %s82, 3
          %s1013 = smul.addr %s1012, 4
          %s1014 = smul.addr %s1013, 4
          %s1015 = scalar_lea.vmem %s33, %s1014
        $region88: #{tpu_custom_call.1} parent=27 // pred_fallthru
          _
        // Predicated region
        $region89: #{tpu_custom_call.1} parent=27 // pred_check
          %p1016 = pneg %p538
        $region90: #{tpu_custom_call.1} parent=27 // pred_check_branch
          %1018 = sbr.rel (%p1016) target = $region92
        $region91: #{tpu_custom_call.1} parent=27 // pred_region
          %p1019 = scmp.lt.s32.totalorder %s82, 3
          %s1020 = scalar_select %p1019, %s82, 3
          %s1021 = scalar_lea.vmem %s35, %s1020
        $region92: #{tpu_custom_call.1} parent=27 // pred_fallthru
          _
        // Predicated region
        $region93: #{tpu_custom_call.1} parent=27 // pred_check
          %p1022 = pneg %p564
        $region94: #{tpu_custom_call.1} parent=27 // pred_check_branch
          %1024 = sbr.rel (%p1022) target = $region96
        $region95: #{tpu_custom_call.1} parent=27 // pred_region
          %p1025 = scmp.lt.s32.totalorder %s82, 3
          %s1026 = scalar_select %p1025, %s82, 3
          %s1027 = smul.addr %s1026, 2
          %s1028 = scalar_lea.vmem %s37, %s1027
        $region96: #{tpu_custom_call.1} parent=27 // pred_fallthru
          _
        // Predicated region
        $region97: #{tpu_custom_call.1} parent=27 // pred_check
          %p1029 = pneg %p590
        $region98: #{tpu_custom_call.1} parent=27 // pred_check_branch
          %1031 = sbr.rel (%p1029) target = $region100
        $region99: #{tpu_custom_call.1} parent=27 // pred_region
          %p1032 = scmp.lt.s32.totalorder %s82, 3
          %s1033 = scalar_select %p1032, %s82, 3
          %s1034 = smul.addr %s1033, 4
          %s1035 = smul.addr %s1034, 4
          %s1036 = scalar_lea.vmem %s39, %s1035
        $region100: #{tpu_custom_call.1} parent=27 // pred_fallthru
          _
        // Predicated region
        $region101: #{tpu_custom_call.1} parent=27 // pred_check
          %p1037 = pneg %p616
        $region102: #{tpu_custom_call.1} parent=27 // pred_check_branch
          %1039 = sbr.rel (%p1037) target = $region104
        $region103: #{tpu_custom_call.1} parent=27 // pred_region
          %p1040 = scmp.lt.s32.totalorder %s82, 3
          %s1041 = scalar_select %p1040, %s82, 3
          %s1042 = scalar_lea.vmem %s41, %s1041
        $region104: #{tpu_custom_call.1} parent=27 // pred_fallthru
          _
        // Predicated region
        $region105: #{tpu_custom_call.1} parent=27 // pred_check
          %p1043 = pneg %p642
        $region106: #{tpu_custom_call.1} parent=27 // pred_check_branch
          %1045 = sbr.rel (%p1043) target = $region108
        $region107: #{tpu_custom_call.1} parent=27 // pred_region
          %p1046 = scmp.lt.s32.totalorder %s82, 3
          %s1047 = scalar_select %p1046, %s82, 3
          %s1048 = smul.addr %s1047, 2
          %s1049 = scalar_lea.vmem %s43, %s1048
        $region108: #{tpu_custom_call.1} parent=27 // pred_fallthru
          _
        // Predicated region
        $region109: #{tpu_custom_call.1} parent=27 // pred_check
          %p1050 = pneg %p668
        $region110: #{tpu_custom_call.1} parent=27 // pred_check_branch
          %1052 = sbr.rel (%p1050) target = $region112
        $region111: #{tpu_custom_call.1} parent=27 // pred_region
          %p1053 = scmp.lt.s32.totalorder %s82, 3
          %s1054 = scalar_select %p1053, %s82, 3
          %s1055 = smul.addr %s1054, 4
          %s1056 = scalar_lea.vmem %s45, %s1055
        $region112: #{tpu_custom_call.1} parent=27 // pred_fallthru
          _
        // Predicated region
        $region113: #{tpu_custom_call.1} parent=27 // pred_check
          %p1057 = pneg %p694
        $region114: #{tpu_custom_call.1} parent=27 // pred_check_branch
          %1059 = sbr.rel (%p1057) target = $region116
        $region115: #{tpu_custom_call.1} parent=27 // pred_region
          %p1060 = scmp.lt.s32.totalorder %s82, 3
          %s1061 = scalar_select %p1060, %s82, 3
          %s1062 = scalar_lea.vmem %s47, %s1061
        $region116: #{tpu_custom_call.1} parent=27 // pred_fallthru
          _
        // Predicated region
        $region117: #{tpu_custom_call.1} parent=27 // pred_check
          %p1063 = pneg %p720
        $region118: #{tpu_custom_call.1} parent=27 // pred_check_branch
          %1065 = sbr.rel (%p1063) target = $region120
        $region119: #{tpu_custom_call.1} parent=27 // pred_region
          %p1066 = scmp.lt.s32.totalorder %s82, 3
          %s1067 = scalar_select %p1066, %s82, 3
          %s1068 = smul.addr %s1067, 2
          %s1069 = scalar_lea.vmem %s49, %s1068
        $region120: #{tpu_custom_call.1} parent=27 // pred_fallthru
          _
        // Predicated region
        $region121: #{tpu_custom_call.1} parent=27 // pred_check
          %p1070 = pneg %p746
        $region122: #{tpu_custom_call.1} parent=27 // pred_check_branch
          %1072 = sbr.rel (%p1070) target = $region124
        $region123: #{tpu_custom_call.1} parent=27 // pred_region
          %p1073 = scmp.lt.s32.totalorder %s82, 3
          %s1074 = scalar_select %p1073, %s82, 3
          %s1075 = smul.addr %s1074, 8
          %s1076 = smul.addr %s1075, 4
          %s1077 = scalar_lea.vmem %s51, %s1076
        $region124: #{tpu_custom_call.1} parent=27 // pred_fallthru
          _
        // Predicated region
        $region125: #{tpu_custom_call.1} parent=27 // pred_check
          %p1078 = pneg %p772
        $region126: #{tpu_custom_call.1} parent=27 // pred_check_branch
          %1080 = sbr.rel (%p1078) target = $region128
        $region127: #{tpu_custom_call.1} parent=27 // pred_region
          %p1081 = scmp.lt.s32.totalorder %s82, 3
          %s1082 = scalar_select %p1081, %s82, 3
          %s1083 = scalar_lea.vmem %s53, %s1082
        $region128: #{tpu_custom_call.1} parent=27 // pred_fallthru
          _
        // Predicated region
        $region129: #{tpu_custom_call.1} parent=27 // pred_check
          %p1084 = pneg %p798
        $region130: #{tpu_custom_call.1} parent=27 // pred_check_branch
          %1086 = sbr.rel (%p1084) target = $region132
        $region131: #{tpu_custom_call.1} parent=27 // pred_region
          %p1087 = scmp.lt.s32.totalorder %s82, 3
          %s1088 = scalar_select %p1087, %s82, 3
          %s1089 = smul.addr %s1088, 2
          %s1090 = scalar_lea.vmem %s55, %s1089
        $region132: #{tpu_custom_call.1} parent=27 // pred_fallthru
          _
      $region28: #{tpu_custom_call.1} parent=5 // pred_fallthru
        _
      %p1091 = scmp.le.s32.totalorder 1, %s74
      %p1092 = scmp.lt.s32.totalorder %s74, 9
      %p1093 = pnand %p1091, %p1092
      %p1094 = pneg %p1093
      // Predicated region
      $region133: #{tpu_custom_call.1} parent=5 // pred_check
        _
      $region134: #{tpu_custom_call.1} parent=5 // pred_check_branch
        %1096 = sbr.rel (%p1093) target = $region136
      $region135: #{tpu_custom_call.1} parent=5 // pred_region
        %s1097 = ssub.s32 %s74, 1
        %s1098 = sand.u32 %s245, 1
        %s1099 = scalar_lea.sflag [#allocation5], %s1098
        %s1100 = sand.u32 %s245, 1
        %s1101 = scalar_lea.vmem [#allocation4], %s1100
        // Predicated region
        $region137: #{tpu_custom_call.1} parent=135 // pred_check
          %p1102 = pneg %p258
        $region138: #{tpu_custom_call.1} parent=135 // pred_check_branch
          %1104 = sbr.rel (%p1102) target = $region140
        $region139: #{tpu_custom_call.1} parent=135 // pred_region
          %1105 = dma.done %s1099, 16
        $region140: #{tpu_custom_call.1} parent=135 // pred_fallthru
          _
        %s1106 = sand.u32 %s79, 1
        %s1107 = scalar_lea.sflag [#allocation8], %s1106
        %s1108 = sand.u32 %s271, 1
        %s1109 = scalar_lea.vmem [#allocation7], %s1108
        // Predicated region
        $region141: #{tpu_custom_call.1} parent=135 // pred_check
          %p1110 = pneg %p284
        $region142: #{tpu_custom_call.1} parent=135 // pred_check_branch
          %1112 = sbr.rel (%p1110) target = $region144
        $region143: #{tpu_custom_call.1} parent=135 // pred_region
          %1113 = dma.done %s1107, 16
        $region144: #{tpu_custom_call.1} parent=135 // pred_fallthru
          _
        %s1114 = sand.u32 %s79, 1
        %s1115 = scalar_lea.sflag [#allocation8], %s1114
        %s1116 = sand.u32 %s349, 1
        %s1117 = scalar_lea.vmem [#allocation9], %s1116
        // Predicated region
        $region145: #{tpu_custom_call.1} parent=135 // pred_check
          %p1118 = pneg %p362
        $region146: #{tpu_custom_call.1} parent=135 // pred_check_branch
          %1120 = sbr.rel (%p1118) target = $region148
        $region147: #{tpu_custom_call.1} parent=135 // pred_region
          %1121 = dma.done %s1115, 16
        $region148: #{tpu_custom_call.1} parent=135 // pred_fallthru
          _
        %p1122 = scmp.lt.s32.totalorder %s83, 1
        %s1123 = scalar_select %p1122, %s83, 1
        %s1124 = smul.addr %s1123, 8
        %s1125 = scalar_lea.vmem %s1, %s1124
        %p1126 = pneg %p112
        %p1127 = pneg %p109
        %p1128 = pneg %p133
        %p1129 = pneg %p130
        %p1130 = pneg %p154
        %p1131 = pneg %p151
        %p1132 = scmp.lt.s32.totalorder %s84, 3
        %s1133 = scalar_select %p1132, %s84, 3
        %s1134 = smul.addr %s1133, 2
        %s1135 = scalar_lea.vmem %s7, %s1134
        %p1136 = pneg %p180
        %p1137 = pneg %p177
        %p1138 = scmp.lt.s32.totalorder %s84, 3
        %s1139 = scalar_select %p1138, %s84, 3
        %s1140 = smul.addr %s1139, 4
        %s1141 = smul.addr %s1140, 4
        %s1142 = scalar_lea.vmem %s9, %s1141
        %p1143 = pneg %p206
        %p1144 = pneg %p203
        %p1145 = scmp.lt.s32.totalorder %s84, 3
        %s1146 = scalar_select %p1145, %s84, 3
        %s1147 = scalar_lea.vmem %s11, %s1146
        %p1148 = pneg %p232
        %p1149 = pneg %p229
        %s1150 = sand.u32 %s245, 1
        %s1151 = scalar_lea.sflag [#allocation5], %s1150
        %s1152 = sand.u32 %s245, 1
        %s1153 = scalar_lea.vmem [#allocation4], %s1152
        %p1154 = pneg %p258
        %p1155 = pneg %p255
        %s1156 = sand.u32 %s79, 1
        %s1157 = scalar_lea.sflag [#allocation8], %s1156
        %s1158 = sand.u32 %s271, 1
        %s1159 = scalar_lea.vmem [#allocation7], %s1158
        %p1160 = pneg %p284
        %p1161 = pneg %p281
        %p1162 = scmp.lt.s32.totalorder %s84, 3
        %s1163 = scalar_select %p1162, %s84, 3
        %s1164 = smul.addr %s1163, 8
        %s1165 = smul.addr %s1164, 4
        %s1166 = scalar_lea.vmem %s17, %s1165
        %p1167 = pneg %p310
        %p1168 = pneg %p307
        %p1169 = scmp.lt.s32.totalorder %s84, 3
        %s1170 = scalar_select %p1169, %s84, 3
        %s1171 = smul.addr %s1170, 8
        %s1172 = smul.addr %s1171, 4
        %s1173 = scalar_lea.vmem %s19, %s1172
        %p1174 = pneg %p336
        %p1175 = pneg %p333
        %s1176 = sand.u32 %s79, 1
        %s1177 = scalar_lea.sflag [#allocation8], %s1176
        %s1178 = sand.u32 %s349, 1
        %s1179 = scalar_lea.vmem [#allocation9], %s1178
        %p1180 = pneg %p362
        %p1181 = pneg %p359
        %p1182 = scmp.lt.s32.totalorder %s84, 3
        %s1183 = scalar_select %p1182, %s84, 3
        %s1184 = smul.addr %s1183, 2
        %s1185 = scalar_lea.vmem %s23, %s1184
        %p1186 = pneg %p388
        %p1187 = pneg %p385
        %p1188 = scmp.lt.s32.totalorder %s84, 3
        %s1189 = scalar_select %p1188, %s84, 3
        %s1190 = smul.addr %s1189, 4
        %s1191 = smul.addr %s1190, 4
        %s1192 = scalar_lea.vmem %s25, %s1191
        %p1193 = pneg %p414
        %p1194 = pneg %p411
        %p1195 = scmp.lt.s32.totalorder %s84, 3
        %s1196 = scalar_select %p1195, %s84, 3
        %s1197 = scalar_lea.vmem %s27, %s1196
        %p1198 = pneg %p440
        %p1199 = pneg %p437
        %p1200 = scmp.lt.s32.totalorder %s84, 3
        %s1201 = scalar_select %p1200, %s84, 3
        %s1202 = smul.addr %s1201, 4
        %s1203 = scalar_lea.vmem %s29, %s1202
        %p1204 = pneg %p466
        %p1205 = pneg %p463
        %p1206 = scmp.lt.s32.totalorder %s84, 3
        %s1207 = scalar_select %p1206, %s84, 3
        %s1208 = scalar_lea.vmem %s31, %s1207
        %p1209 = pneg %p492
        %p1210 = pneg %p489
        %p1211 = scmp.lt.s32.totalorder %s84, 3
        %s1212 = scalar_select %p1211, %s84, 3
        %s1213 = smul.addr %s1212, 4
        %s1214 = smul.addr %s1213, 4
        %s1215 = scalar_lea.vmem %s33, %s1214
        %p1216 = pneg %p518
        %p1217 = pneg %p515
        %p1218 = scmp.lt.s32.totalorder %s84, 3
        %s1219 = scalar_select %p1218, %s84, 3
        %s1220 = scalar_lea.vmem %s35, %s1219
        %p1221 = pneg %p544
        %p1222 = pneg %p541
        %p1223 = scmp.lt.s32.totalorder %s84, 3
        %s1224 = scalar_select %p1223, %s84, 3
        %s1225 = smul.addr %s1224, 2
        %s1226 = scalar_lea.vmem %s37, %s1225
        %p1227 = pneg %p570
        %p1228 = pneg %p567
        %p1229 = scmp.lt.s32.totalorder %s84, 3
        %s1230 = scalar_select %p1229, %s84, 3
        %s1231 = smul.addr %s1230, 4
        %s1232 = smul.addr %s1231, 4
        %s1233 = scalar_lea.vmem %s39, %s1232
        %p1234 = pneg %p596
        %p1235 = pneg %p593
        %p1236 = scmp.lt.s32.totalorder %s84, 3
        %s1237 = scalar_select %p1236, %s84, 3
        %s1238 = scalar_lea.vmem %s41, %s1237
        %p1239 = pneg %p622
        %p1240 = pneg %p619
        %p1241 = scmp.lt.s32.totalorder %s84, 3
        %s1242 = scalar_select %p1241, %s84, 3
        %s1243 = smul.addr %s1242, 2
        %s1244 = scalar_lea.vmem %s43, %s1243
        %p1245 = pneg %p648
        %p1246 = pneg %p645
        %p1247 = scmp.lt.s32.totalorder %s84, 3
        %s1248 = scalar_select %p1247, %s84, 3
        %s1249 = smul.addr %s1248, 4
        %s1250 = scalar_lea.vmem %s45, %s1249
        %p1251 = pneg %p674
        %p1252 = pneg %p671
        %p1253 = scmp.lt.s32.totalorder %s84, 3
        %s1254 = scalar_select %p1253, %s84, 3
        %s1255 = scalar_lea.vmem %s47, %s1254
        %p1256 = pneg %p700
        %p1257 = pneg %p697
        %p1258 = scmp.lt.s32.totalorder %s84, 3
        %s1259 = scalar_select %p1258, %s84, 3
        %s1260 = smul.addr %s1259, 2
        %s1261 = scalar_lea.vmem %s49, %s1260
        %p1262 = pneg %p726
        %p1263 = pneg %p723
        %p1264 = scmp.lt.s32.totalorder %s84, 3
        %s1265 = scalar_select %p1264, %s84, 3
        %s1266 = smul.addr %s1265, 8
        %s1267 = smul.addr %s1266, 4
        %s1268 = scalar_lea.vmem %s51, %s1267
        %p1269 = pneg %p752
        %p1270 = pneg %p749
        %p1271 = scmp.lt.s32.totalorder %s84, 3
        %s1272 = scalar_select %p1271, %s84, 3
        %s1273 = scalar_lea.vmem %s53, %s1272
        %p1274 = pneg %p778
        %p1275 = pneg %p775
        %p1276 = scmp.lt.s32.totalorder %s84, 3
        %s1277 = scalar_select %p1276, %s84, 3
        %s1278 = smul.addr %s1277, 2
        %s1279 = scalar_lea.vmem %s55, %s1278
        %p1280 = pneg %p804
        %p1281 = pneg %p801
        %p1282 = pneg %p825
        %p1283 = pneg %p822
        %p1284 = pneg %p851
        %p1285 = pneg %p848
        %s1286 = sand.u32 %s838, 1
        %s1287 = scalar_lea.sflag [#allocation6], %s1286
        %s1288 = sand.u32 %s838, 1
        %s1289 = smul.addr %s1288, 32
        %s1290 = scalar_lea.vmem [#allocation10], %s1289
        %p1291 = scmp.lt.s32.totalorder %s83, 1
        %s1292 = scalar_select %p1291, %s83, 1
        %s1293 = smul.addr %s1292, 8
        %s1294 = scalar_lea.vmem %s1, %s1293
        %p1295 = scmp.lt.s32.totalorder %s84, 3
        %s1296 = scalar_select %p1295, %s84, 3
        %s1297 = smul.addr %s1296, 2
        %s1298 = scalar_lea.vmem %s7, %s1297
        %p1299 = scmp.lt.s32.totalorder %s84, 3
        %s1300 = scalar_select %p1299, %s84, 3
        %s1301 = smul.addr %s1300, 4
        %s1302 = smul.addr %s1301, 4
        %s1303 = scalar_lea.vmem %s9, %s1302
        %p1304 = scmp.lt.s32.totalorder %s84, 3
        %s1305 = scalar_select %p1304, %s84, 3
        %s1306 = scalar_lea.vmem %s11, %s1305
        %p1307 = scmp.lt.s32.totalorder %s84, 3
        %s1308 = scalar_select %p1307, %s84, 3
        %s1309 = smul.addr %s1308, 8
        %s1310 = smul.addr %s1309, 4
        %s1311 = scalar_lea.vmem %s17, %s1310
        %p1312 = scmp.lt.s32.totalorder %s84, 3
        %s1313 = scalar_select %p1312, %s84, 3
        %s1314 = smul.addr %s1313, 8
        %s1315 = smul.addr %s1314, 4
        %s1316 = scalar_lea.vmem %s19, %s1315
        %p1317 = scmp.lt.s32.totalorder %s84, 3
        %s1318 = scalar_select %p1317, %s84, 3
        %s1319 = smul.addr %s1318, 2
        %s1320 = scalar_lea.vmem %s23, %s1319
        %p1321 = scmp.lt.s32.totalorder %s84, 3
        %s1322 = scalar_select %p1321, %s84, 3
        %s1323 = smul.addr %s1322, 4
        %s1324 = smul.addr %s1323, 4
        %s1325 = scalar_lea.vmem %s25, %s1324
        %p1326 = scmp.lt.s32.totalorder %s84, 3
        %s1327 = scalar_select %p1326, %s84, 3
        %s1328 = scalar_lea.vmem %s27, %s1327
        %p1329 = scmp.lt.s32.totalorder %s84, 3
        %s1330 = scalar_select %p1329, %s84, 3
        %s1331 = smul.addr %s1330, 4
        %s1332 = scalar_lea.vmem %s29, %s1331
        %p1333 = scmp.lt.s32.totalorder %s84, 3
        %s1334 = scalar_select %p1333, %s84, 3
        %s1335 = scalar_lea.vmem %s31, %s1334
        %p1336 = scmp.lt.s32.totalorder %s84, 3
        %s1337 = scalar_select %p1336, %s84, 3
        %s1338 = smul.addr %s1337, 4
        %s1339 = smul.addr %s1338, 4
        %s1340 = scalar_lea.vmem %s33, %s1339
        %p1341 = scmp.lt.s32.totalorder %s84, 3
        %s1342 = scalar_select %p1341, %s84, 3
        %s1343 = scalar_lea.vmem %s35, %s1342
        %p1344 = scmp.lt.s32.totalorder %s84, 3
        %s1345 = scalar_select %p1344, %s84, 3
        %s1346 = smul.addr %s1345, 2
        %s1347 = scalar_lea.vmem %s37, %s1346
        %p1348 = scmp.lt.s32.totalorder %s84, 3
        %s1349 = scalar_select %p1348, %s84, 3
        %s1350 = smul.addr %s1349, 4
        %s1351 = smul.addr %s1350, 4
        %s1352 = scalar_lea.vmem %s39, %s1351
        %p1353 = scmp.lt.s32.totalorder %s84, 3
        %s1354 = scalar_select %p1353, %s84, 3
        %s1355 = scalar_lea.vmem %s41, %s1354
        %p1356 = scmp.lt.s32.totalorder %s84, 3
        %s1357 = scalar_select %p1356, %s84, 3
        %s1358 = smul.addr %s1357, 2
        %s1359 = scalar_lea.vmem %s43, %s1358
        %p1360 = scmp.lt.s32.totalorder %s84, 3
        %s1361 = scalar_select %p1360, %s84, 3
        %s1362 = smul.addr %s1361, 4
        %s1363 = scalar_lea.vmem %s45, %s1362
        %p1364 = scmp.lt.s32.totalorder %s84, 3
        %s1365 = scalar_select %p1364, %s84, 3
        %s1366 = scalar_lea.vmem %s47, %s1365
        %p1367 = scmp.lt.s32.totalorder %s84, 3
        %s1368 = scalar_select %p1367, %s84, 3
        %s1369 = smul.addr %s1368, 2
        %s1370 = scalar_lea.vmem %s49, %s1369
        %p1371 = scmp.lt.s32.totalorder %s84, 3
        %s1372 = scalar_select %p1371, %s84, 3
        %s1373 = smul.addr %s1372, 8
        %s1374 = smul.addr %s1373, 4
        %s1375 = scalar_lea.vmem %s51, %s1374
        %p1376 = scmp.lt.s32.totalorder %s84, 3
        %s1377 = scalar_select %p1376, %s84, 3
        %s1378 = scalar_lea.vmem %s53, %s1377
        %p1379 = scmp.lt.s32.totalorder %s84, 3
        %s1380 = scalar_select %p1379, %s84, 3
        %s1381 = smul.addr %s1380, 2
        %s1382 = scalar_lea.vmem %s55, %s1381
        %p1384 = scmp.eq.s32.totalorder %s84, 0
        // Predicated region
        $region149: #{tpu_custom_call.1} parent=135 // pred_check
          %p1385 = pneg %p1384
        $region150: #{tpu_custom_call.1} parent=135 // pred_check_branch
          %1387 = sbr.rel (%p1385) target = $region152
        $region151: #{tpu_custom_call.1} parent=135 // pred_region
          %v1388 = vld [vmem:[%s1294] sm:$0xff]
          %vm1389 = vcmask 261120
          %1390 = vst.msk [vmem:[#allocation2] sm:$0xff] %vm1389, %v1388
        $region152: #{tpu_custom_call.1} parent=135 // pred_fallthru
          _
        %v1391 = vld [vmem:[#allocation2] sm:$0xff]
        %v1392 = vld [vmem:[%s1298] sm:$0x3]
        %v1393 = vld [vmem:[%s1303] sm:$0xf]
        %v1394 = vld [vmem:[%s1303 + $0x4] sm:$0xf]
        %v1395 = vld [vmem:[%s1303 + $0x8] sm:$0xf]
        %v1396 = vld [vmem:[%s1303 + $0xc] sm:$0xf]
        %v1397 = vld [vmem:[%s1306] sm:$0x1]
        %v1398 = vld [vmem:[%s1101] sm:$0x1]
        %v1399 = vld [vmem:[%s1109] sm:$0x1]
        %v1400 = vld [vmem:[%s1311] sm:$0xff]
        %v1401 = vld [vmem:[%s1311 + $0x8] sm:$0xff]
        %v1402 = vld [vmem:[%s1311 + $0x10] sm:$0xff]
        %v1403 = vld [vmem:[%s1311 + $0x18] sm:$0xff]
        %v1404 = vld [vmem:[%s1316] sm:$0xf]
        %v1405 = vld [vmem:[%s1316 + $0x4] sm:$0xf]
        %v1406 = vld [vmem:[%s1316 + $0x8] sm:$0xf]
        %v1407 = vld [vmem:[%s1316 + $0xc] sm:$0xf]
        %v1408 = vld [vmem:[%s1316 + $0x10] sm:$0xf]
        %v1409 = vld [vmem:[%s1316 + $0x14] sm:$0xf]
        %v1410 = vld [vmem:[%s1316 + $0x18] sm:$0xf]
        %v1411 = vld [vmem:[%s1316 + $0x1c] sm:$0xf]
        %v1412 = vld [vmem:[%s1117] sm:$0x1]
        %vm1413 = vcmask 261120
        %v1414 = vsel %vm1413, %v1391, 0.0
        %1415 = vadd.xlane.f32.xlu0 %v1414
        %v1416 = vpop.xlane.xlu0 %1415
        %v1417 = vrcp.pop 32.0
        %v1418 = vmul.f32 %v1416, %v1417
        %v1419 = vsub.f32 %v1391, %v1418
        %v1420 = vmul.f32 %v1419, %v1419
        %v1421 = vsel %vm1413, %v1420, 0.0
        %1422 = vadd.xlane.f32.xlu0 %v1421
        %v1423 = vpop.xlane.xlu0 %1422
        %v1424 = vmul.f32 %v1423, %v1417
        %v1425 = vadd.f32 %v1424, 1e-05
        %v1426 = vrsqrt.pop %v1425
        %v1427 = vmul.f32 %v1419, %v1426
        %v1428 = vlaneseq
        %v1429 = vshrl.u32 %v1428, 7
        %v1430 = vsub.s32 0, %v1429
        %v1431 = vrot.slane %v1392, %v1430
        %v1432 = vmul.f32 %v1427, %v1431
        %v1433 = vlaneseq
        %v1434 = vshrl.u32 %v1433, 7
        %v1435 = vsub.s32 1, %v1434
        %v1436 = vrot.slane %v1392, %v1435
        %v1437 = vadd.f32 %v1432, %v1436
        %v1438 = vpack.c.bf16 %v1437, %v1437
        %v1440 = vlaneseq
        %v1441 = vshrl.u32 %v1440, 7
        %v1442 = vsub.s32 0, %v1441
        %v1443 = vrot.slane %v1397, %v1442
        %v1449 = vunpack.c.l.b16 %v1393
        %v1450 = vunpack.c.l.b16 %v1394
        %v1451 = vunpack.c.l.b16 %v1395
        %v1452 = vunpack.c.l.b16 %v1396
        %v1453 = vpack.c.b16 %v1450, %v1449
        %v1454 = vpack.c.b16 %v1452, %v1451
        %v1458 = vsel %vm1413, %v1438, 0
        %1460 = vmatprep.subr.bf16.mxu0 0
        %1461 = vmatpush1.bf16.msra.mxu0 %v1453
        %1462 = vmatprep.subr.bf16.mxu0 0
        %1463 = vmatpush1.bf16.msra.mxu0 %v1454
        %1464 = vmatprep.subr.bf16.mxu0 0
        %1465 = vmatpush1.bf16.msra.mxu0 0
        %1466 = vmatprep.subr.bf16.mxu0 0
        %1467 = vmatpush1.bf16.msra.mxu0 0
        %1468 = vmatprep.subr.bf16.mxu0 0
        %1469 = vmatpush1.bf16.msra.mxu0 0
        %1470 = vmatprep.subr.bf16.mxu0 0
        %1471 = vmatpush1.bf16.msra.mxu0 0
        %1472 = vmatprep.subr.bf16.mxu0 0
        %1473 = vmatpush1.bf16.msra.mxu0 0
        %1474 = vmatprep.subr.bf16.mxu0 0
        %1475 = vmatpush1.bf16.msra.mxu0 0
        %1476 = vmatprep.subr.bf16.mxu0 0
        %1477 = vmatpush1.bf16.msra.mxu0 0
        %1478 = vmatprep.subr.bf16.mxu0 0
        %1479 = vmatpush1.bf16.msra.mxu0 0
        %1480 = vmatprep.subr.bf16.mxu0 0
        %1481 = vmatpush1.bf16.msra.mxu0 0
        %1482 = vmatprep.subr.bf16.mxu0 0
        %1483 = vmatpush1.bf16.msra.mxu0 0
        %1484 = vmatprep.subr.bf16.mxu0 0
        %1485 = vmatpush1.bf16.msra.mxu0 0
        %1486 = vmatprep.subr.bf16.mxu0 0
        %1487 = vmatpush1.bf16.msra.mxu0 0
        %1488 = vmatprep.subr.bf16.mxu0 0
        %1489 = vmatpush1.bf16.msra.mxu0 0
        %1490 = vmatprep.subr.bf16.mxu0 0
        %1491 = vmatpush1.bf16.msra.mxu0 0
        %1492 = vmatprep.mubr.bf16.mxu0 0
        %1493 = vmatmul.mubr.bf16.gmra.mrb[0].mxu0 %v1458
        %v1494 = vpop.f32.mrb[0].mxu0
        %v1495 = vadd.f32 %v1443, %v1494
        %v1496 = vpop.f32.mrb[0].mxu0
        %v1497 = vpop.f32.mrb[0].mxu0
        %v1498 = vpop.f32.mrb[0].mxu0
        %1499 = vdwg.mxu0
        %v1500 = vmul.f32 %v1495, 0.5
        %v1501 = vmul.f32 %v1495, 0.70710677
        %vm1502 = vcmp.ge.f32.partialorder %v1501, 0.0
        %v1503 = vsel %vm1502, 1.0, -1.0
        %v1504 = vand.u32 2147483647, %v1501
        %v1505 = vmul.f32 %v1504, 0.3275911
        %v1506 = vadd.f32 %v1505, 1.0
        %v1507 = vrcp.pop %v1506
        %v1508 = vmul.f32 1.0, %v1507
        %v1509 = vmul.f32 %v1508, 1.0614054
        %v1510 = vadd.f32 %v1509, -1.4531521
        %v1511 = vmul.f32 %v1510, %v1508
        %v1512 = vadd.f32 %v1511, 1.4214138
        %v1513 = vmul.f32 %v1512, %v1508
        %v1514 = vadd.f32 %v1513, -0.28449672
        %v1515 = vmul.f32 %v1514, %v1508
        %v1516 = vadd.f32 %v1515, 0.2548296
        %v1517 = vmul.f32 %v1516, %v1508
        %v1518 = vsub.f32 0.0, %v1504
        %v1519 = vmul.f32 %v1518, %v1504
        %v1520 = vmul.f32 %v1519, 1.442695
        %v1521 = vpow.pop %v1520
        %v1522 = vmul.f32 %v1517, %v1521
        %v1523 = vsub.f32 1.0, %v1522
        %v1524 = vmul.f32 %v1503, %v1523
        %v1525 = vadd.f32 %v1524, 1.0
        %v1526 = vmul.f32 %v1500, %v1525
        %v1527 = vpack.c.bf16 %v1526, %v1526
        %v1529 = vlaneseq
        %v1530 = vshrl.u32 %v1529, 7
        %v1531 = vsub.s32 0, %v1530
        %v1532 = vrot.slane %v1399, %v1531
        %vm1534 = vcmask 15360
        %v1536 = vsel %vm1534, %v1527, 0
        %vm1538 = vcmask 1040384
        %v1540 = vsel %vm1538, %v1398, 0
        %1542 = vmatprep.subr.bf16.mxu0 0
        %1543 = vmatpush1.bf16.msra.mxu0 %v1540
        %1544 = vmatprep.subr.bf16.mxu0 0
        %1545 = vmatpush1.bf16.msra.mxu0 0
        %1546 = vmatprep.subr.bf16.mxu0 0
        %1547 = vmatpush1.bf16.msra.mxu0 0
        %1548 = vmatprep.subr.bf16.mxu0 0
        %1549 = vmatpush1.bf16.msra.mxu0 0
        %1550 = vmatprep.subr.bf16.mxu0 0
        %1551 = vmatpush1.bf16.msra.mxu0 0
        %1552 = vmatprep.subr.bf16.mxu0 0
        %1553 = vmatpush1.bf16.msra.mxu0 0
        %1554 = vmatprep.subr.bf16.mxu0 0
        %1555 = vmatpush1.bf16.msra.mxu0 0
        %1556 = vmatprep.subr.bf16.mxu0 0
        %1557 = vmatpush1.bf16.msra.mxu0 0
        %1558 = vmatprep.subr.bf16.mxu0 0
        %1559 = vmatpush1.bf16.msra.mxu0 0
        %1560 = vmatprep.subr.bf16.mxu0 0
        %1561 = vmatpush1.bf16.msra.mxu0 0
        %1562 = vmatprep.subr.bf16.mxu0 0
        %1563 = vmatpush1.bf16.msra.mxu0 0
        %1564 = vmatprep.subr.bf16.mxu0 0
        %1565 = vmatpush1.bf16.msra.mxu0 0
        %1566 = vmatprep.subr.bf16.mxu0 0
        %1567 = vmatpush1.bf16.msra.mxu0 0
        %1568 = vmatprep.subr.bf16.mxu0 0
        %1569 = vmatpush1.bf16.msra.mxu0 0
        %1570 = vmatprep.subr.bf16.mxu0 0
        %1571 = vmatpush1.bf16.msra.mxu0 0
        %1572 = vmatprep.subr.bf16.mxu0 0
        %1573 = vmatpush1.bf16.msra.mxu0 0
        %1574 = vmatprep.mubr.bf16.mxu0 0
        %1575 = vmatmul.mubr.bf16.gmra.mrb[0].mxu0 %v1536
        %v1576 = vpop.f32.mrb[0].mxu0
        %v1577 = vadd.f32 %v1532, %v1576
        %v1578 = vpop.f32.mrb[0].mxu0
        %v1579 = vpop.f32.mrb[0].mxu0
        %v1580 = vpop.f32.mrb[0].mxu0
        %1581 = vdwg.mxu0
        %v1582 = vsub.f32 0.0, %v1577
        %v1583 = vmul.f32 %v1582, 1.442695
        %v1584 = vpow.pop %v1583
        %v1585 = vadd.f32 %v1584, 1.0
        %v1586 = vrcp.pop %v1585
        %v1587 = vmul.f32 1.0, %v1586
        %v1588 = vmul.f32 %v1437, %v1587
        %v1589 = vpack.c.bf16 %v1588, %v1588
        %v1594 = vunpack.c.l.b16 %v1400
        %v1595 = vunpack.c.h.b16 %v1400
        %v1596 = vunpack.c.l.b16 %v1401
        %v1597 = vunpack.c.h.b16 %v1401
        %v1598 = vunpack.c.l.b16 %v1402
        %v1599 = vunpack.c.h.b16 %v1402
        %v1600 = vunpack.c.l.b16 %v1403
        %v1601 = vunpack.c.h.b16 %v1403
        %v1602 = vpack.c.b16 %v1596, %v1594
        %v1603 = vpack.c.b16 %v1597, %v1595
        %v1604 = vpack.c.b16 %v1600, %v1598
        %v1605 = vpack.c.b16 %v1601, %v1599
        %v1611 = vsel %vm1413, %v1589, 0
        %1613 = vmatprep.subr.bf16.mxu0 %v1603
        %1614 = vmatpush1.bf16.msra.mxu0 %v1602
        %1615 = vmatprep.subr.bf16.mxu0 %v1605
        %1616 = vmatpush1.bf16.msra.mxu0 %v1604
        %1617 = vmatprep.subr.bf16.mxu0 0
        %1618 = vmatpush1.bf16.msra.mxu0 0
        %1619 = vmatprep.subr.bf16.mxu0 0
        %1620 = vmatpush1.bf16.msra.mxu0 0
        %1621 = vmatprep.subr.bf16.mxu0 0
        %1622 = vmatpush1.bf16.msra.mxu0 0
        %1623 = vmatprep.subr.bf16.mxu0 0
        %1624 = vmatpush1.bf16.msra.mxu0 0
        %1625 = vmatprep.subr.bf16.mxu0 0
        %1626 = vmatpush1.bf16.msra.mxu0 0
        %1627 = vmatprep.subr.bf16.mxu0 0
        %1628 = vmatpush1.bf16.msra.mxu0 0
        %1629 = vmatprep.subr.bf16.mxu0 0
        %1630 = vmatpush1.bf16.msra.mxu0 0
        %1631 = vmatprep.subr.bf16.mxu0 0
        %1632 = vmatpush1.bf16.msra.mxu0 0
        %1633 = vmatprep.subr.bf16.mxu0 0
        %1634 = vmatpush1.bf16.msra.mxu0 0
        %1635 = vmatprep.subr.bf16.mxu0 0
        %1636 = vmatpush1.bf16.msra.mxu0 0
        %1637 = vmatprep.subr.bf16.mxu0 0
        %1638 = vmatpush1.bf16.msra.mxu0 0
        %1639 = vmatprep.subr.bf16.mxu0 0
        %1640 = vmatpush1.bf16.msra.mxu0 0
        %1641 = vmatprep.subr.bf16.mxu0 0
        %1642 = vmatpush1.bf16.msra.mxu0 0
        %1643 = vmatprep.subr.bf16.mxu0 0
        %1644 = vmatpush1.bf16.msra.mxu0 0
        %1645 = vmatprep.mubr.bf16.mxu0 0
        %1646 = vmatmul.mubr.bf16.gmra.mrb[0].mxu0 %v1611
        %v1647 = vpop.f32.mrb[0].mxu0
        %v1648 = vadd.f32 0.0, %v1647
        %v1649 = vpop.f32.mrb[0].mxu0
        %v1650 = vadd.f32 0.0, %v1649
        %v1651 = vpop.f32.mrb[0].mxu0
        %v1652 = vpop.f32.mrb[0].mxu0
        %1653 = vdwg.mxu0
        %v1654 = vpack.c.bf16 %v1648, %v1648
        %1656 = vrot.lane.b32.xlu0 %v1654, 64
        %v1657 = vpop.permute.xlu0 %1656
        %vm1658 = vcmask 130048
        %v1660 = vsel %vm1658, %v1654, 0
        %v1663 = vsel %vm1658, %v1657, 0
        %1665 = vmatprep.subr.bf16.mxu0 0
        %1666 = vmatpush1.bf16.xpose.msra.mxu0 %v1663
        %1667 = vmatprep.subr.bf16.mxu0 0
        %1668 = vmatpush1.bf16.xpose.msra.mxu0 0
        %1669 = vmatprep.subr.bf16.mxu0 0
        %1670 = vmatpush1.bf16.xpose.msra.mxu0 0
        %1671 = vmatprep.subr.bf16.mxu0 0
        %1672 = vmatpush1.bf16.xpose.msra.mxu0 0
        %1673 = vmatprep.subr.bf16.mxu0 0
        %1674 = vmatpush1.bf16.xpose.msra.mxu0 0
        %1675 = vmatprep.subr.bf16.mxu0 0
        %1676 = vmatpush1.bf16.xpose.msra.mxu0 0
        %1677 = vmatprep.subr.bf16.mxu0 0
        %1678 = vmatpush1.bf16.xpose.msra.mxu0 0
        %1679 = vmatprep.subr.bf16.mxu0 0
        %1680 = vmatpush1.bf16.xpose.msra.mxu0 0
        %1681 = vmatprep.subr.bf16.mxu0 0
        %1682 = vmatpush1.bf16.xpose.msra.mxu0 0
        %1683 = vmatprep.subr.bf16.mxu0 0
        %1684 = vmatpush1.bf16.xpose.msra.mxu0 0
        %1685 = vmatprep.subr.bf16.mxu0 0
        %1686 = vmatpush1.bf16.xpose.msra.mxu0 0
        %1687 = vmatprep.subr.bf16.mxu0 0
        %1688 = vmatpush1.bf16.xpose.msra.mxu0 0
        %1689 = vmatprep.subr.bf16.mxu0 0
        %1690 = vmatpush1.bf16.xpose.msra.mxu0 0
        %1691 = vmatprep.subr.bf16.mxu0 0
        %1692 = vmatpush1.bf16.xpose.msra.mxu0 0
        %1693 = vmatprep.subr.bf16.mxu0 0
        %1694 = vmatpush1.bf16.xpose.msra.mxu0 0
        %1695 = vmatprep.subr.bf16.mxu0 0
        %1696 = vmatpush1.bf16.xpose.msra.mxu0 0
        %1697 = vmatprep.mubr.bf16.mxu0 0
        %1698 = vmatmul.mubr.bf16.gmra.mrb[0].mxu0 %v1660
        %v1699 = vpop.f32.mrb[0].mxu0
        %v1700 = vadd.f32 0.0, %v1699
        %v1701 = vpop.f32.mrb[0].mxu0
        %v1702 = vpop.f32.mrb[0].mxu0
        %v1703 = vpop.f32.mrb[0].mxu0
        %1704 = vdwg.mxu0
        %vm1705 = vcmask 64512
        %v1706 = vsel %vm1705, %v1700, -inf
        %1707 = vmax.xlane.f32.xlu0 %v1706
        %v1708 = vpop.xlane.xlu0 %1707
        %v1709 = vsub.f32 %v1700, %v1708
        %v1710 = vmul.f32 %v1709, 1.442695
        %v1711 = vpow.pop %v1710
        %v1712 = vsel %vm1705, %v1711, 0.0
        %1713 = vadd.xlane.f32.xlu0 %v1712
        %v1714 = vpop.xlane.xlu0 %1713
        %v1715 = vrcp.pop %v1714
        %v1716 = vmul.f32 %v1711, %v1715
        %v1717 = vpack.c.bf16 %v1716, %v1716
        %v1718 = vpack.c.bf16 %v1650, %v1650
        %v1720 = vsel %vm1705, %v1717, 0
        %vm1722 = vcmask 1043456
        %v1724 = vsel %vm1722, %v1718, 0
        %1726 = vmatprep.subr.bf16.mxu0 0
        %1727 = vmatpush1.bf16.msra.mxu0 %v1724
        %1728 = vmatprep.subr.bf16.mxu0 0
        %1729 = vmatpush1.bf16.msra.mxu0 0
        %1730 = vmatprep.subr.bf16.mxu0 0
        %1731 = vmatpush1.bf16.msra.mxu0 0
        %1732 = vmatprep.subr.bf16.mxu0 0
        %1733 = vmatpush1.bf16.msra.mxu0 0
        %1734 = vmatprep.subr.bf16.mxu0 0
        %1735 = vmatpush1.bf16.msra.mxu0 0
        %1736 = vmatprep.subr.bf16.mxu0 0
        %1737 = vmatpush1.bf16.msra.mxu0 0
        %1738 = vmatprep.subr.bf16.mxu0 0
        %1739 = vmatpush1.bf16.msra.mxu0 0
        %1740 = vmatprep.subr.bf16.mxu0 0
        %1741 = vmatpush1.bf16.msra.mxu0 0
        %1742 = vmatprep.subr.bf16.mxu0 0
        %1743 = vmatpush1.bf16.msra.mxu0 0
        %1744 = vmatprep.subr.bf16.mxu0 0
        %1745 = vmatpush1.bf16.msra.mxu0 0
        %1746 = vmatprep.subr.bf16.mxu0 0
        %1747 = vmatpush1.bf16.msra.mxu0 0
        %1748 = vmatprep.subr.bf16.mxu0 0
        %1749 = vmatpush1.bf16.msra.mxu0 0
        %1750 = vmatprep.subr.bf16.mxu0 0
        %1751 = vmatpush1.bf16.msra.mxu0 0
        %1752 = vmatprep.subr.bf16.mxu0 0
        %1753 = vmatpush1.bf16.msra.mxu0 0
        %1754 = vmatprep.subr.bf16.mxu0 0
        %1755 = vmatpush1.bf16.msra.mxu0 0
        %1756 = vmatprep.subr.bf16.mxu0 0
        %1757 = vmatpush1.bf16.msra.mxu0 0
        %1758 = vmatprep.mubr.bf16.mxu0 0
        %1759 = vmatmul.mubr.bf16.gmra.mrb[0].mxu0 %v1720
        %v1760 = vpop.f32.mrb[0].mxu0
        %v1761 = vadd.f32 0.0, %v1760
        %v1762 = vpop.f32.mrb[0].mxu0
        %v1763 = vpop.f32.mrb[0].mxu0
        %v1764 = vpop.f32.mrb[0].mxu0
        %1765 = vdwg.mxu0
        %1766 = vst.msk [vmem:[#allocation3] sm:$0xff] %vm1658, %v1761
        %1767 = vrot.lane.b32.xlu0 %v1654, 112
        %v1768 = vpop.permute.xlu0 %1767
        %1769 = vrot.lane.b32.xlu0 %v1654, 48
        %v1770 = vpop.permute.xlu0 %1769
        %v1772 = vsel %vm1658, %v1768, 0
        %v1775 = vsel %vm1658, %v1770, 0
        %1777 = vmatprep.subr.bf16.mxu0 0
        %1778 = vmatpush1.bf16.xpose.msra.mxu0 %v1775
        %1779 = vmatprep.subr.bf16.mxu0 0
        %1780 = vmatpush1.bf16.xpose.msra.mxu0 0
        %1781 = vmatprep.subr.bf16.mxu0 0
        %1782 = vmatpush1.bf16.xpose.msra.mxu0 0
        %1783 = vmatprep.subr.bf16.mxu0 0
        %1784 = vmatpush1.bf16.xpose.msra.mxu0 0
        %1785 = vmatprep.subr.bf16.mxu0 0
        %1786 = vmatpush1.bf16.xpose.msra.mxu0 0
        %1787 = vmatprep.subr.bf16.mxu0 0
        %1788 = vmatpush1.bf16.xpose.msra.mxu0 0
        %1789 = vmatprep.subr.bf16.mxu0 0
        %1790 = vmatpush1.bf16.xpose.msra.mxu0 0
        %1791 = vmatprep.subr.bf16.mxu0 0
        %1792 = vmatpush1.bf16.xpose.msra.mxu0 0
        %1793 = vmatprep.subr.bf16.mxu0 0
        %1794 = vmatpush1.bf16.xpose.msra.mxu0 0
        %1795 = vmatprep.subr.bf16.mxu0 0
        %1796 = vmatpush1.bf16.xpose.msra.mxu0 0
        %1797 = vmatprep.subr.bf16.mxu0 0
        %1798 = vmatpush1.bf16.xpose.msra.mxu0 0
        %1799 = vmatprep.subr.bf16.mxu0 0
        %1800 = vmatpush1.bf16.xpose.msra.mxu0 0
        %1801 = vmatprep.subr.bf16.mxu0 0
        %1802 = vmatpush1.bf16.xpose.msra.mxu0 0
        %1803 = vmatprep.subr.bf16.mxu0 0
        %1804 = vmatpush1.bf16.xpose.msra.mxu0 0
        %1805 = vmatprep.subr.bf16.mxu0 0
        %1806 = vmatpush1.bf16.xpose.msra.mxu0 0
        %1807 = vmatprep.subr.bf16.mxu0 0
        %1808 = vmatpush1.bf16.xpose.msra.mxu0 0
        %1809 = vmatprep.mubr.bf16.mxu0 0
        %1810 = vmatmul.mubr.bf16.gmra.mrb[0].mxu0 %v1772
        %v1811 = vpop.f32.mrb[0].mxu0
        %v1812 = vadd.f32 0.0, %v1811
        %v1813 = vpop.f32.mrb[0].mxu0
        %v1814 = vpop.f32.mrb[0].mxu0
        %v1815 = vpop.f32.mrb[0].mxu0
        %1816 = vdwg.mxu0
        %v1817 = vsel %vm1705, %v1812, -inf
        %1818 = vmax.xlane.f32.xlu0 %v1817
        %v1819 = vpop.xlane.xlu0 %1818
        %v1820 = vsub.f32 %v1812, %v1819
        %v1821 = vmul.f32 %v1820, 1.442695
        %v1822 = vpow.pop %v1821
        %v1823 = vsel %vm1705, %v1822, 0.0
        %1824 = vadd.xlane.f32.xlu0 %v1823
        %v1825 = vpop.xlane.xlu0 %1824
        %v1826 = vrcp.pop %v1825
        %v1827 = vmul.f32 %v1822, %v1826
        %v1828 = vpack.c.bf16 %v1827, %v1827
        %1830 = vrot.lane.b32.xlu0 %v1718, 112
        %v1831 = vpop.permute.xlu0 %1830
        %v1833 = vsel %vm1705, %v1828, 0
        %v1836 = vsel %vm1722, %v1831, 0
        %1838 = vmatprep.subr.bf16.mxu0 0
        %1839 = vmatpush1.bf16.msra.mxu0 %v1836
        %1840 = vmatprep.subr.bf16.mxu0 0
        %1841 = vmatpush1.bf16.msra.mxu0 0
        %1842 = vmatprep.subr.bf16.mxu0 0
        %1843 = vmatpush1.bf16.msra.mxu0 0
        %1844 = vmatprep.subr.bf16.mxu0 0
        %1845 = vmatpush1.bf16.msra.mxu0 0
        %1846 = vmatprep.subr.bf16.mxu0 0
        %1847 = vmatpush1.bf16.msra.mxu0 0
        %1848 = vmatprep.subr.bf16.mxu0 0
        %1849 = vmatpush1.bf16.msra.mxu0 0
        %1850 = vmatprep.subr.bf16.mxu0 0
        %1851 = vmatpush1.bf16.msra.mxu0 0
        %1852 = vmatprep.subr.bf16.mxu0 0
        %1853 = vmatpush1.bf16.msra.mxu0 0
        %1854 = vmatprep.subr.bf16.mxu0 0
        %1855 = vmatpush1.bf16.msra.mxu0 0
        %1856 = vmatprep.subr.bf16.mxu0 0
        %1857 = vmatpush1.bf16.msra.mxu0 0
        %1858 = vmatprep.subr.bf16.mxu0 0
        %1859 = vmatpush1.bf16.msra.mxu0 0
        %1860 = vmatprep.subr.bf16.mxu0 0
        %1861 = vmatpush1.bf16.msra.mxu0 0
        %1862 = vmatprep.subr.bf16.mxu0 0
        %1863 = vmatpush1.bf16.msra.mxu0 0
        %1864 = vmatprep.subr.bf16.mxu0 0
        %1865 = vmatpush1.bf16.msra.mxu0 0
        %1866 = vmatprep.subr.bf16.mxu0 0
        %1867 = vmatpush1.bf16.msra.mxu0 0
        %1868 = vmatprep.subr.bf16.mxu0 0
        %1869 = vmatpush1.bf16.msra.mxu0 0
        %1870 = vmatprep.mubr.bf16.mxu0 0
        %1871 = vmatmul.mubr.bf16.gmra.mrb[0].mxu0 %v1833
        %v1872 = vpop.f32.mrb[0].mxu0
        %v1873 = vadd.f32 0.0, %v1872
        %v1874 = vpop.f32.mrb[0].mxu0
        %v1875 = vpop.f32.mrb[0].mxu0
        %v1876 = vpop.f32.mrb[0].mxu0
        %1877 = vdwg.mxu0
        %1879 = vrot.lane.b32.xlu0 %v1873, 16
        %v1880 = vpop.permute.xlu0 %1879
        %vm1882 = vcmask 261248
        %1883 = vst.msk [vmem:[#allocation3] sm:$0xff] %vm1882, %v1880
        %1884 = vrot.lane.b32.xlu0 %v1654, 96
        %v1885 = vpop.permute.xlu0 %1884
        %1886 = vrot.lane.b32.xlu0 %v1654, 32
        %v1887 = vpop.permute.xlu0 %1886
        %v1889 = vsel %vm1658, %v1885, 0
        %v1892 = vsel %vm1658, %v1887, 0
        %1894 = vmatprep.subr.bf16.mxu0 0
        %1895 = vmatpush1.bf16.xpose.msra.mxu0 %v1892
        %1896 = vmatprep.subr.bf16.mxu0 0
        %1897 = vmatpush1.bf16.xpose.msra.mxu0 0
        %1898 = vmatprep.subr.bf16.mxu0 0
        %1899 = vmatpush1.bf16.xpose.msra.mxu0 0
        %1900 = vmatprep.subr.bf16.mxu0 0
        %1901 = vmatpush1.bf16.xpose.msra.mxu0 0
        %1902 = vmatprep.subr.bf16.mxu0 0
        %1903 = vmatpush1.bf16.xpose.msra.mxu0 0
        %1904 = vmatprep.subr.bf16.mxu0 0
        %1905 = vmatpush1.bf16.xpose.msra.mxu0 0
        %1906 = vmatprep.subr.bf16.mxu0 0
        %1907 = vmatpush1.bf16.xpose.msra.mxu0 0
        %1908 = vmatprep.subr.bf16.mxu0 0
        %1909 = vmatpush1.bf16.xpose.msra.mxu0 0
        %1910 = vmatprep.subr.bf16.mxu0 0
        %1911 = vmatpush1.bf16.xpose.msra.mxu0 0
        %1912 = vmatprep.subr.bf16.mxu0 0
        %1913 = vmatpush1.bf16.xpose.msra.mxu0 0
        %1914 = vmatprep.subr.bf16.mxu0 0
        %1915 = vmatpush1.bf16.xpose.msra.mxu0 0
        %1916 = vmatprep.subr.bf16.mxu0 0
        %1917 = vmatpush1.bf16.xpose.msra.mxu0 0
        %1918 = vmatprep.subr.bf16.mxu0 0
        %1919 = vmatpush1.bf16.xpose.msra.mxu0 0
        %1920 = vmatprep.subr.bf16.mxu0 0
        %1921 = vmatpush1.bf16.xpose.msra.mxu0 0
        %1922 = vmatprep.subr.bf16.mxu0 0
        %1923 = vmatpush1.bf16.xpose.msra.mxu0 0
        %1924 = vmatprep.subr.bf16.mxu0 0
        %1925 = vmatpush1.bf16.xpose.msra.mxu0 0
        %1926 = vmatprep.mubr.bf16.mxu0 0
        %1927 = vmatmul.mubr.bf16.gmra.mrb[0].mxu0 %v1889
        %v1928 = vpop.f32.mrb[0].mxu0
        %v1929 = vadd.f32 0.0, %v1928
        %v1930 = vpop.f32.mrb[0].mxu0
        %v1931 = vpop.f32.mrb[0].mxu0
        %v1932 = vpop.f32.mrb[0].mxu0
        %1933 = vdwg.mxu0
        %v1934 = vsel %vm1705, %v1929, -inf
        %1935 = vmax.xlane.f32.xlu0 %v1934
        %v1936 = vpop.xlane.xlu0 %1935
        %v1937 = vsub.f32 %v1929, %v1936
        %v1938 = vmul.f32 %v1937, 1.442695
        %v1939 = vpow.pop %v1938
        %v1940 = vsel %vm1705, %v1939, 0.0
        %1941 = vadd.xlane.f32.xlu0 %v1940
        %v1942 = vpop.xlane.xlu0 %1941
        %v1943 = vrcp.pop %v1942
        %v1944 = vmul.f32 %v1939, %v1943
        %v1945 = vpack.c.bf16 %v1944, %v1944
        %1946 = vrot.lane.b32.xlu0 %v1718, 96
        %v1947 = vpop.permute.xlu0 %1946
        %v1949 = vsel %vm1705, %v1945, 0
        %v1952 = vsel %vm1722, %v1947, 0
        %1954 = vmatprep.subr.bf16.mxu0 0
        %1955 = vmatpush1.bf16.msra.mxu0 %v1952
        %1956 = vmatprep.subr.bf16.mxu0 0
        %1957 = vmatpush1.bf16.msra.mxu0 0
        %1958 = vmatprep.subr.bf16.mxu0 0
        %1959 = vmatpush1.bf16.msra.mxu0 0
        %1960 = vmatprep.subr.bf16.mxu0 0
        %1961 = vmatpush1.bf16.msra.mxu0 0
        %1962 = vmatprep.subr.bf16.mxu0 0
        %1963 = vmatpush1.bf16.msra.mxu0 0
        %1964 = vmatprep.subr.bf16.mxu0 0
        %1965 = vmatpush1.bf16.msra.mxu0 0
        %1966 = vmatprep.subr.bf16.mxu0 0
        %1967 = vmatpush1.bf16.msra.mxu0 0
        %1968 = vmatprep.subr.bf16.mxu0 0
        %1969 = vmatpush1.bf16.msra.mxu0 0
        %1970 = vmatprep.subr.bf16.mxu0 0
        %1971 = vmatpush1.bf16.msra.mxu0 0
        %1972 = vmatprep.subr.bf16.mxu0 0
        %1973 = vmatpush1.bf16.msra.mxu0 0
        %1974 = vmatprep.subr.bf16.mxu0 0
        %1975 = vmatpush1.bf16.msra.mxu0 0
        %1976 = vmatprep.subr.bf16.mxu0 0
        %1977 = vmatpush1.bf16.msra.mxu0 0
        %1978 = vmatprep.subr.bf16.mxu0 0
        %1979 = vmatpush1.bf16.msra.mxu0 0
        %1980 = vmatprep.subr.bf16.mxu0 0
        %1981 = vmatpush1.bf16.msra.mxu0 0
        %1982 = vmatprep.subr.bf16.mxu0 0
        %1983 = vmatpush1.bf16.msra.mxu0 0
        %1984 = vmatprep.subr.bf16.mxu0 0
        %1985 = vmatpush1.bf16.msra.mxu0 0
        %1986 = vmatprep.mubr.bf16.mxu0 0
        %1987 = vmatmul.mubr.bf16.gmra.mrb[0].mxu0 %v1949
        %v1988 = vpop.f32.mrb[0].mxu0
        %v1989 = vadd.f32 0.0, %v1988
        %v1990 = vpop.f32.mrb[0].mxu0
        %v1991 = vpop.f32.mrb[0].mxu0
        %v1992 = vpop.f32.mrb[0].mxu0
        %1993 = vdwg.mxu0
        %1995 = vrot.lane.b32.xlu0 %v1989, 32
        %v1996 = vpop.permute.xlu0 %1995
        %vm1998 = vcmask 392448
        %1999 = vst.msk [vmem:[#allocation3] sm:$0xff] %vm1998, %v1996
        %2000 = vrot.lane.b32.xlu0 %v1654, 80
        %v2001 = vpop.permute.xlu0 %2000
        %2002 = vrot.lane.b32.xlu0 %v1654, 16
        %v2003 = vpop.permute.xlu0 %2002
        %v2005 = vsel %vm1658, %v2001, 0
        %v2008 = vsel %vm1658, %v2003, 0
        %2010 = vmatprep.subr.bf16.mxu0 0
        %2011 = vmatpush1.bf16.xpose.msra.mxu0 %v2008
        %2012 = vmatprep.subr.bf16.mxu0 0
        %2013 = vmatpush1.bf16.xpose.msra.mxu0 0
        %2014 = vmatprep.subr.bf16.mxu0 0
        %2015 = vmatpush1.bf16.xpose.msra.mxu0 0
        %2016 = vmatprep.subr.bf16.mxu0 0
        %2017 = vmatpush1.bf16.xpose.msra.mxu0 0
        %2018 = vmatprep.subr.bf16.mxu0 0
        %2019 = vmatpush1.bf16.xpose.msra.mxu0 0
        %2020 = vmatprep.subr.bf16.mxu0 0
        %2021 = vmatpush1.bf16.xpose.msra.mxu0 0
        %2022 = vmatprep.subr.bf16.mxu0 0
        %2023 = vmatpush1.bf16.xpose.msra.mxu0 0
        %2024 = vmatprep.subr.bf16.mxu0 0
        %2025 = vmatpush1.bf16.xpose.msra.mxu0 0
        %2026 = vmatprep.subr.bf16.mxu0 0
        %2027 = vmatpush1.bf16.xpose.msra.mxu0 0
        %2028 = vmatprep.subr.bf16.mxu0 0
        %2029 = vmatpush1.bf16.xpose.msra.mxu0 0
        %2030 = vmatprep.subr.bf16.mxu0 0
        %2031 = vmatpush1.bf16.xpose.msra.mxu0 0
        %2032 = vmatprep.subr.bf16.mxu0 0
        %2033 = vmatpush1.bf16.xpose.msra.mxu0 0
        %2034 = vmatprep.subr.bf16.mxu0 0
        %2035 = vmatpush1.bf16.xpose.msra.mxu0 0
        %2036 = vmatprep.subr.bf16.mxu0 0
        %2037 = vmatpush1.bf16.xpose.msra.mxu0 0
        %2038 = vmatprep.subr.bf16.mxu0 0
        %2039 = vmatpush1.bf16.xpose.msra.mxu0 0
        %2040 = vmatprep.subr.bf16.mxu0 0
        %2041 = vmatpush1.bf16.xpose.msra.mxu0 0
        %2042 = vmatprep.mubr.bf16.mxu0 0
        %2043 = vmatmul.mubr.bf16.gmra.mrb[0].mxu0 %v2005
        %v2044 = vpop.f32.mrb[0].mxu0
        %v2045 = vadd.f32 0.0, %v2044
        %v2046 = vpop.f32.mrb[0].mxu0
        %v2047 = vpop.f32.mrb[0].mxu0
        %v2048 = vpop.f32.mrb[0].mxu0
        %2049 = vdwg.mxu0
        %v2050 = vsel %vm1705, %v2045, -inf
        %2051 = vmax.xlane.f32.xlu0 %v2050
        %v2052 = vpop.xlane.xlu0 %2051
        %v2053 = vsub.f32 %v2045, %v2052
        %v2054 = vmul.f32 %v2053, 1.442695
        %v2055 = vpow.pop %v2054
        %v2056 = vsel %vm1705, %v2055, 0.0
        %2057 = vadd.xlane.f32.xlu0 %v2056
        %v2058 = vpop.xlane.xlu0 %2057
        %v2059 = vrcp.pop %v2058
        %v2060 = vmul.f32 %v2055, %v2059
        %v2061 = vpack.c.bf16 %v2060, %v2060
        %2062 = vrot.lane.b32.xlu0 %v1718, 80
        %v2063 = vpop.permute.xlu0 %2062
        %v2065 = vsel %vm1705, %v2061, 0
        %v2068 = vsel %vm1722, %v2063, 0
        %2070 = vmatprep.subr.bf16.mxu0 0
        %2071 = vmatpush1.bf16.msra.mxu0 %v2068
        %2072 = vmatprep.subr.bf16.mxu0 0
        %2073 = vmatpush1.bf16.msra.mxu0 0
        %2074 = vmatprep.subr.bf16.mxu0 0
        %2075 = vmatpush1.bf16.msra.mxu0 0
        %2076 = vmatprep.subr.bf16.mxu0 0
        %2077 = vmatpush1.bf16.msra.mxu0 0
        %2078 = vmatprep.subr.bf16.mxu0 0
        %2079 = vmatpush1.bf16.msra.mxu0 0
        %2080 = vmatprep.subr.bf16.mxu0 0
        %2081 = vmatpush1.bf16.msra.mxu0 0
        %2082 = vmatprep.subr.bf16.mxu0 0
        %2083 = vmatpush1.bf16.msra.mxu0 0
        %2084 = vmatprep.subr.bf16.mxu0 0
        %2085 = vmatpush1.bf16.msra.mxu0 0
        %2086 = vmatprep.subr.bf16.mxu0 0
        %2087 = vmatpush1.bf16.msra.mxu0 0
        %2088 = vmatprep.subr.bf16.mxu0 0
        %2089 = vmatpush1.bf16.msra.mxu0 0
        %2090 = vmatprep.subr.bf16.mxu0 0
        %2091 = vmatpush1.bf16.msra.mxu0 0
        %2092 = vmatprep.subr.bf16.mxu0 0
        %2093 = vmatpush1.bf16.msra.mxu0 0
        %2094 = vmatprep.subr.bf16.mxu0 0
        %2095 = vmatpush1.bf16.msra.mxu0 0
        %2096 = vmatprep.subr.bf16.mxu0 0
        %2097 = vmatpush1.bf16.msra.mxu0 0
        %2098 = vmatprep.subr.bf16.mxu0 0
        %2099 = vmatpush1.bf16.msra.mxu0 0
        %2100 = vmatprep.subr.bf16.mxu0 0
        %2101 = vmatpush1.bf16.msra.mxu0 0
        %2102 = vmatprep.mubr.bf16.mxu0 0
        %2103 = vmatmul.mubr.bf16.gmra.mrb[0].mxu0 %v2065
        %v2104 = vpop.f32.mrb[0].mxu0
        %v2105 = vadd.f32 0.0, %v2104
        %v2106 = vpop.f32.mrb[0].mxu0
        %v2107 = vpop.f32.mrb[0].mxu0
        %v2108 = vpop.f32.mrb[0].mxu0
        %2109 = vdwg.mxu0
        %2111 = vrot.lane.b32.xlu0 %v2105, 48
        %v2112 = vpop.permute.xlu0 %2111
        %vm2114 = vcmask 523648
        %2115 = vst.msk [vmem:[#allocation3] sm:$0xff] %vm2114, %v2112
        %v2116 = vld [vmem:[#allocation3] sm:$0xff]
        %v2117 = vpack.c.bf16 %v2116, %v2116
        %v2119 = vlaneseq
        %v2120 = vshrl.u32 %v2119, 7
        %v2121 = vsub.s32 0, %v2120
        %v2122 = vrot.slane %v1412, %v2121
        %v2132 = vunpack.c.l.b16 %v1404
        %v2133 = vunpack.c.l.b16 %v1405
        %v2134 = vunpack.c.l.b16 %v1406
        %v2135 = vunpack.c.l.b16 %v1407
        %v2136 = vunpack.c.l.b16 %v1408
        %v2137 = vunpack.c.l.b16 %v1409
        %v2138 = vunpack.c.l.b16 %v1410
        %v2139 = vunpack.c.l.b16 %v1411
        %v2140 = vpack.c.b16 %v2133, %v2132
        %v2141 = vpack.c.b16 %v2135, %v2134
        %v2142 = vpack.c.b16 %v2137, %v2136
        %v2143 = vpack.c.b16 %v2139, %v2138
        %vm2148 = vcmask 523264
        %v2150 = vsel %vm2148, %v2117, 0
        %2152 = vmatprep.subr.bf16.mxu0 0
        %2153 = vmatpush1.bf16.msra.mxu0 %v2140
        %2154 = vmatprep.subr.bf16.mxu0 0
        %2155 = vmatpush1.bf16.msra.mxu0 %v2141
        %2156 = vmatprep.subr.bf16.mxu0 0
        %2157 = vmatpush1.bf16.msra.mxu0 %v2142
        %2158 = vmatprep.subr.bf16.mxu0 0
        %2159 = vmatpush1.bf16.msra.mxu0 %v2143
        %2160 = vmatprep.subr.bf16.mxu0 0
        %2161 = vmatpush1.bf16.msra.mxu0 0
        %2162 = vmatprep.subr.bf16.mxu0 0
        %2163 = vmatpush1.bf16.msra.mxu0 0
        %2164 = vmatprep.subr.bf16.mxu0 0
        %2165 = vmatpush1.bf16.msra.mxu0 0
        %2166 = vmatprep.subr.bf16.mxu0 0
        %2167 = vmatpush1.bf16.msra.mxu0 0
        %2168 = vmatprep.subr.bf16.mxu0 0
        %2169 = vmatpush1.bf16.msra.mxu0 0
        %2170 = vmatprep.subr.bf16.mxu0 0
        %2171 = vmatpush1.bf16.msra.mxu0 0
        %2172 = vmatprep.subr.bf16.mxu0 0
        %2173 = vmatpush1.bf16.msra.mxu0 0
        %2174 = vmatprep.subr.bf16.mxu0 0
        %2175 = vmatpush1.bf16.msra.mxu0 0
        %2176 = vmatprep.subr.bf16.mxu0 0
        %2177 = vmatpush1.bf16.msra.mxu0 0
        %2178 = vmatprep.subr.bf16.mxu0 0
        %2179 = vmatpush1.bf16.msra.mxu0 0
        %2180 = vmatprep.subr.bf16.mxu0 0
        %2181 = vmatpush1.bf16.msra.mxu0 0
        %2182 = vmatprep.subr.bf16.mxu0 0
        %2183 = vmatpush1.bf16.msra.mxu0 0
        %2184 = vmatprep.mubr.bf16.mxu0 0
        %2185 = vmatmul.mubr.bf16.gmra.mrb[0].mxu0 %v2150
        %v2186 = vpop.f32.mrb[0].mxu0
        %v2187 = vadd.f32 %v2122, %v2186
        %v2188 = vpop.f32.mrb[0].mxu0
        %v2189 = vpop.f32.mrb[0].mxu0
        %v2190 = vpop.f32.mrb[0].mxu0
        %2191 = vdwg.mxu0
        %v2192 = vadd.f32 %v2187, %v1391
        %v2193 = vld [vmem:[%s1320] sm:$0x3]
        %v2194 = vld [vmem:[%s1325] sm:$0xf]
        %v2195 = vld [vmem:[%s1325 + $0x4] sm:$0xf]
        %v2196 = vld [vmem:[%s1325 + $0x8] sm:$0xf]
        %v2197 = vld [vmem:[%s1325 + $0xc] sm:$0xf]
        %v2198 = vld [vmem:[%s1328] sm:$0x1]
        %v2199 = vld [vmem:[%s1332] sm:$0x7]
        %v2200 = vld [vmem:[%s1335] sm:$0x1]
        %v2201 = vld [vmem:[%s1340] sm:$0xf]
        %v2202 = vld [vmem:[%s1340 + $0x4] sm:$0xf]
        %v2203 = vld [vmem:[%s1340 + $0x8] sm:$0xf]
        %v2204 = vld [vmem:[%s1340 + $0xc] sm:$0xf]
        %v2205 = vld [vmem:[%s1343] sm:$0x1]
        %v2206 = vsel %vm1413, %v2192, 0.0
        %2207 = vadd.xlane.f32.xlu0 %v2206
        %v2208 = vpop.xlane.xlu0 %2207
        %v2209 = vmul.f32 %v2208, %v1417
        %v2210 = vsub.f32 %v2192, %v2209
        %v2211 = vmul.f32 %v2210, %v2210
        %v2212 = vsel %vm1413, %v2211, 0.0
        %2213 = vadd.xlane.f32.xlu0 %v2212
        %v2214 = vpop.xlane.xlu0 %2213
        %v2215 = vmul.f32 %v2214, %v1417
        %v2216 = vadd.f32 %v2215, 1e-05
        %v2217 = vrsqrt.pop %v2216
        %v2218 = vmul.f32 %v2210, %v2217
        %v2219 = vlaneseq
        %v2220 = vshrl.u32 %v2219, 7
        %v2221 = vsub.s32 0, %v2220
        %v2222 = vrot.slane %v2193, %v2221
        %v2223 = vmul.f32 %v2218, %v2222
        %v2224 = vlaneseq
        %v2225 = vshrl.u32 %v2224, 7
        %v2226 = vsub.s32 1, %v2225
        %v2227 = vrot.slane %v2193, %v2226
        %v2228 = vadd.f32 %v2223, %v2227
        %v2229 = vpack.c.bf16 %v2228, %v2228
        %v2231 = vlaneseq
        %v2232 = vshrl.u32 %v2231, 7
        %v2233 = vsub.s32 0, %v2232
        %v2234 = vrot.slane %v2198, %v2233
        %v2240 = vunpack.c.l.b16 %v2194
        %v2241 = vunpack.c.l.b16 %v2195
        %v2242 = vunpack.c.l.b16 %v2196
        %v2243 = vunpack.c.l.b16 %v2197
        %v2244 = vpack.c.b16 %v2241, %v2240
        %v2245 = vpack.c.b16 %v2243, %v2242
        %v2249 = vsel %vm1413, %v2229, 0
        %2251 = vmatprep.subr.bf16.mxu0 0
        %2252 = vmatpush1.bf16.msra.mxu0 %v2244
        %2253 = vmatprep.subr.bf16.mxu0 0
        %2254 = vmatpush1.bf16.msra.mxu0 %v2245
        %2255 = vmatprep.subr.bf16.mxu0 0
        %2256 = vmatpush1.bf16.msra.mxu0 0
        %2257 = vmatprep.subr.bf16.mxu0 0
        %2258 = vmatpush1.bf16.msra.mxu0 0
        %2259 = vmatprep.subr.bf16.mxu0 0
        %2260 = vmatpush1.bf16.msra.mxu0 0
        %2261 = vmatprep.subr.bf16.mxu0 0
        %2262 = vmatpush1.bf16.msra.mxu0 0
        %2263 = vmatprep.subr.bf16.mxu0 0
        %2264 = vmatpush1.bf16.msra.mxu0 0
        %2265 = vmatprep.subr.bf16.mxu0 0
        %2266 = vmatpush1.bf16.msra.mxu0 0
        %2267 = vmatprep.subr.bf16.mxu0 0
        %2268 = vmatpush1.bf16.msra.mxu0 0
        %2269 = vmatprep.subr.bf16.mxu0 0
        %2270 = vmatpush1.bf16.msra.mxu0 0
        %2271 = vmatprep.subr.bf16.mxu0 0
        %2272 = vmatpush1.bf16.msra.mxu0 0
        %2273 = vmatprep.subr.bf16.mxu0 0
        %2274 = vmatpush1.bf16.msra.mxu0 0
        %2275 = vmatprep.subr.bf16.mxu0 0
        %2276 = vmatpush1.bf16.msra.mxu0 0
        %2277 = vmatprep.subr.bf16.mxu0 0
        %2278 = vmatpush1.bf16.msra.mxu0 0
        %2279 = vmatprep.subr.bf16.mxu0 0
        %2280 = vmatpush1.bf16.msra.mxu0 0
        %2281 = vmatprep.subr.bf16.mxu0 0
        %2282 = vmatpush1.bf16.msra.mxu0 0
        %2283 = vmatprep.mubr.bf16.mxu0 0
        %2284 = vmatmul.mubr.bf16.gmra.mrb[0].mxu0 %v2249
        %v2285 = vpop.f32.mrb[0].mxu0
        %v2286 = vadd.f32 %v2234, %v2285
        %v2287 = vpop.f32.mrb[0].mxu0
        %v2288 = vpop.f32.mrb[0].mxu0
        %v2289 = vpop.f32.mrb[0].mxu0
        %2290 = vdwg.mxu0
        %v2291 = vsub.f32 0.0, %v2286
        %v2292 = vmul.f32 %v2291, 1.442695
        %v2293 = vpow.pop %v2292
        %v2294 = vadd.f32 %v2293, 1.0
        %v2295 = vrcp.pop %v2294
        %v2296 = vmul.f32 1.0, %v2295
        %2298 = vrot.lane.b32.xlu0 %v2296, 96
        %v2299 = vpop.permute.xlu0 %2298
        %v2301 = vmul.f32 %v2286, %v2299
        %v2303 = vrot.slane %v2301, 7
        %v2305 = vsel %vm1538, 0.0, %v2303
        %v2306 = vrot.slane %v2301, 1
        %vm2308 = vcmask 1046528
        %v2309 = vsel %vm2308, %v2306, 0.0
        %v2310 = vlaneseq
        %v2311 = vshrl.u32 %v2310, 7
        %v2312 = vsub.s32 0, %v2311
        %v2313 = vrot.slane %v2199, %v2312
        %v2314 = vmul.f32 %v2305, %v2313
        %v2315 = vlaneseq
        %v2316 = vshrl.u32 %v2315, 7
        %v2317 = vsub.s32 1, %v2316
        %v2318 = vrot.slane %v2199, %v2317
        %v2319 = vmul.f32 %v2301, %v2318
        %v2320 = vadd.f32 %v2314, %v2319
        %v2321 = vlaneseq
        %v2322 = vshrl.u32 %v2321, 7
        %v2323 = vsub.s32 2, %v2322
        %v2324 = vrot.slane %v2199, %v2323
        %v2325 = vmul.f32 %v2309, %v2324
        %v2326 = vadd.f32 %v2320, %v2325
        %v2328 = vlaneseq
        %v2329 = vshrl.u32 %v2328, 7
        %v2330 = vsub.s32 0, %v2329
        %v2331 = vrot.slane %v2200, %v2330
        %v2333 = vadd.f32 %v2326, %v2331
        %v2334 = vsub.f32 0.0, %v2333
        %v2335 = vmul.f32 %v2334, 1.442695
        %v2336 = vpow.pop %v2335
        %v2337 = vadd.f32 %v2336, 1.0
        %v2338 = vrcp.pop %v2337
        %v2339 = vmul.f32 1.0, %v2338
        %v2340 = vmul.f32 %v2333, %v2339
        %v2341 = vpack.c.bf16 %v2340, %v2340
        %v2343 = vlaneseq
        %v2344 = vshrl.u32 %v2343, 7
        %v2345 = vsub.s32 0, %v2344
        %v2346 = vrot.slane %v2205, %v2345
        %v2352 = vunpack.c.l.b16 %v2201
        %v2353 = vunpack.c.l.b16 %v2202
        %v2354 = vunpack.c.l.b16 %v2203
        %v2355 = vunpack.c.l.b16 %v2204
        %v2356 = vpack.c.b16 %v2353, %v2352
        %v2357 = vpack.c.b16 %v2355, %v2354
        %v2361 = vsel %vm1413, %v2341, 0
        %2363 = vmatprep.subr.bf16.mxu0 0
        %2364 = vmatpush1.bf16.msra.mxu0 %v2356
        %2365 = vmatprep.subr.bf16.mxu0 0
        %2366 = vmatpush1.bf16.msra.mxu0 %v2357
        %2367 = vmatprep.subr.bf16.mxu0 0
        %2368 = vmatpush1.bf16.msra.mxu0 0
        %2369 = vmatprep.subr.bf16.mxu0 0
        %2370 = vmatpush1.bf16.msra.mxu0 0
        %2371 = vmatprep.subr.bf16.mxu0 0
        %2372 = vmatpush1.bf16.msra.mxu0 0
        %2373 = vmatprep.subr.bf16.mxu0 0
        %2374 = vmatpush1.bf16.msra.mxu0 0
        %2375 = vmatprep.subr.bf16.mxu0 0
        %2376 = vmatpush1.bf16.msra.mxu0 0
        %2377 = vmatprep.subr.bf16.mxu0 0
        %2378 = vmatpush1.bf16.msra.mxu0 0
        %2379 = vmatprep.subr.bf16.mxu0 0
        %2380 = vmatpush1.bf16.msra.mxu0 0
        %2381 = vmatprep.subr.bf16.mxu0 0
        %2382 = vmatpush1.bf16.msra.mxu0 0
        %2383 = vmatprep.subr.bf16.mxu0 0
        %2384 = vmatpush1.bf16.msra.mxu0 0
        %2385 = vmatprep.subr.bf16.mxu0 0
        %2386 = vmatpush1.bf16.msra.mxu0 0
        %2387 = vmatprep.subr.bf16.mxu0 0
        %2388 = vmatpush1.bf16.msra.mxu0 0
        %2389 = vmatprep.subr.bf16.mxu0 0
        %2390 = vmatpush1.bf16.msra.mxu0 0
        %2391 = vmatprep.subr.bf16.mxu0 0
        %2392 = vmatpush1.bf16.msra.mxu0 0
        %2393 = vmatprep.subr.bf16.mxu0 0
        %2394 = vmatpush1.bf16.msra.mxu0 0
        %2395 = vmatprep.mubr.bf16.mxu0 0
        %2396 = vmatmul.mubr.bf16.gmra.mrb[0].mxu0 %v2361
        %v2397 = vpop.f32.mrb[0].mxu0
        %v2398 = vadd.f32 %v2346, %v2397
        %v2399 = vpop.f32.mrb[0].mxu0
        %v2400 = vpop.f32.mrb[0].mxu0
        %v2401 = vpop.f32.mrb[0].mxu0
        %2402 = vdwg.mxu0
        %v2403 = vadd.f32 %v2398, %v2192
        %v2404 = vld [vmem:[%s1347] sm:$0x3]
        %v2405 = vld [vmem:[%s1352] sm:$0xf]
        %v2406 = vld [vmem:[%s1352 + $0x4] sm:$0xf]
        %v2407 = vld [vmem:[%s1352 + $0x8] sm:$0xf]
        %v2408 = vld [vmem:[%s1352 + $0xc] sm:$0xf]
        %v2409 = vld [vmem:[%s1355] sm:$0x1]
        %v2410 = vld [vmem:[%s1359] sm:$0x3]
        %v2411 = vld [vmem:[%s1363] sm:$0x7]
        %v2412 = vld [vmem:[%s1366] sm:$0x1]
        %v2413 = vld [vmem:[%s1370] sm:$0x3]
        %v2414 = vld [vmem:[%s1375] sm:$0xf]
        %v2415 = vld [vmem:[%s1375 + $0x4] sm:$0xf]
        %v2416 = vld [vmem:[%s1375 + $0x8] sm:$0xf]
        %v2417 = vld [vmem:[%s1375 + $0xc] sm:$0xf]
        %v2418 = vld [vmem:[%s1375 + $0x10] sm:$0xf]
        %v2419 = vld [vmem:[%s1375 + $0x14] sm:$0xf]
        %v2420 = vld [vmem:[%s1375 + $0x18] sm:$0xf]
        %v2421 = vld [vmem:[%s1375 + $0x1c] sm:$0xf]
        %v2422 = vld [vmem:[%s1378] sm:$0x1]
        %v2423 = vld [vmem:[%s1382] sm:$0x3]
        %v2424 = vsel %vm1413, %v2403, 0.0
        %2425 = vadd.xlane.f32.xlu0 %v2424
        %v2426 = vpop.xlane.xlu0 %2425
        %v2427 = vmul.f32 %v2426, %v1417
        %v2428 = vsub.f32 %v2403, %v2427
        %v2429 = vmul.f32 %v2428, %v2428
        %v2430 = vsel %vm1413, %v2429, 0.0
        %2431 = vadd.xlane.f32.xlu0 %v2430
        %v2432 = vpop.xlane.xlu0 %2431
        %v2433 = vmul.f32 %v2432, %v1417
        %v2434 = vadd.f32 %v2433, 1e-05
        %v2435 = vrsqrt.pop %v2434
        %v2436 = vmul.f32 %v2428, %v2435
        %v2437 = vlaneseq
        %v2438 = vshrl.u32 %v2437, 7
        %v2439 = vsub.s32 0, %v2438
        %v2440 = vrot.slane %v2404, %v2439
        %v2441 = vmul.f32 %v2436, %v2440
        %v2442 = vlaneseq
        %v2443 = vshrl.u32 %v2442, 7
        %v2444 = vsub.s32 1, %v2443
        %v2445 = vrot.slane %v2404, %v2444
        %v2446 = vadd.f32 %v2441, %v2445
        %v2447 = vpack.c.bf16 %v2446, %v2446
        %v2449 = vlaneseq
        %v2450 = vshrl.u32 %v2449, 7
        %v2451 = vsub.s32 0, %v2450
        %v2452 = vrot.slane %v2409, %v2451
        %v2458 = vunpack.c.l.b16 %v2405
        %v2459 = vunpack.c.l.b16 %v2406
        %v2460 = vunpack.c.l.b16 %v2407
        %v2461 = vunpack.c.l.b16 %v2408
        %v2462 = vpack.c.b16 %v2459, %v2458
        %v2463 = vpack.c.b16 %v2461, %v2460
        %v2467 = vsel %vm1413, %v2447, 0
        %2469 = vmatprep.subr.bf16.mxu0 0
        %2470 = vmatpush1.bf16.msra.mxu0 %v2462
        %2471 = vmatprep.subr.bf16.mxu0 0
        %2472 = vmatpush1.bf16.msra.mxu0 %v2463
        %2473 = vmatprep.subr.bf16.mxu0 0
        %2474 = vmatpush1.bf16.msra.mxu0 0
        %2475 = vmatprep.subr.bf16.mxu0 0
        %2476 = vmatpush1.bf16.msra.mxu0 0
        %2477 = vmatprep.subr.bf16.mxu0 0
        %2478 = vmatpush1.bf16.msra.mxu0 0
        %2479 = vmatprep.subr.bf16.mxu0 0
        %2480 = vmatpush1.bf16.msra.mxu0 0
        %2481 = vmatprep.subr.bf16.mxu0 0
        %2482 = vmatpush1.bf16.msra.mxu0 0
        %2483 = vmatprep.subr.bf16.mxu0 0
        %2484 = vmatpush1.bf16.msra.mxu0 0
        %2485 = vmatprep.subr.bf16.mxu0 0
        %2486 = vmatpush1.bf16.msra.mxu0 0
        %2487 = vmatprep.subr.bf16.mxu0 0
        %2488 = vmatpush1.bf16.msra.mxu0 0
        %2489 = vmatprep.subr.bf16.mxu0 0
        %2490 = vmatpush1.bf16.msra.mxu0 0
        %2491 = vmatprep.subr.bf16.mxu0 0
        %2492 = vmatpush1.bf16.msra.mxu0 0
        %2493 = vmatprep.subr.bf16.mxu0 0
        %2494 = vmatpush1.bf16.msra.mxu0 0
        %2495 = vmatprep.subr.bf16.mxu0 0
        %2496 = vmatpush1.bf16.msra.mxu0 0
        %2497 = vmatprep.subr.bf16.mxu0 0
        %2498 = vmatpush1.bf16.msra.mxu0 0
        %2499 = vmatprep.subr.bf16.mxu0 0
        %2500 = vmatpush1.bf16.msra.mxu0 0
        %2501 = vmatprep.mubr.bf16.mxu0 0
        %2502 = vmatmul.mubr.bf16.gmra.mrb[0].mxu0 %v2467
        %v2503 = vpop.f32.mrb[0].mxu0
        %v2504 = vadd.f32 %v2452, %v2503
        %v2505 = vpop.f32.mrb[0].mxu0
        %v2506 = vpop.f32.mrb[0].mxu0
        %v2507 = vpop.f32.mrb[0].mxu0
        %2508 = vdwg.mxu0
        %v2509 = vmul.f32 %v2504, 0.5
        %v2510 = vmul.f32 %v2504, 0.70710677
        %vm2511 = vcmp.ge.f32.partialorder %v2510, 0.0
        %v2512 = vsel %vm2511, 1.0, -1.0
        %v2513 = vand.u32 2147483647, %v2510
        %v2514 = vmul.f32 %v2513, 0.3275911
        %v2515 = vadd.f32 %v2514, 1.0
        %v2516 = vrcp.pop %v2515
        %v2517 = vmul.f32 1.0, %v2516
        %v2518 = vmul.f32 %v2517, 1.0614054
        %v2519 = vadd.f32 %v2518, -1.4531521
        %v2520 = vmul.f32 %v2519, %v2517
        %v2521 = vadd.f32 %v2520, 1.4214138
        %v2522 = vmul.f32 %v2521, %v2517
        %v2523 = vadd.f32 %v2522, -0.28449672
        %v2524 = vmul.f32 %v2523, %v2517
        %v2525 = vadd.f32 %v2524, 0.2548296
        %v2526 = vmul.f32 %v2525, %v2517
        %v2527 = vsub.f32 0.0, %v2513
        %v2528 = vmul.f32 %v2527, %v2513
        %v2529 = vmul.f32 %v2528, 1.442695
        %v2530 = vpow.pop %v2529
        %v2531 = vmul.f32 %v2526, %v2530
        %v2532 = vsub.f32 1.0, %v2531
        %v2533 = vmul.f32 %v2512, %v2532
        %v2534 = vadd.f32 %v2533, 1.0
        %v2535 = vmul.f32 %v2509, %v2534
        %v2536 = vlaneseq
        %v2537 = vshrl.u32 %v2536, 7
        %v2538 = vsub.s32 0, %v2537
        %v2539 = vrot.slane %v2410, %v2538
        %v2540 = vmul.f32 %v2535, %v2539
        %v2541 = vlaneseq
        %v2542 = vshrl.u32 %v2541, 7
        %v2543 = vsub.s32 1, %v2542
        %v2544 = vrot.slane %v2410, %v2543
        %v2545 = vadd.f32 %v2540, %v2544
        %v2547 = vrot.slane %v2545, 7
        %v2549 = vsel %vm1538, 0.0, %v2547
        %v2550 = vrot.slane %v2545, 1
        %v2552 = vsel %vm2308, %v2550, 0.0
        %v2553 = vlaneseq
        %v2554 = vshrl.u32 %v2553, 7
        %v2555 = vsub.s32 0, %v2554
        %v2556 = vrot.slane %v2411, %v2555
        %v2557 = vmul.f32 %v2549, %v2556
        %v2558 = vlaneseq
        %v2559 = vshrl.u32 %v2558, 7
        %v2560 = vsub.s32 1, %v2559
        %v2561 = vrot.slane %v2411, %v2560
        %v2562 = vmul.f32 %v2545, %v2561
        %v2563 = vadd.f32 %v2557, %v2562
        %v2564 = vlaneseq
        %v2565 = vshrl.u32 %v2564, 7
        %v2566 = vsub.s32 2, %v2565
        %v2567 = vrot.slane %v2411, %v2566
        %v2568 = vmul.f32 %v2552, %v2567
        %v2569 = vadd.f32 %v2563, %v2568
        %v2571 = vlaneseq
        %v2572 = vshrl.u32 %v2571, 7
        %v2573 = vsub.s32 0, %v2572
        %v2574 = vrot.slane %v2412, %v2573
        %v2576 = vadd.f32 %v2569, %v2574
        %v2577 = vmul.f32 %v2576, 0.5
        %v2578 = vmul.f32 %v2576, 0.70710677
        %vm2579 = vcmp.ge.f32.partialorder %v2578, 0.0
        %v2580 = vsel %vm2579, 1.0, -1.0
        %v2581 = vand.u32 2147483647, %v2578
        %v2582 = vmul.f32 %v2581, 0.3275911
        %v2583 = vadd.f32 %v2582, 1.0
        %v2584 = vrcp.pop %v2583
        %v2585 = vmul.f32 1.0, %v2584
        %v2586 = vmul.f32 %v2585, 1.0614054
        %v2587 = vadd.f32 %v2586, -1.4531521
        %v2588 = vmul.f32 %v2587, %v2585
        %v2589 = vadd.f32 %v2588, 1.4214138
        %v2590 = vmul.f32 %v2589, %v2585
        %v2591 = vadd.f32 %v2590, -0.28449672
        %v2592 = vmul.f32 %v2591, %v2585
        %v2593 = vadd.f32 %v2592, 0.2548296
        %v2594 = vmul.f32 %v2593, %v2585
        %v2595 = vsub.f32 0.0, %v2581
        %v2596 = vmul.f32 %v2595, %v2581
        %v2597 = vmul.f32 %v2596, 1.442695
        %v2598 = vpow.pop %v2597
        %v2599 = vmul.f32 %v2594, %v2598
        %v2600 = vsub.f32 1.0, %v2599
        %v2601 = vmul.f32 %v2580, %v2600
        %v2602 = vadd.f32 %v2601, 1.0
        %v2603 = vmul.f32 %v2577, %v2602
        %v2604 = vlaneseq
        %v2605 = vshrl.u32 %v2604, 7
        %v2606 = vsub.s32 0, %v2605
        %v2607 = vrot.slane %v2413, %v2606
        %v2608 = vmul.f32 %v2603, %v2607
        %v2609 = vlaneseq
        %v2610 = vshrl.u32 %v2609, 7
        %v2611 = vsub.s32 1, %v2610
        %v2612 = vrot.slane %v2413, %v2611
        %v2613 = vadd.f32 %v2608, %v2612
        %v2614 = vadd.f32 %v2545, %v2613
        %v2615 = vpack.c.bf16 %v2614, %v2614
        %v2617 = vlaneseq
        %v2618 = vshrl.u32 %v2617, 7
        %v2619 = vsub.s32 0, %v2618
        %v2620 = vrot.slane %v2422, %v2619
        %v2630 = vunpack.c.l.b16 %v2414
        %v2631 = vunpack.c.l.b16 %v2415
        %v2632 = vunpack.c.l.b16 %v2416
        %v2633 = vunpack.c.l.b16 %v2417
        %v2634 = vunpack.c.l.b16 %v2418
        %v2635 = vunpack.c.l.b16 %v2419
        %v2636 = vunpack.c.l.b16 %v2420
        %v2637 = vunpack.c.l.b16 %v2421
        %v2638 = vpack.c.b16 %v2631, %v2630
        %v2639 = vpack.c.b16 %v2633, %v2632
        %v2640 = vpack.c.b16 %v2635, %v2634
        %v2641 = vpack.c.b16 %v2637, %v2636
        %v2647 = vsel %vm2148, %v2615, 0
        %2649 = vmatprep.subr.bf16.mxu0 0
        %2650 = vmatpush1.bf16.msra.mxu0 %v2638
        %2651 = vmatprep.subr.bf16.mxu0 0
        %2652 = vmatpush1.bf16.msra.mxu0 %v2639
        %2653 = vmatprep.subr.bf16.mxu0 0
        %2654 = vmatpush1.bf16.msra.mxu0 %v2640
        %2655 = vmatprep.subr.bf16.mxu0 0
        %2656 = vmatpush1.bf16.msra.mxu0 %v2641
        %2657 = vmatprep.subr.bf16.mxu0 0
        %2658 = vmatpush1.bf16.msra.mxu0 0
        %2659 = vmatprep.subr.bf16.mxu0 0
        %2660 = vmatpush1.bf16.msra.mxu0 0
        %2661 = vmatprep.subr.bf16.mxu0 0
        %2662 = vmatpush1.bf16.msra.mxu0 0
        %2663 = vmatprep.subr.bf16.mxu0 0
        %2664 = vmatpush1.bf16.msra.mxu0 0
        %2665 = vmatprep.subr.bf16.mxu0 0
        %2666 = vmatpush1.bf16.msra.mxu0 0
        %2667 = vmatprep.subr.bf16.mxu0 0
        %2668 = vmatpush1.bf16.msra.mxu0 0
        %2669 = vmatprep.subr.bf16.mxu0 0
        %2670 = vmatpush1.bf16.msra.mxu0 0
        %2671 = vmatprep.subr.bf16.mxu0 0
        %2672 = vmatpush1.bf16.msra.mxu0 0
        %2673 = vmatprep.subr.bf16.mxu0 0
        %2674 = vmatpush1.bf16.msra.mxu0 0
        %2675 = vmatprep.subr.bf16.mxu0 0
        %2676 = vmatpush1.bf16.msra.mxu0 0
        %2677 = vmatprep.subr.bf16.mxu0 0
        %2678 = vmatpush1.bf16.msra.mxu0 0
        %2679 = vmatprep.subr.bf16.mxu0 0
        %2680 = vmatpush1.bf16.msra.mxu0 0
        %2681 = vmatprep.mubr.bf16.mxu0 0
        %2682 = vmatmul.mubr.bf16.gmra.mrb[0].mxu0 %v2647
        %v2683 = vpop.f32.mrb[0].mxu0
        %v2684 = vadd.f32 %v2620, %v2683
        %v2685 = vpop.f32.mrb[0].mxu0
        %v2686 = vpop.f32.mrb[0].mxu0
        %v2687 = vpop.f32.mrb[0].mxu0
        %2688 = vdwg.mxu0
        %v2689 = vlaneseq
        %v2690 = vshrl.u32 %v2689, 7
        %v2691 = vsub.s32 0, %v2690
        %v2692 = vrot.slane %v2423, %v2691
        %v2693 = vmul.f32 %v2684, %v2692
        %v2694 = vlaneseq
        %v2695 = vshrl.u32 %v2694, 7
        %v2696 = vsub.s32 1, %v2695
        %v2697 = vrot.slane %v2423, %v2696
        %v2698 = vadd.f32 %v2693, %v2697
        %v2699 = vadd.f32 %v2698, %v2403
        %2700 = vst.msk [vmem:[#allocation2] sm:$0xff] %vm1413, %v2699
        %p2701 = scmp.lt.s32.totalorder %s84, 2
        %p2702 = scmp.ge.s32.totalorder %s84, 2
        %p2703 = por %p2701, %p2702
        // Predicated region
        $region153: #{tpu_custom_call.1} parent=135 // pred_check
          %p2704 = pneg %p2703
        $region154: #{tpu_custom_call.1} parent=135 // pred_check_branch
          %2706 = sbr.rel (%p2704) target = $region156
        $region155: #{tpu_custom_call.1} parent=135 // pred_region
          %v2707 = vld [vmem:[%s57] sm:$0xf]
          %v2708 = vld [vmem:[%s57 + $0x4] sm:$0xf]
          %v2709 = vld [vmem:[%s57 + $0x8] sm:$0xf]
          %v2710 = vld [vmem:[%s57 + $0xc] sm:$0xf]
          %v2711 = vpack.c.bf16 %v2699, %v2699
          %v2716 = vunpack.c.l.b16 %v2707
          %v2717 = vunpack.c.l.b16 %v2708
          %v2718 = vunpack.c.l.b16 %v2709
          %v2719 = vunpack.c.l.b16 %v2710
          %v2720 = vpack.c.b16 %v2717, %v2716
          %v2721 = vpack.c.b16 %v2719, %v2718
          %v2725 = vsel %vm1413, %v2711, 0
          %2727 = vmatprep.subr.bf16.mxu0 0
          %2728 = vmatpush1.bf16.msra.mxu0 %v2720
          %2729 = vmatprep.subr.bf16.mxu0 0
          %2730 = vmatpush1.bf16.msra.mxu0 %v2721
          %2731 = vmatprep.subr.bf16.mxu0 0
          %2732 = vmatpush1.bf16.msra.mxu0 0
          %2733 = vmatprep.subr.bf16.mxu0 0
          %2734 = vmatpush1.bf16.msra.mxu0 0
          %2735 = vmatprep.subr.bf16.mxu0 0
          %2736 = vmatpush1.bf16.msra.mxu0 0
          %2737 = vmatprep.subr.bf16.mxu0 0
          %2738 = vmatpush1.bf16.msra.mxu0 0
          %2739 = vmatprep.subr.bf16.mxu0 0
          %2740 = vmatpush1.bf16.msra.mxu0 0
          %2741 = vmatprep.subr.bf16.mxu0 0
          %2742 = vmatpush1.bf16.msra.mxu0 0
          %2743 = vmatprep.subr.bf16.mxu0 0
          %2744 = vmatpush1.bf16.msra.mxu0 0
          %2745 = vmatprep.subr.bf16.mxu0 0
          %2746 = vmatpush1.bf16.msra.mxu0 0
          %2747 = vmatprep.subr.bf16.mxu0 0
          %2748 = vmatpush1.bf16.msra.mxu0 0
          %2749 = vmatprep.subr.bf16.mxu0 0
          %2750 = vmatpush1.bf16.msra.mxu0 0
          %2751 = vmatprep.subr.bf16.mxu0 0
          %2752 = vmatpush1.bf16.msra.mxu0 0
          %2753 = vmatprep.subr.bf16.mxu0 0
          %2754 = vmatpush1.bf16.msra.mxu0 0
          %2755 = vmatprep.subr.bf16.mxu0 0
          %2756 = vmatpush1.bf16.msra.mxu0 0
          %2757 = vmatprep.subr.bf16.mxu0 0
          %2758 = vmatpush1.bf16.msra.mxu0 0
          %2759 = vmatprep.mubr.bf16.mxu0 0
          %2760 = vmatmul.mubr.bf16.gmra.mrb[0].mxu0 %v2725
          %v2761 = vpop.f32.mrb[0].mxu0
          %v2762 = vadd.f32 0.0, %v2761
          %v2763 = vpop.f32.mrb[0].mxu0
          %v2764 = vpop.f32.mrb[0].mxu0
          %v2765 = vpop.f32.mrb[0].mxu0
          %2766 = vdwg.mxu0
          // Predicated region
          $region157: #{tpu_custom_call.1} parent=155 // pred_check
            %p2767 = pneg %p1384
          $region158: #{tpu_custom_call.1} parent=155 // pred_check_branch
            %2769 = sbr.rel (%p2767) target = $region160
          $region159: #{tpu_custom_call.1} parent=155 // pred_region
            %2770 = vst.msk [vmem:[%s1290] sm:$0xff] %vm1658, %v2762
          $region160: #{tpu_custom_call.1} parent=155 // pred_fallthru
            _
          %p2771 = scmp.eq.s32.totalorder %s84, 1
          // Predicated region
          $region161: #{tpu_custom_call.1} parent=155 // pred_check
            %p2772 = pneg %p2771
          $region162: #{tpu_custom_call.1} parent=155 // pred_check_branch
            %2774 = sbr.rel (%p2772) target = $region164
          $region163: #{tpu_custom_call.1} parent=155 // pred_region
            %s2775 = scalar_lea.vmem %s1290, 8 [#allocation10]
            %2776 = vst.msk [vmem:[%s2775] sm:$0xff] %vm1658, %v2762
          $region164: #{tpu_custom_call.1} parent=155 // pred_fallthru
            _
          %p2777 = scmp.eq.s32.totalorder %s84, 2
          // Predicated region
          $region165: #{tpu_custom_call.1} parent=155 // pred_check
            %p2778 = pneg %p2777
          $region166: #{tpu_custom_call.1} parent=155 // pred_check_branch
            %2780 = sbr.rel (%p2778) target = $region168
          $region167: #{tpu_custom_call.1} parent=155 // pred_region
            %s2781 = scalar_lea.vmem %s1290, 16 [#allocation10]
            %2782 = vst.msk [vmem:[%s2781] sm:$0xff] %vm1658, %v2762
          $region168: #{tpu_custom_call.1} parent=155 // pred_fallthru
            _
          %p2783 = scmp.eq.s32.totalorder %s84, 3
          // Predicated region
          $region169: #{tpu_custom_call.1} parent=155 // pred_check
            %p2784 = pneg %p2783
          $region170: #{tpu_custom_call.1} parent=155 // pred_check_branch
            %2786 = sbr.rel (%p2784) target = $region172
          $region171: #{tpu_custom_call.1} parent=155 // pred_region
            %s2787 = scalar_lea.vmem %s1290, 24 [#allocation10]
            %2788 = vst.msk [vmem:[%s2787] sm:$0xff] %vm1658, %v2762
          $region172: #{tpu_custom_call.1} parent=155 // pred_fallthru
            _
        $region156: #{tpu_custom_call.1} parent=135 // pred_fallthru
          _
        %s2789 = sand.u32 %s838, 1
        %s2790 = scalar_lea.sflag [#allocation6], %s2789
        %s2791 = sand.u32 %s838, 1
        %s2792 = smul.addr %s2791, 32
        %s2793 = scalar_lea.vmem [#allocation10], %s2792
        // Predicated region
        $region173: #{tpu_custom_call.1} parent=135 // pred_check
          %p2794 = pneg %p848
        $region174: #{tpu_custom_call.1} parent=135 // pred_check_branch
          %2796 = sbr.rel (%p2794) target = $region176
        $region175: #{tpu_custom_call.1} parent=135 // pred_region
          %s2798 = ssub.s32 512, 512
          %2799 = vsyncadd %s2790, %s2798
          %s2800 = smul.addr %s83, 4
          %s2801 = smul.addr %s2800, 128
          %s2802 = scalar_lea.hbm %s59, %s2801
          %s2803 = sshll.u32 %s2793, 4
          %s2804 = int_to_ptr.vmem [resolvable:$true] %s2803
          %2809 = dma.vmem_to_hbm [thread:$0]  %s2804, 512, %s2802, %s2790, 128, 128, 8
        $region176: #{tpu_custom_call.1} parent=135 // pred_fallthru
          _
      $region136: #{tpu_custom_call.1} parent=5 // pred_fallthru
        _
      %p2810 = scmp.le.s32.totalorder 2, %s74
      // Predicated region
      $region177: #{tpu_custom_call.1} parent=5 // pred_check
        %p2811 = pneg %p2810
      $region178: #{tpu_custom_call.1} parent=5 // pred_check_branch
        %2813 = sbr.rel (%p2811) target = $region180
      $region179: #{tpu_custom_call.1} parent=5 // pred_region
        %s2814 = ssub.s32 %s74, 2
        // Predicated region
        $region181: #{tpu_custom_call.1} parent=179 // pred_check
          %p2815 = pneg %p854
        $region182: #{tpu_custom_call.1} parent=179 // pred_check_branch
          %2817 = sbr.rel (%p2815) target = $region184
        $region183: #{tpu_custom_call.1} parent=179 // pred_region
          %s2818 = sand.u32 %s839, 1
          %s2819 = scalar_lea.sflag [#allocation6], %s2818
          %s2820 = sand.u32 %s839, 1
          %s2821 = smul.addr %s2820, 32
          %s2822 = scalar_lea.vmem [#allocation10], %s2821
          %2823 = dma.done %s2819, 512
        $region184: #{tpu_custom_call.1} parent=179 // pred_fallthru
          _
      $region180: #{tpu_custom_call.1} parent=5 // pred_fallthru
        _
    $region6: #{tpu_custom_call.1} parent=1 // loop_footer
      %s78 = sadd.s32 1, %s74
    $region7: #{tpu_custom_call.1} parent=1 // loop_footer_branch
      %73 = sbr.rel target = $region3
    $region8: #{tpu_custom_call.1} parent=1 // loop_exit
      _
    %2824 = vsyncpa [#allocation5], 1
    %s2825 = scalar_lea.sflag [#allocation5], 1
    %2826 = vsyncpa %s2825, 1
    %2827 = vsyncpa [#allocation8], 1
    %s2828 = scalar_lea.sflag [#allocation8], 1
    %2829 = vsyncpa %s2828, 1
    %2830 = vsyncpa [#allocation6], 1
    %s2831 = scalar_lea.sflag [#allocation6], 1
    %2832 = vsyncpa %s2831, 1

</llo_original>
